<compile_context>
chip_gen: v6e
topology: v6e:2x2x1
jax: 0.10.0
libtpu: 0.0.40
codegen_flags: <defaults>
</compile_context>

<pallas_src>
import jax
import jax.numpy as jnp
import numpy as np
from jax.experimental import pallas as pl
from jax.experimental.pallas import tpu as pltpu

_F32 = jnp.float32


# ----------------------------- in-kernel math -------------------------------

def _batched_linear(x, w, b):
    """(Bt, R, Fin) @ (Fin, Fout) + (1, Fout) -> (Bt, R, Fout)."""
    bt, r, fin = x.shape
    fout = w.shape[1]
    if r % 8 == 0:
        # Collapse the graphs into the sublane axis -> a single wide MXU matmul.
        y = jnp.dot(x.reshape(bt * r, fin), w, preferred_element_type=_F32) + b
        return y.reshape(bt, r, fout)
    # Fallback for sublane-misaligned R: per-graph batched matmul.
    return jnp.einsum("brf,fg->brg", x, w, preferred_element_type=_F32) + b[None]


def _censnet_layer(node, edge, Av, Ae, T, Tt, Wv, bv, We, be, pe_t, pv_t):
    """One CensNet propagation (parallel node/edge update) for Bt graphs at once.

    node (Bt,N,Fn)  edge (Bt,E,Fe)  Av (Bt,N,N)  Ae (Bt,E,E)  T (Bt,N,E)  Tt (Bt,E,N)
    pe_t (1,Fe)  pv_t (1,Fn)
    """
    # Gates on the VPU (lane multiply + reduce); a width-1 MXU matmul would waste a push.
    e_gate = jnp.sum(edge * pe_t[None], axis=-1)[:, None, :]   # (Bt, 1, E)
    v_gate = jnp.sum(node * pv_t[None], axis=-1)[:, None, :]   # (Bt, 1, N)

    # node' = relu( [ (T diag(e_gate) T^T) * Av ] @ node @ Wv + bv )
    # Contract against the resident Tt so no in-kernel transpose is generated.
    Tv = jnp.einsum("bne,bem->bnm", T * e_gate, Tt, preferred_element_type=_F32)   # (Bt,N,N)
    node_msg = jnp.einsum("bnm,bmf->bnf", Tv * Av, node, preferred_element_type=_F32)
    node_new = jnp.maximum(_batched_linear(node_msg, Wv, bv), 0.0)                 # (Bt,N,Fno)

    # edge' = relu( [ (T^T diag(v_gate) T) * Ae ] @ edge @ We + be )
    Te = jnp.einsum("ben,bnf->bef", Tt * v_gate, T, preferred_element_type=_F32)   # (Bt,E,E)
    edge_msg = jnp.einsum("bef,bfg->beg", Te * Ae, edge, preferred_element_type=_F32)
    edge_new = jnp.maximum(_batched_linear(edge_msg, We, be), 0.0)                 # (Bt,E,Feo)
    return node_new, edge_new


def _make_kernel(Fn, Fe, N, E, offsets):
    """Build the kernel closure with static geometry + weight-slab offsets."""

    def kernel(npack_ref, epack_ref, w_ref, out_ref):
        def W(name):
            off, r, c = offsets[name]
            return w_ref[off:off + r, :c]

        npk = npack_ref[...]                  # (Bt, N, Fn+N+E)
        epk = epack_ref[...]                  # (Bt, E, Fe+E+N)
        node = npk[:, :, :Fn]
        Av = npk[:, :, Fn:Fn + N]             # precomputed D_v A_v D_v
        T = npk[:, :, Fn + N:Fn + N + E]
        edge = epk[:, :, :Fe]
        Ae = epk[:, :, Fe:Fe + E]             # precomputed D_e A_e D_e
        Tt = epk[:, :, Fe + E:Fe + E + N]     # precomputed T^T

        # GCN1
        n1, e1 = _censnet_layer(node, edge, Av, Ae, T, Tt,
                                W("Wv1"), W("bv1"), W("We1"), W("be1"),
                                W("pe1"), W("pv1"))
        # GCN2
        n2, _ = _censnet_layer(n1, e1, Av, Ae, T, Tt,
                               W("Wv2"), W("bv2"), W("We2"), W("be2"),
                               W("pe2"), W("pv2"))

        # value head: relu(Linear) -> mean over nodes -> Linear (VPU, row-output)
        h = jnp.maximum(_batched_linear(n2, W("W1"), W("b1")), 0.0)   # (Bt, N, Fno)
        hm = jnp.mean(h, axis=1)                                      # (Bt, Fno)
        val_row = jnp.sum(hm * W("W2t"), axis=-1)[None, :] + W("b2")  # (1, Bt)
        out_ref[0] = val_row

    return kernel


# ------------------------------- wrapper -------------------------------------

def _pack_weights(params):
    """Row-stack all weights into one (rows, lane) f32 slab with 8-aligned offsets."""
    entries = [
        ("Wv1", params["Wv1"]), ("bv1", params["bv1"]),
        ("We1", params["We1"]), ("be1", params["be1"]),
        ("pe1", params["pe1"].T), ("pv1", params["pv1"].T),   # gates as (1, Fin) rows
        ("Wv2", params["Wv2"]), ("bv2", params["bv2"]),
        ("We2", params["We2"]), ("be2", params["be2"]),
        ("pe2", params["pe2"].T), ("pv2", params["pv2"].T),
        ("W1", params["W1"]), ("b1", params["b1"]),
        ("W2t", params["W2"].T), ("b2", params["b2"]),        # W2 as (1, node_out) row
    ]
    lane = max(int(a.shape[1]) for _, a in entries)
    offsets = {}
    blocks = []
    row_off = 0
    for name, a in entries:
        r, c = int(a.shape[0]), int(a.shape[1])
        offsets[name] = (row_off, r, c)
        pad_r = (-r) % 8
        blocks.append(jnp.pad(a.astype(_F32), ((0, pad_r), (0, lane - c))))
        row_off += r + pad_r
    slab = jnp.concatenate(blocks, axis=0)
    return slab, offsets


def critic_network_gcn(node, edge, node_adj, edge_adj, D_v, D_e, T, params, *, block_b=None):
    """params: dict of weights (see init_params). Returns value of shape (B, 1)."""
    B, N, Fn = node.shape
    _, E, Fe = edge.shape

    # Layer-invariant precomputation (XLA side, done once, tiny):
    # D_v / D_e are diagonal degree matrices; only their diagonals matter, so D A D is
    # a cheap elementwise row/col scaling (saves 8 dense matmuls per graph).
    dv = jnp.diagonal(D_v, axis1=-2, axis2=-1)            # (B, N)
    de = jnp.diagonal(D_e, axis1=-2, axis2=-1)            # (B, E)
    Av = node_adj * dv[:, :, None] * dv[:, None, :]       # (B, N, N)
    Ae = edge_adj * de[:, :, None] * de[:, None, :]       # (B, E, E)
    Tt = jnp.swapaxes(T, 1, 2)                            # (B, E, N)

    # Lane-concatenate per-graph tensors that share a sublane count -> 2 batched inputs.
    node_pack = jnp.concatenate(
        [node.astype(_F32), Av.astype(_F32), T.astype(_F32)], axis=-1)   # (B, N, Fn+N+E)
    edge_pack = jnp.concatenate(
        [edge.astype(_F32), Ae.astype(_F32), Tt.astype(_F32)], axis=-1)  # (B, E, Fe+E+N)

    wslab, offsets = _pack_weights(params)

    if block_b is None:
        # Single grid step for small B (v5e/v6e are single-TC; at B~8 even v7x prefers
        # one step). For larger B, ~64 graphs/step keeps the collapsed matmuls MXU-wide
        # while staying far under VMEM limits.
        block_b = min(B, 64)
    grid = (B + block_b - 1) // block_b
    Bp = grid * block_b
    if Bp != B:
        pad = Bp - B

        def _pad(x):
            return jnp.pad(x, ((0, pad),) + ((0, 0),) * (x.ndim - 1))

        node_pack, edge_pack = _pad(node_pack), _pad(edge_pack)

    def batched_spec(arr):
        return pl.BlockSpec((block_b,) + arr.shape[1:], lambda g: (g, 0, 0))

    kernel = _make_kernel(Fn, Fe, N, E, offsets)

    out = pl.pallas_call(
        kernel,
        out_shape=jax.ShapeDtypeStruct((grid, 1, block_b), jnp.float32),
        grid_spec=pltpu.PrefetchScalarGridSpec(
            num_scalar_prefetch=0,
            grid=(grid,),
            in_specs=[batched_spec(node_pack),
                      batched_spec(edge_pack),
                      pl.BlockSpec(wslab.shape, lambda g: (0, 0))],
            out_specs=pl.BlockSpec((1, 1, block_b), lambda g: (g, 0, 0)),
        ),
        compiler_params=pltpu.CompilerParams(
            dimension_semantics=("arbitrary",)),
    )(node_pack, edge_pack, wslab)

    return out.reshape(-1)[:B][:, None]   # (B, 1)


# --------------------------- params / reference -------------------------------

def init_params(key, node_in, edge_in, node_out, edge_out):
    ks = jax.random.split(key, 16)
    s = 0.1
    p = {
        # CensNet 1
        "Wv1": s * jax.random.normal(ks[0], (node_in, node_out), jnp.float32),
        "bv1": s * jax.random.normal(ks[1], (1, node_out), jnp.float32),
        "We1": s * jax.random.normal(ks[2], (edge_in, edge_out), jnp.float32),
        "be1": s * jax.random.normal(ks[3], (1, edge_out), jnp.float32),
        "pe1": s * jax.random.normal(ks[4], (edge_in, 1), jnp.float32),
        "pv1": s * jax.random.normal(ks[5], (node_in, 1), jnp.float32),
        # CensNet 2
        "Wv2": s * jax.random.normal(ks[6], (node_out, node_out), jnp.float32),
        "bv2": s * jax.random.normal(ks[7], (1, node_out), jnp.float32),
        "We2": s * jax.random.normal(ks[8], (edge_out, edge_out), jnp.float32),
        "be2": s * jax.random.normal(ks[9], (1, edge_out), jnp.float32),
        "pe2": s * jax.random.normal(ks[10], (edge_out, 1), jnp.float32),
        "pv2": s * jax.random.normal(ks[11], (node_out, 1), jnp.float32),
        # value head
        "W1": s * jax.random.normal(ks[12], (node_out, node_out), jnp.float32),
        "b1": s * jax.random.normal(ks[13], (1, node_out), jnp.float32),
        "W2": s * jax.random.normal(ks[14], (node_out, 1), jnp.float32),
        "b2": s * jax.random.normal(ks[15], (1, 1), jnp.float32),
    }
    return p


def _censnet_ref(node, edge, nadj, eadj, Dv, De, T, Wv, bv, We, be, pe, pv):
    e_gate = edge @ pe
    Tv = (T * e_gate.T) @ T.T
    Av = Dv @ nadj @ Dv
    node_new = jnp.maximum((Tv * Av) @ node @ Wv + bv, 0.0)
    v_gate = node @ pv
    Te = (T.T * v_gate.T) @ T
    Ae = De @ eadj @ De
    edge_new = jnp.maximum((Te * Ae) @ edge @ We + be, 0.0)
    return node_new, edge_new


def reference(node, edge, nadj, eadj, Dv, De, T, p):
    def single(n, e, na, ea, dv, de, t):
        n1, e1 = _censnet_ref(n, e, na, ea, dv, de, t,
                              p["Wv1"], p["bv1"], p["We1"], p["be1"], p["pe1"], p["pv1"])
        n2, _ = _censnet_ref(n1, e1, na, ea, dv, de, t,
                             p["Wv2"], p["bv2"], p["We2"], p["be2"], p["pe2"], p["pv2"])
        h = jnp.maximum(n2 @ p["W1"] + p["b1"], 0.0)
        hm = jnp.mean(h, axis=0, keepdims=True)
        return (hm @ p["W2"] + p["b2"])[0]
    return jax.vmap(single)(node, edge, nadj, eadj, Dv, De, T)


# --------------------------------- main ---------------------------------------

if __name__ == "__main__":
    key = jax.random.PRNGKey(0)
    kp, kn, ke, ka, kae, kt = jax.random.split(key, 6)

    B, N, E = 8, 8, 16
    node_in, edge_in = 6, 4
    node_out, edge_out = 16, 8

    params = init_params(kp, node_in, edge_in, node_out, edge_out)

    node = jax.random.normal(kn, (B, N, node_in), jnp.float32)
    edge = jax.random.normal(ke, (B, E, edge_in), jnp.float32)

    # symmetric 0/1 node adjacency with self loops + D_v = diag(deg^{-1/2})
    a = (jax.random.uniform(ka, (B, N, N)) > 0.5).astype(jnp.float32)
    node_adj = jnp.clip(a + jnp.transpose(a, (0, 2, 1)) + jnp.eye(N)[None], 0.0, 1.0)
    deg_v = jnp.sum(node_adj, axis=-1)
    D_v = jax.vmap(jnp.diag)(1.0 / jnp.sqrt(deg_v))

    ae = (jax.random.uniform(kae, (B, E, E)) > 0.5).astype(jnp.float32)
    edge_adj = jnp.clip(ae + jnp.transpose(ae, (0, 2, 1)) + jnp.eye(E)[None], 0.0, 1.0)
    deg_e = jnp.sum(edge_adj, axis=-1)
    D_e = jax.vmap(jnp.diag)(1.0 / jnp.sqrt(deg_e))

    # incidence-like matrix (N, E) with 0/1 entries
    T = (jax.random.uniform(kt, (B, N, E)) > 0.7).astype(jnp.float32)

    value = critic_network_gcn(node, edge, node_adj, edge_adj, D_v, D_e, T, params)
    value = jax.block_until_ready(value)

    ref = jax.block_until_ready(reference(node, edge, node_adj, edge_adj, D_v, D_e, T, params))
    np.testing.assert_allclose(np.asarray(value), np.asarray(ref), rtol=1e-4, atol=1e-5)

    print("KERNEL_OK")
</pallas_src>

<mosaic_0001>
module attributes {stable_mosaic.version = 11 : i64} {
  func.func @kernel(%arg0: i32, %arg1: memref<8x8x30xf32, #tpu.memory_space<vmem>>, %arg2: memref<8x16x28xf32, #tpu.memory_space<vmem>>, %arg3: memref<144x16xf32, #tpu.memory_space<vmem>>, %arg4: memref<1x1x8xf32, #tpu.memory_space<vmem>>) attributes {dimension_semantics = [#tpu.dimension_semantics<arbitrary>], iteration_bounds = array<i64: 1>, scalar_prefetch = 0 : i64, scratch_operands = 0 : i64, tpu.core_type = #tpu.core_type<tc>, window_params = [{transform_indices = @transform_0, window_bounds = array<i64: 8, 8, 30>}, {transform_indices = @transform_1, window_bounds = array<i64: 8, 16, 28>}, {pipeline_mode = #tpu.pipeline_mode<synchronous>, transform_indices = @transform_2, window_bounds = array<i64: 144, 16>}, {transform_indices = @transform_3, window_bounds = array<i64: 1, 1, 8>}]} {
    %c0 = arith.constant 0 : index
    %c0_0 = arith.constant 0 : index
    %c0_1 = arith.constant 0 : index
    %0 = vector.load %arg1[%c0, %c0_0, %c0_1] : memref<8x8x30xf32, #tpu.memory_space<vmem>>, vector<8x8x30xf32>
    %c0_2 = arith.constant 0 : index
    %c0_3 = arith.constant 0 : index
    %c0_4 = arith.constant 0 : index
    %1 = vector.load %arg2[%c0_2, %c0_3, %c0_4] : memref<8x16x28xf32, #tpu.memory_space<vmem>>, vector<8x16x28xf32>
    %2 = vector.extract_strided_slice %0 {offsets = [0, 0, 0], sizes = [8, 8, 6], strides = [1, 1, 1]} : vector<8x8x30xf32> to vector<8x8x6xf32>
    %3 = vector.extract_strided_slice %0 {offsets = [0, 0, 6], sizes = [8, 8, 8], strides = [1, 1, 1]} : vector<8x8x30xf32> to vector<8x8x8xf32>
    %4 = vector.extract_strided_slice %0 {offsets = [0, 0, 14], sizes = [8, 8, 16], strides = [1, 1, 1]} : vector<8x8x30xf32> to vector<8x8x16xf32>
    %5 = vector.extract_strided_slice %1 {offsets = [0, 0, 0], sizes = [8, 16, 4], strides = [1, 1, 1]} : vector<8x16x28xf32> to vector<8x16x4xf32>
    %6 = vector.extract_strided_slice %1 {offsets = [0, 0, 4], sizes = [8, 16, 16], strides = [1, 1, 1]} : vector<8x16x28xf32> to vector<8x16x16xf32>
    %7 = vector.extract_strided_slice %1 {offsets = [0, 0, 20], sizes = [8, 16, 8], strides = [1, 1, 1]} : vector<8x16x28xf32> to vector<8x16x8xf32>
    %c0_5 = arith.constant 0 : index
    %c0_6 = arith.constant 0 : index
    %8 = vector.load %arg3[%c0_5, %c0_6] : memref<144x16xf32, #tpu.memory_space<vmem>>, vector<6x16xf32>
    %c8 = arith.constant 8 : index
    %c0_7 = arith.constant 0 : index
    %9 = vector.load %arg3[%c8, %c0_7] : memref<144x16xf32, #tpu.memory_space<vmem>>, vector<1x16xf32>
    %c16 = arith.constant 16 : index
    %c0_8 = arith.constant 0 : index
    %10 = vector.load %arg3[%c16, %c0_8] : memref<144x16xf32, #tpu.memory_space<vmem>>, vector<4x8xf32>
    %c24 = arith.constant 24 : index
    %c0_9 = arith.constant 0 : index
    %11 = vector.load %arg3[%c24, %c0_9] : memref<144x16xf32, #tpu.memory_space<vmem>>, vector<1x8xf32>
    %c32 = arith.constant 32 : index
    %c0_10 = arith.constant 0 : index
    %12 = vector.load %arg3[%c32, %c0_10] : memref<144x16xf32, #tpu.memory_space<vmem>>, vector<1x4xf32>
    %c40 = arith.constant 40 : index
    %c0_11 = arith.constant 0 : index
    %13 = vector.load %arg3[%c40, %c0_11] : memref<144x16xf32, #tpu.memory_space<vmem>>, vector<1x6xf32>
    %14 = vector.shape_cast %12 : vector<1x4xf32> to vector<1x1x4xf32>
    %15 = vector.broadcast %14 : vector<1x1x4xf32> to vector<8x16x4xf32>
    %16 = arith.mulf %5, %15 : vector<8x16x4xf32>
    %cst = arith.constant dense<0.000000e+00> : vector<8x16xf32>
    %17 = vector.multi_reduction <add>, %16, %cst [2] : vector<8x16x4xf32> to vector<8x16xf32>
    %18 = vector.shape_cast %17 : vector<8x16xf32> to vector<8x1x16xf32>
    %19 = vector.shape_cast %13 : vector<1x6xf32> to vector<1x1x6xf32>
    %20 = vector.broadcast %19 : vector<1x1x6xf32> to vector<8x8x6xf32>
    %21 = arith.mulf %2, %20 : vector<8x8x6xf32>
    %cst_12 = arith.constant dense<0.000000e+00> : vector<8x8xf32>
    %22 = vector.multi_reduction <add>, %21, %cst_12 [2] : vector<8x8x6xf32> to vector<8x8xf32>
    %23 = vector.shape_cast %22 : vector<8x8xf32> to vector<8x1x8xf32>
    %24 = vector.broadcast %18 : vector<8x1x16xf32> to vector<8x8x16xf32>
    %25 = arith.mulf %4, %24 : vector<8x8x16xf32>
    "tpu.trace_start"() <{level = 10 : i32, message = "bne,bem->bnm"}> : () -> ()
    %cst_13 = arith.constant dense<0.000000e+00> : vector<8x8x8xf32>
    %26 = tpu.matmul %25, %7, %cst_13 {dimension_numbers = #tpu.dot_dimension_numbers<[2], [1], [1], [2], [0, 0, 0, 1, 1, 2], [0], [0]>} : vector<8x8x16xf32>, vector<8x16x8xf32>, vector<8x8x8xf32> -> vector<8x8x8xf32>
    "tpu.trace_stop"() : () -> ()
    %27 = arith.mulf %26, %3 : vector<8x8x8xf32>
    "tpu.trace_start"() <{level = 10 : i32, message = "bnm,bmf->bnf"}> : () -> ()
    %cst_14 = arith.constant dense<0.000000e+00> : vector<8x8x6xf32>
    %28 = tpu.matmul %27, %2, %cst_14 {dimension_numbers = #tpu.dot_dimension_numbers<[2], [1], [1], [2], [0, 0, 0, 1, 1, 2], [0], [0]>} : vector<8x8x8xf32>, vector<8x8x6xf32>, vector<8x8x6xf32> -> vector<8x8x6xf32>
    "tpu.trace_stop"() : () -> ()
    %29 = vector.shape_cast %28 : vector<8x8x6xf32> to vector<64x6xf32>
    %cst_15 = arith.constant dense<0.000000e+00> : vector<64x16xf32>
    %30 = tpu.matmul %29, %8, %cst_15 {dimension_numbers = #tpu.dot_dimension_numbers<[1], [0], [0], [1], [0, 0, 1, 1], [], []>} : vector<64x6xf32>, vector<6x16xf32>, vector<64x16xf32> -> vector<64x16xf32>
    %31 = vector.broadcast %9 : vector<1x16xf32> to vector<64x16xf32>
    %32 = arith.addf %30, %31 : vector<64x16xf32>
    %33 = vector.shape_cast %32 : vector<64x16xf32> to vector<8x8x16xf32>
    %cst_16 = arith.constant 0.000000e+00 : f32
    %34 = vector.broadcast %cst_16 : f32 to vector<8x8x16xf32>
    %35 = arith.maximumf %33, %34 : vector<8x8x16xf32>
    %36 = vector.broadcast %23 : vector<8x1x8xf32> to vector<8x16x8xf32>
    %37 = arith.mulf %7, %36 : vector<8x16x8xf32>
    "tpu.trace_start"() <{level = 10 : i32, message = "ben,bnf->bef"}> : () -> ()
    %cst_17 = arith.constant dense<0.000000e+00> : vector<8x16x16xf32>
    %38 = tpu.matmul %37, %4, %cst_17 {dimension_numbers = #tpu.dot_dimension_numbers<[2], [1], [1], [2], [0, 0, 0, 1, 1, 2], [0], [0]>} : vector<8x16x8xf32>, vector<8x8x16xf32>, vector<8x16x16xf32> -> vector<8x16x16xf32>
    "tpu.trace_stop"() : () -> ()
    %39 = arith.mulf %38, %6 : vector<8x16x16xf32>
    "tpu.trace_start"() <{level = 10 : i32, message = "bef,bfg->beg"}> : () -> ()
    %cst_18 = arith.constant dense<0.000000e+00> : vector<8x16x4xf32>
    %40 = tpu.matmul %39, %5, %cst_18 {dimension_numbers = #tpu.dot_dimension_numbers<[2], [1], [1], [2], [0, 0, 0, 1, 1, 2], [0], [0]>} : vector<8x16x16xf32>, vector<8x16x4xf32>, vector<8x16x4xf32> -> vector<8x16x4xf32>
    "tpu.trace_stop"() : () -> ()
    %41 = vector.shape_cast %40 : vector<8x16x4xf32> to vector<128x4xf32>
    %cst_19 = arith.constant dense<0.000000e+00> : vector<128x8xf32>
    %42 = tpu.matmul %41, %10, %cst_19 {dimension_numbers = #tpu.dot_dimension_numbers<[1], [0], [0], [1], [0, 0, 1, 1], [], []>} : vector<128x4xf32>, vector<4x8xf32>, vector<128x8xf32> -> vector<128x8xf32>
    %43 = vector.broadcast %11 : vector<1x8xf32> to vector<128x8xf32>
    %44 = arith.addf %42, %43 : vector<128x8xf32>
    %45 = vector.shape_cast %44 : vector<128x8xf32> to vector<8x16x8xf32>
    %cst_20 = arith.constant 0.000000e+00 : f32
    %46 = vector.broadcast %cst_20 : f32 to vector<8x16x8xf32>
    %47 = arith.maximumf %45, %46 : vector<8x16x8xf32>
    %c48 = arith.constant 48 : index
    %c0_21 = arith.constant 0 : index
    %48 = vector.load %arg3[%c48, %c0_21] : memref<144x16xf32, #tpu.memory_space<vmem>>, vector<16x16xf32>
    %c64 = arith.constant 64 : index
    %c0_22 = arith.constant 0 : index
    %49 = vector.load %arg3[%c64, %c0_22] : memref<144x16xf32, #tpu.memory_space<vmem>>, vector<1x16xf32>
    %c88 = arith.constant 88 : index
    %c0_23 = arith.constant 0 : index
    %50 = vector.load %arg3[%c88, %c0_23] : memref<144x16xf32, #tpu.memory_space<vmem>>, vector<1x8xf32>
    %51 = vector.shape_cast %50 : vector<1x8xf32> to vector<1x1x8xf32>
    %52 = vector.broadcast %51 : vector<1x1x8xf32> to vector<8x16x8xf32>
    %53 = arith.mulf %47, %52 : vector<8x16x8xf32>
    %cst_24 = arith.constant dense<0.000000e+00> : vector<8x16xf32>
    %54 = vector.multi_reduction <add>, %53, %cst_24 [2] : vector<8x16x8xf32> to vector<8x16xf32>
    %55 = vector.shape_cast %54 : vector<8x16xf32> to vector<8x1x16xf32>
    %56 = vector.broadcast %55 : vector<8x1x16xf32> to vector<8x8x16xf32>
    %57 = arith.mulf %4, %56 : vector<8x8x16xf32>
    "tpu.trace_start"() <{level = 10 : i32, message = "bne,bem->bnm"}> : () -> ()
    %cst_25 = arith.constant dense<0.000000e+00> : vector<8x8x8xf32>
    %58 = tpu.matmul %57, %7, %cst_25 {dimension_numbers = #tpu.dot_dimension_numbers<[2], [1], [1], [2], [0, 0, 0, 1, 1, 2], [0], [0]>} : vector<8x8x16xf32>, vector<8x16x8xf32>, vector<8x8x8xf32> -> vector<8x8x8xf32>
    "tpu.trace_stop"() : () -> ()
    %59 = arith.mulf %58, %3 : vector<8x8x8xf32>
    "tpu.trace_start"() <{level = 10 : i32, message = "bnm,bmf->bnf"}> : () -> ()
    %cst_26 = arith.constant dense<0.000000e+00> : vector<8x8x16xf32>
    %60 = tpu.matmul %59, %35, %cst_26 {dimension_numbers = #tpu.dot_dimension_numbers<[2], [1], [1], [2], [0, 0, 0, 1, 1, 2], [0], [0]>} : vector<8x8x8xf32>, vector<8x8x16xf32>, vector<8x8x16xf32> -> vector<8x8x16xf32>
    "tpu.trace_stop"() : () -> ()
    %61 = vector.shape_cast %60 : vector<8x8x16xf32> to vector<64x16xf32>
    %cst_27 = arith.constant dense<0.000000e+00> : vector<64x16xf32>
    %62 = tpu.matmul %61, %48, %cst_27 {dimension_numbers = #tpu.dot_dimension_numbers<[1], [0], [0], [1], [0, 0, 1, 1], [], []>} : vector<64x16xf32>, vector<16x16xf32>, vector<64x16xf32> -> vector<64x16xf32>
    %63 = vector.broadcast %49 : vector<1x16xf32> to vector<64x16xf32>
    %64 = arith.addf %62, %63 : vector<64x16xf32>
    %65 = vector.shape_cast %64 : vector<64x16xf32> to vector<8x8x16xf32>
    %cst_28 = arith.constant 0.000000e+00 : f32
    %66 = vector.broadcast %cst_28 : f32 to vector<8x8x16xf32>
    %67 = arith.maximumf %65, %66 : vector<8x8x16xf32>
    %c104 = arith.constant 104 : index
    %c0_29 = arith.constant 0 : index
    %68 = vector.load %arg3[%c104, %c0_29] : memref<144x16xf32, #tpu.memory_space<vmem>>, vector<16x16xf32>
    %c120 = arith.constant 120 : index
    %c0_30 = arith.constant 0 : index
    %69 = vector.load %arg3[%c120, %c0_30] : memref<144x16xf32, #tpu.memory_space<vmem>>, vector<1x16xf32>
    %70 = vector.shape_cast %67 : vector<8x8x16xf32> to vector<64x16xf32>
    %cst_31 = arith.constant dense<0.000000e+00> : vector<64x16xf32>
    %71 = tpu.matmul %70, %68, %cst_31 {dimension_numbers = #tpu.dot_dimension_numbers<[1], [0], [0], [1], [0, 0, 1, 1], [], []>} : vector<64x16xf32>, vector<16x16xf32>, vector<64x16xf32> -> vector<64x16xf32>
    %72 = vector.broadcast %69 : vector<1x16xf32> to vector<64x16xf32>
    %73 = arith.addf %71, %72 : vector<64x16xf32>
    %74 = vector.shape_cast %73 : vector<64x16xf32> to vector<8x8x16xf32>
    %cst_32 = arith.constant 0.000000e+00 : f32
    %75 = vector.broadcast %cst_32 : f32 to vector<8x8x16xf32>
    %76 = arith.maximumf %74, %75 : vector<8x8x16xf32>
    %cst_33 = arith.constant dense<0.000000e+00> : vector<8x16xf32>
    %77 = vector.multi_reduction <add>, %76, %cst_33 [1] : vector<8x8x16xf32> to vector<8x16xf32>
    %cst_34 = arith.constant 8.000000e+00 : f32
    %78 = vector.broadcast %cst_34 : f32 to vector<8x16xf32>
    %79 = arith.divf %77, %78 : vector<8x16xf32>
    %c128 = arith.constant 128 : index
    %c0_35 = arith.constant 0 : index
    %80 = vector.load %arg3[%c128, %c0_35] : memref<144x16xf32, #tpu.memory_space<vmem>>, vector<1x16xf32>
    %81 = vector.broadcast %80 : vector<1x16xf32> to vector<8x16xf32>
    %82 = arith.mulf %79, %81 : vector<8x16xf32>
    %cst_36 = arith.constant dense<0.000000e+00> : vector<8xf32>
    %83 = vector.multi_reduction <add>, %82, %cst_36 [1] : vector<8x16xf32> to vector<8xf32>
    %84 = vector.shape_cast %83 : vector<8xf32> to vector<1x8xf32>
    %c136 = arith.constant 136 : index
    %c0_37 = arith.constant 0 : index
    %85 = vector.load %arg3[%c136, %c0_37] : memref<144x16xf32, #tpu.memory_space<vmem>>, vector<1x1xf32>
    %86 = vector.broadcast %85 : vector<1x1xf32> to vector<1x8xf32>
    %87 = arith.addf %84, %86 : vector<1x8xf32>
    %c0_38 = arith.constant 0 : index
    %c0_39 = arith.constant 0 : index
    %c0_40 = arith.constant 0 : index
    %88 = vector.load %arg4[%c0_38, %c0_39, %c0_40] : memref<1x1x8xf32, #tpu.memory_space<vmem>>, vector<1x1x8xf32>
    %89 = vector.shape_cast %88 : vector<1x1x8xf32> to vector<1x8xf32>
    %90 = vector.shape_cast %87 : vector<1x8xf32> to vector<1x1x8xf32>
    tpu.vector_store %arg4[%c0_38, %c0_39, %c0_40], %90 {strides = array<i32>} : memref<1x1x8xf32, #tpu.memory_space<vmem>>, vector<1x1x8xf32>,
    return
  }
  func.func @transform_0(%arg0: i32) -> (i32, i32, i32) {
    %c0_i32 = arith.constant 0 : i32
    %c0_i32_0 = arith.constant 0 : i32
    %c0_i32_1 = arith.constant 0 : i32
    return %arg0, %c0_i32, %c0_i32_0 : i32, i32, i32
  }
  func.func @transform_1(%arg0: i32) -> (i32, i32, i32) {
    %c0_i32 = arith.constant 0 : i32
    %c0_i32_0 = arith.constant 0 : i32
    %c0_i32_1 = arith.constant 0 : i32
    return %arg0, %c0_i32, %c0_i32_0 : i32, i32, i32
  }
  func.func @transform_2(%arg0: i32) -> (i32, i32) {
    %c0_i32 = arith.constant 0 : i32
    %c0_i32_0 = arith.constant 0 : i32
    %c0_i32_1 = arith.constant 0 : i32
    return %c0_i32, %c0_i32_0 : i32, i32
  }
  func.func @transform_3(%arg0: i32) -> (i32, i32, i32) {
    %c0_i32 = arith.constant 0 : i32
    %c0_i32_0 = arith.constant 0 : i32
    %c0_i32_1 = arith.constant 0 : i32
    return %arg0, %c0_i32, %c0_i32_0 : i32, i32, i32
  }
}

</mosaic_0001>

<llo_original>
// kernel: tpu_custom_call.1
$region0: #{tpu_custom_call.1}
  #allocation0 [shape = 'u32[]', space=smem, size = 0x4, offset = 0x4, fixed_abs, tag = 'smem constant byte address 0x4 - core index']
  #allocation1 [shape = 'u32[144,128]{1,0:T(1,128)}', space=vmem, size = 0x12000, scoped, tag = 'internal scratch']
  %s0 = inlined_call_operand.hbm [shape: f32[8,8,30], index: 0, kind: input, shape index: {}]
  %s1 = inlined_call_operand.vmem [shape: f32[8,16,28], index: 1, kind: input, shape index: {}]
  %s2 = inlined_call_operand.vmem [shape: f32[144,16], index: 2, kind: input, shape index: {}]
  %s3 = inlined_call_operand.hbm [shape: f32[1,1,8], index: 3, kind: output, shape index: {}]
  %s4 = sld [smem:[#allocation0]]
  $region26: #{tpu_custom_call.1} parent=0
    _
  %s6 = ssub.s32 1, %s4
  %s7 = scalar_select 0, %s6, %s4
  $region1: #{tpu_custom_call.1} parent=0
    #allocation2 [shape = 'u8[32768]{0}', space=vmem, size = 0x8000, scoped, tag = 'input window, operand 0, single buffered']
    #allocation3 [shape = 's32[1]{0}', space=sflag, size = 0x4, scoped, tag = 'scoped memory for tpu_custom_call.1']
    #allocation4 [shape = 's32[1]{0}', space=sflag, size = 0x4, scoped, tag = 'scoped memory for tpu_custom_call.1']
    #allocation5 [shape = 'u8[512]{0}', space=vmem, size = 0x400, scoped, tag = 'output window, operand 0, single buffered']
    %8 = vsyncpa [#allocation3], 0
    %9 = vsyncpa [#allocation4], 0
    // Predicated region
    $region2: #{tpu_custom_call.1} parent=1 // pred_check
      _
    $region3: #{tpu_custom_call.1} parent=1 // pred_check_branch
      %11 = sbr.rel (0) target = $region5
    $region4: #{tpu_custom_call.1} parent=1 // pred_region
      %s13 = ssub.s32 1024, 1024
      %14 = vsyncadd [#allocation3], %s13
      %s15 = sshll.u32 [#allocation2], 4
      %s16 = int_to_ptr.vmem [resolvable:$true] %s15
      %21 = dma.hbm_to_vmem [thread:$0]  %s0, 1024, %s16, [#allocation3], 128, 128, 8
    $region5: #{tpu_custom_call.1} parent=1 // pred_fallthru
      _
    // Predicated region
    $region6: #{tpu_custom_call.1} parent=1 // pred_check
      _
    $region7: #{tpu_custom_call.1} parent=1 // pred_check_branch
      %23 = sbr.rel (0) target = $region9
    $region8: #{tpu_custom_call.1} parent=1 // pred_region
      _
    $region9: #{tpu_custom_call.1} parent=1 // pred_fallthru
      _
    // Predicated region
    $region10: #{tpu_custom_call.1} parent=1 // pred_check
      _
    $region11: #{tpu_custom_call.1} parent=1 // pred_check_branch
      %25 = sbr.rel (0) target = $region13
    $region12: #{tpu_custom_call.1} parent=1 // pred_region
      _
    $region13: #{tpu_custom_call.1} parent=1 // pred_fallthru
      _
    // Predicated region
    $region14: #{tpu_custom_call.1} parent=1 // pred_check
      _
    $region15: #{tpu_custom_call.1} parent=1 // pred_check_branch
      %27 = sbr.rel (0) target = $region17
    $region16: #{tpu_custom_call.1} parent=1 // pred_region
      %28 = dma.done [#allocation3], 1024
    $region17: #{tpu_custom_call.1} parent=1 // pred_fallthru
      _
    %v29 = vld [vmem:[#allocation2] sm:$0xff]
    %v30 = vld [vmem:[#allocation2 + $0x8] sm:$0xff]
    %v31 = vld [vmem:[#allocation2 + $0x10] sm:$0xff]
    %v32 = vld [vmem:[#allocation2 + $0x18] sm:$0xff]
    %v33 = vld [vmem:[#allocation2 + $0x20] sm:$0xff]
    %v34 = vld [vmem:[#allocation2 + $0x28] sm:$0xff]
    %v35 = vld [vmem:[#allocation2 + $0x30] sm:$0xff]
    %v36 = vld [vmem:[#allocation2 + $0x38] sm:$0xff]
    %v37 = vld [vmem:[%s1] sm:$0xff]
    %v38 = vld [vmem:[%s1 + $0x8] sm:$0xff]
    %v39 = vld [vmem:[%s1 + $0x10] sm:$0xff]
    %v40 = vld [vmem:[%s1 + $0x18] sm:$0xff]
    %v41 = vld [vmem:[%s1 + $0x20] sm:$0xff]
    %v42 = vld [vmem:[%s1 + $0x28] sm:$0xff]
    %v43 = vld [vmem:[%s1 + $0x30] sm:$0xff]
    %v44 = vld [vmem:[%s1 + $0x38] sm:$0xff]
    %v45 = vld [vmem:[%s1 + $0x40] sm:$0xff]
    %v46 = vld [vmem:[%s1 + $0x48] sm:$0xff]
    %v47 = vld [vmem:[%s1 + $0x50] sm:$0xff]
    %v48 = vld [vmem:[%s1 + $0x58] sm:$0xff]
    %v49 = vld [vmem:[%s1 + $0x60] sm:$0xff]
    %v50 = vld [vmem:[%s1 + $0x68] sm:$0xff]
    %v51 = vld [vmem:[%s1 + $0x70] sm:$0xff]
    %v52 = vld [vmem:[%s1 + $0x78] sm:$0xff]
    %v53 = vld [vmem:[%s2] sm:$0x3f]
    %v54 = vld [vmem:[%s2 + $0x8] sm:$0x1]
    %v55 = vld [vmem:[%s2 + $0x10] sm:$0xf]
    %v56 = vld [vmem:[%s2 + $0x18] sm:$0x1]
    %v57 = vld [vmem:[%s2 + $0x20] sm:$0x1]
    %v58 = vld [vmem:[%s2 + $0x28] sm:$0x1]
    %v59 = vlaneseq
    %v60 = vshrl.u32 %v59, 7
    %v61 = vsub.s32 0, %v60
    %v62 = vrot.slane %v57, %v61
    %v63 = vmul.f32 %v37, %v62
    %v64 = vmul.f32 %v38, %v62
    %v65 = vmul.f32 %v39, %v62
    %v66 = vmul.f32 %v40, %v62
    %v67 = vmul.f32 %v41, %v62
    %v68 = vmul.f32 %v42, %v62
    %v69 = vmul.f32 %v43, %v62
    %v70 = vmul.f32 %v44, %v62
    %v71 = vmul.f32 %v45, %v62
    %v72 = vmul.f32 %v46, %v62
    %v73 = vmul.f32 %v47, %v62
    %v74 = vmul.f32 %v48, %v62
    %v75 = vmul.f32 %v49, %v62
    %v76 = vmul.f32 %v50, %v62
    %v77 = vmul.f32 %v51, %v62
    %v78 = vmul.f32 %v52, %v62
    %vm79 = vcmask 31744
    %v80 = vsel %vm79, %v63, 0.0
    %81 = vadd.xlane.f32.xlu0 %v80
    %v82 = vpop.xlane.xlu0 %81
    %v83 = vsel %vm79, %v64, 0.0
    %84 = vadd.xlane.f32.xlu0 %v83
    %v85 = vpop.xlane.xlu0 %84
    %v86 = vsel %vm79, %v65, 0.0
    %87 = vadd.xlane.f32.xlu0 %v86
    %v88 = vpop.xlane.xlu0 %87
    %v89 = vsel %vm79, %v66, 0.0
    %90 = vadd.xlane.f32.xlu0 %v89
    %v91 = vpop.xlane.xlu0 %90
    %v92 = vsel %vm79, %v67, 0.0
    %93 = vadd.xlane.f32.xlu0 %v92
    %v94 = vpop.xlane.xlu0 %93
    %v95 = vsel %vm79, %v68, 0.0
    %96 = vadd.xlane.f32.xlu0 %v95
    %v97 = vpop.xlane.xlu0 %96
    %v98 = vsel %vm79, %v69, 0.0
    %99 = vadd.xlane.f32.xlu0 %v98
    %v100 = vpop.xlane.xlu0 %99
    %v101 = vsel %vm79, %v70, 0.0
    %102 = vadd.xlane.f32.xlu0 %v101
    %v103 = vpop.xlane.xlu0 %102
    %v104 = vsel %vm79, %v71, 0.0
    %105 = vadd.xlane.f32.xlu0 %v104
    %v106 = vpop.xlane.xlu0 %105
    %v107 = vsel %vm79, %v72, 0.0
    %108 = vadd.xlane.f32.xlu0 %v107
    %v109 = vpop.xlane.xlu0 %108
    %v110 = vsel %vm79, %v73, 0.0
    %111 = vadd.xlane.f32.xlu0 %v110
    %v112 = vpop.xlane.xlu0 %111
    %v113 = vsel %vm79, %v74, 0.0
    %114 = vadd.xlane.f32.xlu0 %v113
    %v115 = vpop.xlane.xlu0 %114
    %v116 = vsel %vm79, %v75, 0.0
    %117 = vadd.xlane.f32.xlu0 %v116
    %v118 = vpop.xlane.xlu0 %117
    %v119 = vsel %vm79, %v76, 0.0
    %120 = vadd.xlane.f32.xlu0 %v119
    %v121 = vpop.xlane.xlu0 %120
    %v122 = vsel %vm79, %v77, 0.0
    %123 = vadd.xlane.f32.xlu0 %v122
    %v124 = vpop.xlane.xlu0 %123
    %v125 = vsel %vm79, %v78, 0.0
    %126 = vadd.xlane.f32.xlu0 %v125
    %v127 = vpop.xlane.xlu0 %126
    %v128 = vlaneseq
    %v129 = vshrl.u32 %v128, 7
    %v130 = vsub.s32 0, %v129
    %v131 = vrot.slane %v58, %v130
    %v132 = vmul.f32 %v29, %v131
    %v133 = vmul.f32 %v30, %v131
    %v134 = vmul.f32 %v31, %v131
    %v135 = vmul.f32 %v32, %v131
    %v136 = vmul.f32 %v33, %v131
    %v137 = vmul.f32 %v34, %v131
    %v138 = vmul.f32 %v35, %v131
    %v139 = vmul.f32 %v36, %v131
    %vm140 = vcmask 48128
    %v141 = vsel %vm140, %v132, 0.0
    %142 = vadd.xlane.f32.xlu0 %v141
    %v143 = vpop.xlane.xlu0 %142
    %v144 = vsel %vm140, %v133, 0.0
    %145 = vadd.xlane.f32.xlu0 %v144
    %v146 = vpop.xlane.xlu0 %145
    %v147 = vsel %vm140, %v134, 0.0
    %148 = vadd.xlane.f32.xlu0 %v147
    %v149 = vpop.xlane.xlu0 %148
    %v150 = vsel %vm140, %v135, 0.0
    %151 = vadd.xlane.f32.xlu0 %v150
    %v152 = vpop.xlane.xlu0 %151
    %v153 = vsel %vm140, %v136, 0.0
    %154 = vadd.xlane.f32.xlu0 %v153
    %v155 = vpop.xlane.xlu0 %154
    %v156 = vsel %vm140, %v137, 0.0
    %157 = vadd.xlane.f32.xlu0 %v156
    %v158 = vpop.xlane.xlu0 %157
    %v159 = vsel %vm140, %v138, 0.0
    %160 = vadd.xlane.f32.xlu0 %v159
    %v161 = vpop.xlane.xlu0 %160
    %v162 = vsel %vm140, %v139, 0.0
    %163 = vadd.xlane.f32.xlu0 %v162
    %v164 = vpop.xlane.xlu0 %163
    %v181 = vlaneseq
    %v182 = vand.u32 %v181, 127
    %v183 = vadd.s32 %v182, 4294967282
    %v184 = vlaneseq
    %v185 = vshrl.u32 %v184, 7
    %v186 = vsub.s32 %v183, %v185
    %v187 = vrot.slane %v82, %v186
    %v188 = vadd.s32 %v182, 4294967274
    %v189 = vlaneseq
    %v190 = vshrl.u32 %v189, 7
    %v191 = vsub.s32 %v188, %v190
    %v192 = vrot.slane %v85, %v191
    %vm193 = vcmask 244912
    %v194 = vsel %vm193, %v192, %v187
    %v195 = vlaneseq
    %v196 = vshrl.u32 %v195, 7
    %v197 = vsub.s32 %v183, %v196
    %v198 = vrot.slane %v88, %v197
    %v199 = vlaneseq
    %v200 = vshrl.u32 %v199, 7
    %v201 = vsub.s32 %v188, %v200
    %v202 = vrot.slane %v91, %v201
    %v203 = vsel %vm193, %v202, %v198
    %v204 = vlaneseq
    %v205 = vshrl.u32 %v204, 7
    %v206 = vsub.s32 %v183, %v205
    %v207 = vrot.slane %v94, %v206
    %v208 = vlaneseq
    %v209 = vshrl.u32 %v208, 7
    %v210 = vsub.s32 %v188, %v209
    %v211 = vrot.slane %v97, %v210
    %v212 = vsel %vm193, %v211, %v207
    %v213 = vlaneseq
    %v214 = vshrl.u32 %v213, 7
    %v215 = vsub.s32 %v183, %v214
    %v216 = vrot.slane %v100, %v215
    %v217 = vlaneseq
    %v218 = vshrl.u32 %v217, 7
    %v219 = vsub.s32 %v188, %v218
    %v220 = vrot.slane %v103, %v219
    %v221 = vsel %vm193, %v220, %v216
    %v222 = vlaneseq
    %v223 = vshrl.u32 %v222, 7
    %v224 = vsub.s32 %v183, %v223
    %v225 = vrot.slane %v106, %v224
    %v226 = vlaneseq
    %v227 = vshrl.u32 %v226, 7
    %v228 = vsub.s32 %v188, %v227
    %v229 = vrot.slane %v109, %v228
    %v230 = vsel %vm193, %v229, %v225
    %v231 = vlaneseq
    %v232 = vshrl.u32 %v231, 7
    %v233 = vsub.s32 %v183, %v232
    %v234 = vrot.slane %v112, %v233
    %v235 = vlaneseq
    %v236 = vshrl.u32 %v235, 7
    %v237 = vsub.s32 %v188, %v236
    %v238 = vrot.slane %v115, %v237
    %v239 = vsel %vm193, %v238, %v234
    %v240 = vlaneseq
    %v241 = vshrl.u32 %v240, 7
    %v242 = vsub.s32 %v183, %v241
    %v243 = vrot.slane %v118, %v242
    %v244 = vlaneseq
    %v245 = vshrl.u32 %v244, 7
    %v246 = vsub.s32 %v188, %v245
    %v247 = vrot.slane %v121, %v246
    %v248 = vsel %vm193, %v247, %v243
    %v249 = vlaneseq
    %v250 = vshrl.u32 %v249, 7
    %v251 = vsub.s32 %v183, %v250
    %v252 = vrot.slane %v124, %v251
    %v253 = vlaneseq
    %v254 = vshrl.u32 %v253, 7
    %v255 = vsub.s32 %v188, %v254
    %v256 = vrot.slane %v127, %v255
    %v257 = vsel %vm193, %v256, %v252
    %vm258 = vcmask 1041409
    %vm259 = vcmask 1042434
    %v260 = vsel %vm259, %v194, %v194
    %vm261 = vcmask 1043459
    %v262 = vsel %vm261, %v194, %v260
    %vm263 = vcmask 1044484
    %v264 = vsel %vm263, %v194, %v262
    %vm265 = vcmask 1045509
    %v266 = vsel %vm265, %v194, %v264
    %vm267 = vcmask 1046534
    %v268 = vsel %vm267, %v194, %v266
    %vm269 = vcmask 1047559
    %v270 = vsel %vm269, %v194, %v268
    %v271 = vsel %vm259, %v203, %v203
    %v272 = vsel %vm261, %v203, %v271
    %v273 = vsel %vm263, %v203, %v272
    %v274 = vsel %vm265, %v203, %v273
    %v275 = vsel %vm267, %v203, %v274
    %v276 = vsel %vm269, %v203, %v275
    %v277 = vsel %vm259, %v212, %v212
    %v278 = vsel %vm261, %v212, %v277
    %v279 = vsel %vm263, %v212, %v278
    %v280 = vsel %vm265, %v212, %v279
    %v281 = vsel %vm267, %v212, %v280
    %v282 = vsel %vm269, %v212, %v281
    %v283 = vsel %vm259, %v221, %v221
    %v284 = vsel %vm261, %v221, %v283
    %v285 = vsel %vm263, %v221, %v284
    %v286 = vsel %vm265, %v221, %v285
    %v287 = vsel %vm267, %v221, %v286
    %v288 = vsel %vm269, %v221, %v287
    %v289 = vsel %vm259, %v230, %v230
    %v290 = vsel %vm261, %v230, %v289
    %v291 = vsel %vm263, %v230, %v290
    %v292 = vsel %vm265, %v230, %v291
    %v293 = vsel %vm267, %v230, %v292
    %v294 = vsel %vm269, %v230, %v293
    %v295 = vsel %vm259, %v239, %v239
    %v296 = vsel %vm261, %v239, %v295
    %v297 = vsel %vm263, %v239, %v296
    %v298 = vsel %vm265, %v239, %v297
    %v299 = vsel %vm267, %v239, %v298
    %v300 = vsel %vm269, %v239, %v299
    %v301 = vsel %vm259, %v248, %v248
    %v302 = vsel %vm261, %v248, %v301
    %v303 = vsel %vm263, %v248, %v302
    %v304 = vsel %vm265, %v248, %v303
    %v305 = vsel %vm267, %v248, %v304
    %v306 = vsel %vm269, %v248, %v305
    %v307 = vsel %vm259, %v257, %v257
    %v308 = vsel %vm261, %v257, %v307
    %v309 = vsel %vm263, %v257, %v308
    %v310 = vsel %vm265, %v257, %v309
    %v311 = vsel %vm267, %v257, %v310
    %v312 = vsel %vm269, %v257, %v311
    %v321 = vmul.f32 %v29, %v270
    %v322 = vmul.f32 %v30, %v276
    %v323 = vmul.f32 %v31, %v282
    %v324 = vmul.f32 %v32, %v288
    %v325 = vmul.f32 %v33, %v294
    %v326 = vmul.f32 %v34, %v300
    %v327 = vmul.f32 %v35, %v306
    %v328 = vmul.f32 %v36, %v312
    %330 = vrot.lane.b32.xlu0 %v321, 114
    %v331 = vpop.permute.xlu0 %330
    %334 = vrot.lane.b32.xlu0 %v37, 108
    %v335 = vpop.permute.xlu0 %334
    %336 = vrot.lane.b32.xlu0 %v38, 108
    %v337 = vpop.permute.xlu0 %336
    %vm340 = vcmask 130048
    %v341 = vsel %vm340, %v331, 0
    %343 = vmatprep.subr.mxu0 0.0
    %344 = vmatpush1.msra.mxu0 0.0
    %345 = vmatprep.subr.mxu0 0.0
    %346 = vmatpush1.msra.mxu0 0.0
    %347 = vmatprep.subr.mxu0 0.0
    %348 = vmatpush1.msra.mxu0 0.0
    %349 = vmatprep.subr.mxu0 0.0
    %350 = vmatpush1.msra.mxu0 0.0
    %351 = vmatprep.subr.mxu0 0.0
    %352 = vmatpush1.msra.mxu0 0.0
    %353 = vmatprep.subr.mxu0 0.0
    %354 = vmatpush1.msra.mxu0 0.0
    %355 = vmatprep.subr.mxu0 0.0
    %356 = vmatpush1.msra.mxu0 0.0
    %357 = vmatprep.subr.mxu0 0.0
    %358 = vmatpush1.msra.mxu0 0.0
    %359 = vmatprep.subr.mxu0 0.0
    %360 = vmatpush1.msra.mxu0 0.0
    %361 = vmatprep.subr.mxu0 0.0
    %362 = vmatpush1.msra.mxu0 0.0
    %363 = vmatprep.subr.mxu0 0.0
    %364 = vmatpush1.msra.mxu0 0.0
    %365 = vmatprep.subr.mxu0 0.0
    %366 = vmatpush1.msra.mxu0 0.0
    %367 = vmatprep.subr.mxu0 0.0
    %368 = vmatpush1.msra.mxu0 0.0
    %369 = vmatprep.subr.mxu0 0.0
    %370 = vmatpush1.msra.mxu0 0.0
    %371 = vmatprep.subr.mxu0 0.0
    %372 = vmatpush1.msra.mxu0 %v337
    %373 = vmatprep.subr.mxu0 0.0
    %374 = vmatpush1.msra.mxu0 %v335
    %375 = vmatprep.subr.mxu0 0.0
    %376 = vmatpush2.msra.mxu0 0.0
    %377 = vmatprep.subr.mxu0 0.0
    %378 = vmatpush2.msra.mxu0 0.0
    %379 = vmatprep.subr.mxu0 0.0
    %380 = vmatpush2.msra.mxu0 0.0
    %381 = vmatprep.subr.mxu0 0.0
    %382 = vmatpush2.msra.mxu0 0.0
    %383 = vmatprep.subr.mxu0 0.0
    %384 = vmatpush2.msra.mxu0 0.0
    %385 = vmatprep.subr.mxu0 0.0
    %386 = vmatpush2.msra.mxu0 0.0
    %387 = vmatprep.subr.mxu0 0.0
    %388 = vmatpush2.msra.mxu0 0.0
    %389 = vmatprep.subr.mxu0 0.0
    %390 = vmatpush2.msra.mxu0 0.0
    %391 = vmatprep.subr.mxu0 0.0
    %392 = vmatpush2.msra.mxu0 0.0
    %393 = vmatprep.subr.mxu0 0.0
    %394 = vmatpush2.msra.mxu0 0.0
    %395 = vmatprep.subr.mxu0 0.0
    %396 = vmatpush2.msra.mxu0 0.0
    %397 = vmatprep.subr.mxu0 0.0
    %398 = vmatpush2.msra.mxu0 0.0
    %399 = vmatprep.subr.mxu0 0.0
    %400 = vmatpush2.msra.mxu0 0.0
    %401 = vmatprep.subr.mxu0 0.0
    %402 = vmatpush2.msra.mxu0 0.0
    %403 = vmatprep.subr.mxu0 0.0
    %404 = vmatpush2.msra.mxu0 0.0
    %405 = vmatprep.subr.mxu0 0.0
    %406 = vmatpush2.msra.mxu0 0.0
    %407 = vmatprep.mubr.f32.mxu0 0.0
    %408 = vmatmul.mubr.f32.gmra.mxu0 %v341
    %v409 = vpop.f32.mrf.mxu0
    %v410 = vadd.f32 0.0, %v409
    %v411 = vpop.f32.mrf.mxu0
    %412 = vdwg.mxu0
    %414 = vrot.lane.b32.xlu0 %v322, 114
    %v415 = vpop.permute.xlu0 %414
    %418 = vrot.lane.b32.xlu0 %v39, 108
    %v419 = vpop.permute.xlu0 %418
    %420 = vrot.lane.b32.xlu0 %v40, 108
    %v421 = vpop.permute.xlu0 %420
    %v424 = vsel %vm340, %v415, 0
    %426 = vmatprep.subr.mxu0 0.0
    %427 = vmatpush1.msra.mxu0 0.0
    %428 = vmatprep.subr.mxu0 0.0
    %429 = vmatpush1.msra.mxu0 0.0
    %430 = vmatprep.subr.mxu0 0.0
    %431 = vmatpush1.msra.mxu0 0.0
    %432 = vmatprep.subr.mxu0 0.0
    %433 = vmatpush1.msra.mxu0 0.0
    %434 = vmatprep.subr.mxu0 0.0
    %435 = vmatpush1.msra.mxu0 0.0
    %436 = vmatprep.subr.mxu0 0.0
    %437 = vmatpush1.msra.mxu0 0.0
    %438 = vmatprep.subr.mxu0 0.0
    %439 = vmatpush1.msra.mxu0 0.0
    %440 = vmatprep.subr.mxu0 0.0
    %441 = vmatpush1.msra.mxu0 0.0
    %442 = vmatprep.subr.mxu0 0.0
    %443 = vmatpush1.msra.mxu0 0.0
    %444 = vmatprep.subr.mxu0 0.0
    %445 = vmatpush1.msra.mxu0 0.0
    %446 = vmatprep.subr.mxu0 0.0
    %447 = vmatpush1.msra.mxu0 0.0
    %448 = vmatprep.subr.mxu0 0.0
    %449 = vmatpush1.msra.mxu0 0.0
    %450 = vmatprep.subr.mxu0 0.0
    %451 = vmatpush1.msra.mxu0 0.0
    %452 = vmatprep.subr.mxu0 0.0
    %453 = vmatpush1.msra.mxu0 0.0
    %454 = vmatprep.subr.mxu0 0.0
    %455 = vmatpush1.msra.mxu0 %v421
    %456 = vmatprep.subr.mxu0 0.0
    %457 = vmatpush1.msra.mxu0 %v419
    %458 = vmatprep.subr.mxu0 0.0
    %459 = vmatpush2.msra.mxu0 0.0
    %460 = vmatprep.subr.mxu0 0.0
    %461 = vmatpush2.msra.mxu0 0.0
    %462 = vmatprep.subr.mxu0 0.0
    %463 = vmatpush2.msra.mxu0 0.0
    %464 = vmatprep.subr.mxu0 0.0
    %465 = vmatpush2.msra.mxu0 0.0
    %466 = vmatprep.subr.mxu0 0.0
    %467 = vmatpush2.msra.mxu0 0.0
    %468 = vmatprep.subr.mxu0 0.0
    %469 = vmatpush2.msra.mxu0 0.0
    %470 = vmatprep.subr.mxu0 0.0
    %471 = vmatpush2.msra.mxu0 0.0
    %472 = vmatprep.subr.mxu0 0.0
    %473 = vmatpush2.msra.mxu0 0.0
    %474 = vmatprep.subr.mxu0 0.0
    %475 = vmatpush2.msra.mxu0 0.0
    %476 = vmatprep.subr.mxu0 0.0
    %477 = vmatpush2.msra.mxu0 0.0
    %478 = vmatprep.subr.mxu0 0.0
    %479 = vmatpush2.msra.mxu0 0.0
    %480 = vmatprep.subr.mxu0 0.0
    %481 = vmatpush2.msra.mxu0 0.0
    %482 = vmatprep.subr.mxu0 0.0
    %483 = vmatpush2.msra.mxu0 0.0
    %484 = vmatprep.subr.mxu0 0.0
    %485 = vmatpush2.msra.mxu0 0.0
    %486 = vmatprep.subr.mxu0 0.0
    %487 = vmatpush2.msra.mxu0 0.0
    %488 = vmatprep.subr.mxu0 0.0
    %489 = vmatpush2.msra.mxu0 0.0
    %490 = vmatprep.mubr.f32.mxu0 0.0
    %491 = vmatmul.mubr.f32.gmra.mxu0 %v424
    %v492 = vpop.f32.mrf.mxu0
    %v493 = vadd.f32 0.0, %v492
    %v494 = vpop.f32.mrf.mxu0
    %495 = vdwg.mxu0
    %497 = vrot.lane.b32.xlu0 %v323, 114
    %v498 = vpop.permute.xlu0 %497
    %501 = vrot.lane.b32.xlu0 %v41, 108
    %v502 = vpop.permute.xlu0 %501
    %503 = vrot.lane.b32.xlu0 %v42, 108
    %v504 = vpop.permute.xlu0 %503
    %v507 = vsel %vm340, %v498, 0
    %509 = vmatprep.subr.mxu0 0.0
    %510 = vmatpush1.msra.mxu0 0.0
    %511 = vmatprep.subr.mxu0 0.0
    %512 = vmatpush1.msra.mxu0 0.0
    %513 = vmatprep.subr.mxu0 0.0
    %514 = vmatpush1.msra.mxu0 0.0
    %515 = vmatprep.subr.mxu0 0.0
    %516 = vmatpush1.msra.mxu0 0.0
    %517 = vmatprep.subr.mxu0 0.0
    %518 = vmatpush1.msra.mxu0 0.0
    %519 = vmatprep.subr.mxu0 0.0
    %520 = vmatpush1.msra.mxu0 0.0
    %521 = vmatprep.subr.mxu0 0.0
    %522 = vmatpush1.msra.mxu0 0.0
    %523 = vmatprep.subr.mxu0 0.0
    %524 = vmatpush1.msra.mxu0 0.0
    %525 = vmatprep.subr.mxu0 0.0
    %526 = vmatpush1.msra.mxu0 0.0
    %527 = vmatprep.subr.mxu0 0.0
    %528 = vmatpush1.msra.mxu0 0.0
    %529 = vmatprep.subr.mxu0 0.0
    %530 = vmatpush1.msra.mxu0 0.0
    %531 = vmatprep.subr.mxu0 0.0
    %532 = vmatpush1.msra.mxu0 0.0
    %533 = vmatprep.subr.mxu0 0.0
    %534 = vmatpush1.msra.mxu0 0.0
    %535 = vmatprep.subr.mxu0 0.0
    %536 = vmatpush1.msra.mxu0 0.0
    %537 = vmatprep.subr.mxu0 0.0
    %538 = vmatpush1.msra.mxu0 %v504
    %539 = vmatprep.subr.mxu0 0.0
    %540 = vmatpush1.msra.mxu0 %v502
    %541 = vmatprep.subr.mxu0 0.0
    %542 = vmatpush2.msra.mxu0 0.0
    %543 = vmatprep.subr.mxu0 0.0
    %544 = vmatpush2.msra.mxu0 0.0
    %545 = vmatprep.subr.mxu0 0.0
    %546 = vmatpush2.msra.mxu0 0.0
    %547 = vmatprep.subr.mxu0 0.0
    %548 = vmatpush2.msra.mxu0 0.0
    %549 = vmatprep.subr.mxu0 0.0
    %550 = vmatpush2.msra.mxu0 0.0
    %551 = vmatprep.subr.mxu0 0.0
    %552 = vmatpush2.msra.mxu0 0.0
    %553 = vmatprep.subr.mxu0 0.0
    %554 = vmatpush2.msra.mxu0 0.0
    %555 = vmatprep.subr.mxu0 0.0
    %556 = vmatpush2.msra.mxu0 0.0
    %557 = vmatprep.subr.mxu0 0.0
    %558 = vmatpush2.msra.mxu0 0.0
    %559 = vmatprep.subr.mxu0 0.0
    %560 = vmatpush2.msra.mxu0 0.0
    %561 = vmatprep.subr.mxu0 0.0
    %562 = vmatpush2.msra.mxu0 0.0
    %563 = vmatprep.subr.mxu0 0.0
    %564 = vmatpush2.msra.mxu0 0.0
    %565 = vmatprep.subr.mxu0 0.0
    %566 = vmatpush2.msra.mxu0 0.0
    %567 = vmatprep.subr.mxu0 0.0
    %568 = vmatpush2.msra.mxu0 0.0
    %569 = vmatprep.subr.mxu0 0.0
    %570 = vmatpush2.msra.mxu0 0.0
    %571 = vmatprep.subr.mxu0 0.0
    %572 = vmatpush2.msra.mxu0 0.0
    %573 = vmatprep.mubr.f32.mxu0 0.0
    %574 = vmatmul.mubr.f32.gmra.mxu0 %v507
    %v575 = vpop.f32.mrf.mxu0
    %v576 = vadd.f32 0.0, %v575
    %v577 = vpop.f32.mrf.mxu0
    %578 = vdwg.mxu0
    %580 = vrot.lane.b32.xlu0 %v324, 114
    %v581 = vpop.permute.xlu0 %580
    %584 = vrot.lane.b32.xlu0 %v43, 108
    %v585 = vpop.permute.xlu0 %584
    %586 = vrot.lane.b32.xlu0 %v44, 108
    %v587 = vpop.permute.xlu0 %586
    %v590 = vsel %vm340, %v581, 0
    %592 = vmatprep.subr.mxu0 0.0
    %593 = vmatpush1.msra.mxu0 0.0
    %594 = vmatprep.subr.mxu0 0.0
    %595 = vmatpush1.msra.mxu0 0.0
    %596 = vmatprep.subr.mxu0 0.0
    %597 = vmatpush1.msra.mxu0 0.0
    %598 = vmatprep.subr.mxu0 0.0
    %599 = vmatpush1.msra.mxu0 0.0
    %600 = vmatprep.subr.mxu0 0.0
    %601 = vmatpush1.msra.mxu0 0.0
    %602 = vmatprep.subr.mxu0 0.0
    %603 = vmatpush1.msra.mxu0 0.0
    %604 = vmatprep.subr.mxu0 0.0
    %605 = vmatpush1.msra.mxu0 0.0
    %606 = vmatprep.subr.mxu0 0.0
    %607 = vmatpush1.msra.mxu0 0.0
    %608 = vmatprep.subr.mxu0 0.0
    %609 = vmatpush1.msra.mxu0 0.0
    %610 = vmatprep.subr.mxu0 0.0
    %611 = vmatpush1.msra.mxu0 0.0
    %612 = vmatprep.subr.mxu0 0.0
    %613 = vmatpush1.msra.mxu0 0.0
    %614 = vmatprep.subr.mxu0 0.0
    %615 = vmatpush1.msra.mxu0 0.0
    %616 = vmatprep.subr.mxu0 0.0
    %617 = vmatpush1.msra.mxu0 0.0
    %618 = vmatprep.subr.mxu0 0.0
    %619 = vmatpush1.msra.mxu0 0.0
    %620 = vmatprep.subr.mxu0 0.0
    %621 = vmatpush1.msra.mxu0 %v587
    %622 = vmatprep.subr.mxu0 0.0
    %623 = vmatpush1.msra.mxu0 %v585
    %624 = vmatprep.subr.mxu0 0.0
    %625 = vmatpush2.msra.mxu0 0.0
    %626 = vmatprep.subr.mxu0 0.0
    %627 = vmatpush2.msra.mxu0 0.0
    %628 = vmatprep.subr.mxu0 0.0
    %629 = vmatpush2.msra.mxu0 0.0
    %630 = vmatprep.subr.mxu0 0.0
    %631 = vmatpush2.msra.mxu0 0.0
    %632 = vmatprep.subr.mxu0 0.0
    %633 = vmatpush2.msra.mxu0 0.0
    %634 = vmatprep.subr.mxu0 0.0
    %635 = vmatpush2.msra.mxu0 0.0
    %636 = vmatprep.subr.mxu0 0.0
    %637 = vmatpush2.msra.mxu0 0.0
    %638 = vmatprep.subr.mxu0 0.0
    %639 = vmatpush2.msra.mxu0 0.0
    %640 = vmatprep.subr.mxu0 0.0
    %641 = vmatpush2.msra.mxu0 0.0
    %642 = vmatprep.subr.mxu0 0.0
    %643 = vmatpush2.msra.mxu0 0.0
    %644 = vmatprep.subr.mxu0 0.0
    %645 = vmatpush2.msra.mxu0 0.0
    %646 = vmatprep.subr.mxu0 0.0
    %647 = vmatpush2.msra.mxu0 0.0
    %648 = vmatprep.subr.mxu0 0.0
    %649 = vmatpush2.msra.mxu0 0.0
    %650 = vmatprep.subr.mxu0 0.0
    %651 = vmatpush2.msra.mxu0 0.0
    %652 = vmatprep.subr.mxu0 0.0
    %653 = vmatpush2.msra.mxu0 0.0
    %654 = vmatprep.subr.mxu0 0.0
    %655 = vmatpush2.msra.mxu0 0.0
    %656 = vmatprep.mubr.f32.mxu0 0.0
    %657 = vmatmul.mubr.f32.gmra.mxu0 %v590
    %v658 = vpop.f32.mrf.mxu0
    %v659 = vadd.f32 0.0, %v658
    %v660 = vpop.f32.mrf.mxu0
    %661 = vdwg.mxu0
    %663 = vrot.lane.b32.xlu0 %v325, 114
    %v664 = vpop.permute.xlu0 %663
    %667 = vrot.lane.b32.xlu0 %v45, 108
    %v668 = vpop.permute.xlu0 %667
    %669 = vrot.lane.b32.xlu0 %v46, 108
    %v670 = vpop.permute.xlu0 %669
    %v673 = vsel %vm340, %v664, 0
    %675 = vmatprep.subr.mxu0 0.0
    %676 = vmatpush1.msra.mxu0 0.0
    %677 = vmatprep.subr.mxu0 0.0
    %678 = vmatpush1.msra.mxu0 0.0
    %679 = vmatprep.subr.mxu0 0.0
    %680 = vmatpush1.msra.mxu0 0.0
    %681 = vmatprep.subr.mxu0 0.0
    %682 = vmatpush1.msra.mxu0 0.0
    %683 = vmatprep.subr.mxu0 0.0
    %684 = vmatpush1.msra.mxu0 0.0
    %685 = vmatprep.subr.mxu0 0.0
    %686 = vmatpush1.msra.mxu0 0.0
    %687 = vmatprep.subr.mxu0 0.0
    %688 = vmatpush1.msra.mxu0 0.0
    %689 = vmatprep.subr.mxu0 0.0
    %690 = vmatpush1.msra.mxu0 0.0
    %691 = vmatprep.subr.mxu0 0.0
    %692 = vmatpush1.msra.mxu0 0.0
    %693 = vmatprep.subr.mxu0 0.0
    %694 = vmatpush1.msra.mxu0 0.0
    %695 = vmatprep.subr.mxu0 0.0
    %696 = vmatpush1.msra.mxu0 0.0
    %697 = vmatprep.subr.mxu0 0.0
    %698 = vmatpush1.msra.mxu0 0.0
    %699 = vmatprep.subr.mxu0 0.0
    %700 = vmatpush1.msra.mxu0 0.0
    %701 = vmatprep.subr.mxu0 0.0
    %702 = vmatpush1.msra.mxu0 0.0
    %703 = vmatprep.subr.mxu0 0.0
    %704 = vmatpush1.msra.mxu0 %v670
    %705 = vmatprep.subr.mxu0 0.0
    %706 = vmatpush1.msra.mxu0 %v668
    %707 = vmatprep.subr.mxu0 0.0
    %708 = vmatpush2.msra.mxu0 0.0
    %709 = vmatprep.subr.mxu0 0.0
    %710 = vmatpush2.msra.mxu0 0.0
    %711 = vmatprep.subr.mxu0 0.0
    %712 = vmatpush2.msra.mxu0 0.0
    %713 = vmatprep.subr.mxu0 0.0
    %714 = vmatpush2.msra.mxu0 0.0
    %715 = vmatprep.subr.mxu0 0.0
    %716 = vmatpush2.msra.mxu0 0.0
    %717 = vmatprep.subr.mxu0 0.0
    %718 = vmatpush2.msra.mxu0 0.0
    %719 = vmatprep.subr.mxu0 0.0
    %720 = vmatpush2.msra.mxu0 0.0
    %721 = vmatprep.subr.mxu0 0.0
    %722 = vmatpush2.msra.mxu0 0.0
    %723 = vmatprep.subr.mxu0 0.0
    %724 = vmatpush2.msra.mxu0 0.0
    %725 = vmatprep.subr.mxu0 0.0
    %726 = vmatpush2.msra.mxu0 0.0
    %727 = vmatprep.subr.mxu0 0.0
    %728 = vmatpush2.msra.mxu0 0.0
    %729 = vmatprep.subr.mxu0 0.0
    %730 = vmatpush2.msra.mxu0 0.0
    %731 = vmatprep.subr.mxu0 0.0
    %732 = vmatpush2.msra.mxu0 0.0
    %733 = vmatprep.subr.mxu0 0.0
    %734 = vmatpush2.msra.mxu0 0.0
    %735 = vmatprep.subr.mxu0 0.0
    %736 = vmatpush2.msra.mxu0 0.0
    %737 = vmatprep.subr.mxu0 0.0
    %738 = vmatpush2.msra.mxu0 0.0
    %739 = vmatprep.mubr.f32.mxu0 0.0
    %740 = vmatmul.mubr.f32.gmra.mxu0 %v673
    %v741 = vpop.f32.mrf.mxu0
    %v742 = vadd.f32 0.0, %v741
    %v743 = vpop.f32.mrf.mxu0
    %744 = vdwg.mxu0
    %746 = vrot.lane.b32.xlu0 %v326, 114
    %v747 = vpop.permute.xlu0 %746
    %750 = vrot.lane.b32.xlu0 %v47, 108
    %v751 = vpop.permute.xlu0 %750
    %752 = vrot.lane.b32.xlu0 %v48, 108
    %v753 = vpop.permute.xlu0 %752
    %v756 = vsel %vm340, %v747, 0
    %758 = vmatprep.subr.mxu0 0.0
    %759 = vmatpush1.msra.mxu0 0.0
    %760 = vmatprep.subr.mxu0 0.0
    %761 = vmatpush1.msra.mxu0 0.0
    %762 = vmatprep.subr.mxu0 0.0
    %763 = vmatpush1.msra.mxu0 0.0
    %764 = vmatprep.subr.mxu0 0.0
    %765 = vmatpush1.msra.mxu0 0.0
    %766 = vmatprep.subr.mxu0 0.0
    %767 = vmatpush1.msra.mxu0 0.0
    %768 = vmatprep.subr.mxu0 0.0
    %769 = vmatpush1.msra.mxu0 0.0
    %770 = vmatprep.subr.mxu0 0.0
    %771 = vmatpush1.msra.mxu0 0.0
    %772 = vmatprep.subr.mxu0 0.0
    %773 = vmatpush1.msra.mxu0 0.0
    %774 = vmatprep.subr.mxu0 0.0
    %775 = vmatpush1.msra.mxu0 0.0
    %776 = vmatprep.subr.mxu0 0.0
    %777 = vmatpush1.msra.mxu0 0.0
    %778 = vmatprep.subr.mxu0 0.0
    %779 = vmatpush1.msra.mxu0 0.0
    %780 = vmatprep.subr.mxu0 0.0
    %781 = vmatpush1.msra.mxu0 0.0
    %782 = vmatprep.subr.mxu0 0.0
    %783 = vmatpush1.msra.mxu0 0.0
    %784 = vmatprep.subr.mxu0 0.0
    %785 = vmatpush1.msra.mxu0 0.0
    %786 = vmatprep.subr.mxu0 0.0
    %787 = vmatpush1.msra.mxu0 %v753
    %788 = vmatprep.subr.mxu0 0.0
    %789 = vmatpush1.msra.mxu0 %v751
    %790 = vmatprep.subr.mxu0 0.0
    %791 = vmatpush2.msra.mxu0 0.0
    %792 = vmatprep.subr.mxu0 0.0
    %793 = vmatpush2.msra.mxu0 0.0
    %794 = vmatprep.subr.mxu0 0.0
    %795 = vmatpush2.msra.mxu0 0.0
    %796 = vmatprep.subr.mxu0 0.0
    %797 = vmatpush2.msra.mxu0 0.0
    %798 = vmatprep.subr.mxu0 0.0
    %799 = vmatpush2.msra.mxu0 0.0
    %800 = vmatprep.subr.mxu0 0.0
    %801 = vmatpush2.msra.mxu0 0.0
    %802 = vmatprep.subr.mxu0 0.0
    %803 = vmatpush2.msra.mxu0 0.0
    %804 = vmatprep.subr.mxu0 0.0
    %805 = vmatpush2.msra.mxu0 0.0
    %806 = vmatprep.subr.mxu0 0.0
    %807 = vmatpush2.msra.mxu0 0.0
    %808 = vmatprep.subr.mxu0 0.0
    %809 = vmatpush2.msra.mxu0 0.0
    %810 = vmatprep.subr.mxu0 0.0
    %811 = vmatpush2.msra.mxu0 0.0
    %812 = vmatprep.subr.mxu0 0.0
    %813 = vmatpush2.msra.mxu0 0.0
    %814 = vmatprep.subr.mxu0 0.0
    %815 = vmatpush2.msra.mxu0 0.0
    %816 = vmatprep.subr.mxu0 0.0
    %817 = vmatpush2.msra.mxu0 0.0
    %818 = vmatprep.subr.mxu0 0.0
    %819 = vmatpush2.msra.mxu0 0.0
    %820 = vmatprep.subr.mxu0 0.0
    %821 = vmatpush2.msra.mxu0 0.0
    %822 = vmatprep.mubr.f32.mxu0 0.0
    %823 = vmatmul.mubr.f32.gmra.mxu0 %v756
    %v824 = vpop.f32.mrf.mxu0
    %v825 = vadd.f32 0.0, %v824
    %v826 = vpop.f32.mrf.mxu0
    %827 = vdwg.mxu0
    %829 = vrot.lane.b32.xlu0 %v327, 114
    %v830 = vpop.permute.xlu0 %829
    %833 = vrot.lane.b32.xlu0 %v49, 108
    %v834 = vpop.permute.xlu0 %833
    %835 = vrot.lane.b32.xlu0 %v50, 108
    %v836 = vpop.permute.xlu0 %835
    %v839 = vsel %vm340, %v830, 0
    %841 = vmatprep.subr.mxu0 0.0
    %842 = vmatpush1.msra.mxu0 0.0
    %843 = vmatprep.subr.mxu0 0.0
    %844 = vmatpush1.msra.mxu0 0.0
    %845 = vmatprep.subr.mxu0 0.0
    %846 = vmatpush1.msra.mxu0 0.0
    %847 = vmatprep.subr.mxu0 0.0
    %848 = vmatpush1.msra.mxu0 0.0
    %849 = vmatprep.subr.mxu0 0.0
    %850 = vmatpush1.msra.mxu0 0.0
    %851 = vmatprep.subr.mxu0 0.0
    %852 = vmatpush1.msra.mxu0 0.0
    %853 = vmatprep.subr.mxu0 0.0
    %854 = vmatpush1.msra.mxu0 0.0
    %855 = vmatprep.subr.mxu0 0.0
    %856 = vmatpush1.msra.mxu0 0.0
    %857 = vmatprep.subr.mxu0 0.0
    %858 = vmatpush1.msra.mxu0 0.0
    %859 = vmatprep.subr.mxu0 0.0
    %860 = vmatpush1.msra.mxu0 0.0
    %861 = vmatprep.subr.mxu0 0.0
    %862 = vmatpush1.msra.mxu0 0.0
    %863 = vmatprep.subr.mxu0 0.0
    %864 = vmatpush1.msra.mxu0 0.0
    %865 = vmatprep.subr.mxu0 0.0
    %866 = vmatpush1.msra.mxu0 0.0
    %867 = vmatprep.subr.mxu0 0.0
    %868 = vmatpush1.msra.mxu0 0.0
    %869 = vmatprep.subr.mxu0 0.0
    %870 = vmatpush1.msra.mxu0 %v836
    %871 = vmatprep.subr.mxu0 0.0
    %872 = vmatpush1.msra.mxu0 %v834
    %873 = vmatprep.subr.mxu0 0.0
    %874 = vmatpush2.msra.mxu0 0.0
    %875 = vmatprep.subr.mxu0 0.0
    %876 = vmatpush2.msra.mxu0 0.0
    %877 = vmatprep.subr.mxu0 0.0
    %878 = vmatpush2.msra.mxu0 0.0
    %879 = vmatprep.subr.mxu0 0.0
    %880 = vmatpush2.msra.mxu0 0.0
    %881 = vmatprep.subr.mxu0 0.0
    %882 = vmatpush2.msra.mxu0 0.0
    %883 = vmatprep.subr.mxu0 0.0
    %884 = vmatpush2.msra.mxu0 0.0
    %885 = vmatprep.subr.mxu0 0.0
    %886 = vmatpush2.msra.mxu0 0.0
    %887 = vmatprep.subr.mxu0 0.0
    %888 = vmatpush2.msra.mxu0 0.0
    %889 = vmatprep.subr.mxu0 0.0
    %890 = vmatpush2.msra.mxu0 0.0
    %891 = vmatprep.subr.mxu0 0.0
    %892 = vmatpush2.msra.mxu0 0.0
    %893 = vmatprep.subr.mxu0 0.0
    %894 = vmatpush2.msra.mxu0 0.0
    %895 = vmatprep.subr.mxu0 0.0
    %896 = vmatpush2.msra.mxu0 0.0
    %897 = vmatprep.subr.mxu0 0.0
    %898 = vmatpush2.msra.mxu0 0.0
    %899 = vmatprep.subr.mxu0 0.0
    %900 = vmatpush2.msra.mxu0 0.0
    %901 = vmatprep.subr.mxu0 0.0
    %902 = vmatpush2.msra.mxu0 0.0
    %903 = vmatprep.subr.mxu0 0.0
    %904 = vmatpush2.msra.mxu0 0.0
    %905 = vmatprep.mubr.f32.mxu0 0.0
    %906 = vmatmul.mubr.f32.gmra.mxu0 %v839
    %v907 = vpop.f32.mrf.mxu0
    %v908 = vadd.f32 0.0, %v907
    %v909 = vpop.f32.mrf.mxu0
    %910 = vdwg.mxu0
    %912 = vrot.lane.b32.xlu0 %v328, 114
    %v913 = vpop.permute.xlu0 %912
    %916 = vrot.lane.b32.xlu0 %v51, 108
    %v917 = vpop.permute.xlu0 %916
    %918 = vrot.lane.b32.xlu0 %v52, 108
    %v919 = vpop.permute.xlu0 %918
    %v922 = vsel %vm340, %v913, 0
    %924 = vmatprep.subr.mxu0 0.0
    %925 = vmatpush1.msra.mxu0 0.0
    %926 = vmatprep.subr.mxu0 0.0
    %927 = vmatpush1.msra.mxu0 0.0
    %928 = vmatprep.subr.mxu0 0.0
    %929 = vmatpush1.msra.mxu0 0.0
    %930 = vmatprep.subr.mxu0 0.0
    %931 = vmatpush1.msra.mxu0 0.0
    %932 = vmatprep.subr.mxu0 0.0
    %933 = vmatpush1.msra.mxu0 0.0
    %934 = vmatprep.subr.mxu0 0.0
    %935 = vmatpush1.msra.mxu0 0.0
    %936 = vmatprep.subr.mxu0 0.0
    %937 = vmatpush1.msra.mxu0 0.0
    %938 = vmatprep.subr.mxu0 0.0
    %939 = vmatpush1.msra.mxu0 0.0
    %940 = vmatprep.subr.mxu0 0.0
    %941 = vmatpush1.msra.mxu0 0.0
    %942 = vmatprep.subr.mxu0 0.0
    %943 = vmatpush1.msra.mxu0 0.0
    %944 = vmatprep.subr.mxu0 0.0
    %945 = vmatpush1.msra.mxu0 0.0
    %946 = vmatprep.subr.mxu0 0.0
    %947 = vmatpush1.msra.mxu0 0.0
    %948 = vmatprep.subr.mxu0 0.0
    %949 = vmatpush1.msra.mxu0 0.0
    %950 = vmatprep.subr.mxu0 0.0
    %951 = vmatpush1.msra.mxu0 0.0
    %952 = vmatprep.subr.mxu0 0.0
    %953 = vmatpush1.msra.mxu0 %v919
    %954 = vmatprep.subr.mxu0 0.0
    %955 = vmatpush1.msra.mxu0 %v917
    %956 = vmatprep.subr.mxu0 0.0
    %957 = vmatpush2.msra.mxu0 0.0
    %958 = vmatprep.subr.mxu0 0.0
    %959 = vmatpush2.msra.mxu0 0.0
    %960 = vmatprep.subr.mxu0 0.0
    %961 = vmatpush2.msra.mxu0 0.0
    %962 = vmatprep.subr.mxu0 0.0
    %963 = vmatpush2.msra.mxu0 0.0
    %964 = vmatprep.subr.mxu0 0.0
    %965 = vmatpush2.msra.mxu0 0.0
    %966 = vmatprep.subr.mxu0 0.0
    %967 = vmatpush2.msra.mxu0 0.0
    %968 = vmatprep.subr.mxu0 0.0
    %969 = vmatpush2.msra.mxu0 0.0
    %970 = vmatprep.subr.mxu0 0.0
    %971 = vmatpush2.msra.mxu0 0.0
    %972 = vmatprep.subr.mxu0 0.0
    %973 = vmatpush2.msra.mxu0 0.0
    %974 = vmatprep.subr.mxu0 0.0
    %975 = vmatpush2.msra.mxu0 0.0
    %976 = vmatprep.subr.mxu0 0.0
    %977 = vmatpush2.msra.mxu0 0.0
    %978 = vmatprep.subr.mxu0 0.0
    %979 = vmatpush2.msra.mxu0 0.0
    %980 = vmatprep.subr.mxu0 0.0
    %981 = vmatpush2.msra.mxu0 0.0
    %982 = vmatprep.subr.mxu0 0.0
    %983 = vmatpush2.msra.mxu0 0.0
    %984 = vmatprep.subr.mxu0 0.0
    %985 = vmatpush2.msra.mxu0 0.0
    %986 = vmatprep.subr.mxu0 0.0
    %987 = vmatpush2.msra.mxu0 0.0
    %988 = vmatprep.mubr.f32.mxu0 0.0
    %989 = vmatmul.mubr.f32.gmra.mxu0 %v922
    %v990 = vpop.f32.mrf.mxu0
    %v991 = vadd.f32 0.0, %v990
    %v992 = vpop.f32.mrf.mxu0
    %993 = vdwg.mxu0
    %1002 = vrot.lane.b32.xlu0 %v29, 122
    %v1003 = vpop.permute.xlu0 %1002
    %1004 = vrot.lane.b32.xlu0 %v30, 122
    %v1005 = vpop.permute.xlu0 %1004
    %1006 = vrot.lane.b32.xlu0 %v31, 122
    %v1007 = vpop.permute.xlu0 %1006
    %1008 = vrot.lane.b32.xlu0 %v32, 122
    %v1009 = vpop.permute.xlu0 %1008
    %1010 = vrot.lane.b32.xlu0 %v33, 122
    %v1011 = vpop.permute.xlu0 %1010
    %1012 = vrot.lane.b32.xlu0 %v34, 122
    %v1013 = vpop.permute.xlu0 %1012
    %1014 = vrot.lane.b32.xlu0 %v35, 122
    %v1015 = vpop.permute.xlu0 %1014
    %1016 = vrot.lane.b32.xlu0 %v36, 122
    %v1017 = vpop.permute.xlu0 %1016
    %v1026 = vmul.f32 %v410, %v1003
    %v1027 = vmul.f32 %v493, %v1005
    %v1028 = vmul.f32 %v576, %v1007
    %v1029 = vmul.f32 %v659, %v1009
    %v1030 = vmul.f32 %v742, %v1011
    %v1031 = vmul.f32 %v825, %v1013
    %v1032 = vmul.f32 %v908, %v1015
    %v1033 = vmul.f32 %v991, %v1017
    %vm1034 = vcmask 64512
    %v1036 = vsel %vm1034, %v1026, 0
    %1038 = vmatprep.subr.mxu0 0.0
    %1039 = vmatpush1.msra.mxu0 0.0
    %1040 = vmatprep.subr.mxu0 0.0
    %1041 = vmatpush1.msra.mxu0 0.0
    %1042 = vmatprep.subr.mxu0 0.0
    %1043 = vmatpush1.msra.mxu0 0.0
    %1044 = vmatprep.subr.mxu0 0.0
    %1045 = vmatpush1.msra.mxu0 0.0
    %1046 = vmatprep.subr.mxu0 0.0
    %1047 = vmatpush1.msra.mxu0 0.0
    %1048 = vmatprep.subr.mxu0 0.0
    %1049 = vmatpush1.msra.mxu0 0.0
    %1050 = vmatprep.subr.mxu0 0.0
    %1051 = vmatpush1.msra.mxu0 0.0
    %1052 = vmatprep.subr.mxu0 0.0
    %1053 = vmatpush1.msra.mxu0 0.0
    %1054 = vmatprep.subr.mxu0 0.0
    %1055 = vmatpush1.msra.mxu0 0.0
    %1056 = vmatprep.subr.mxu0 0.0
    %1057 = vmatpush1.msra.mxu0 0.0
    %1058 = vmatprep.subr.mxu0 0.0
    %1059 = vmatpush1.msra.mxu0 0.0
    %1060 = vmatprep.subr.mxu0 0.0
    %1061 = vmatpush1.msra.mxu0 0.0
    %1062 = vmatprep.subr.mxu0 0.0
    %1063 = vmatpush1.msra.mxu0 0.0
    %1064 = vmatprep.subr.mxu0 0.0
    %1065 = vmatpush1.msra.mxu0 0.0
    %1066 = vmatprep.subr.mxu0 0.0
    %1067 = vmatpush1.msra.mxu0 0.0
    %1068 = vmatprep.subr.mxu0 0.0
    %1069 = vmatpush1.msra.mxu0 %v29
    %1070 = vmatprep.subr.mxu0 0.0
    %1071 = vmatpush2.msra.mxu0 0.0
    %1072 = vmatprep.subr.mxu0 0.0
    %1073 = vmatpush2.msra.mxu0 0.0
    %1074 = vmatprep.subr.mxu0 0.0
    %1075 = vmatpush2.msra.mxu0 0.0
    %1076 = vmatprep.subr.mxu0 0.0
    %1077 = vmatpush2.msra.mxu0 0.0
    %1078 = vmatprep.subr.mxu0 0.0
    %1079 = vmatpush2.msra.mxu0 0.0
    %1080 = vmatprep.subr.mxu0 0.0
    %1081 = vmatpush2.msra.mxu0 0.0
    %1082 = vmatprep.subr.mxu0 0.0
    %1083 = vmatpush2.msra.mxu0 0.0
    %1084 = vmatprep.subr.mxu0 0.0
    %1085 = vmatpush2.msra.mxu0 0.0
    %1086 = vmatprep.subr.mxu0 0.0
    %1087 = vmatpush2.msra.mxu0 0.0
    %1088 = vmatprep.subr.mxu0 0.0
    %1089 = vmatpush2.msra.mxu0 0.0
    %1090 = vmatprep.subr.mxu0 0.0
    %1091 = vmatpush2.msra.mxu0 0.0
    %1092 = vmatprep.subr.mxu0 0.0
    %1093 = vmatpush2.msra.mxu0 0.0
    %1094 = vmatprep.subr.mxu0 0.0
    %1095 = vmatpush2.msra.mxu0 0.0
    %1096 = vmatprep.subr.mxu0 0.0
    %1097 = vmatpush2.msra.mxu0 0.0
    %1098 = vmatprep.subr.mxu0 0.0
    %1099 = vmatpush2.msra.mxu0 0.0
    %1100 = vmatprep.subr.mxu0 0.0
    %1101 = vmatpush2.msra.mxu0 0.0
    %1102 = vmatprep.mubr.f32.mxu0 0.0
    %1103 = vmatmul.mubr.f32.gmra.mxu0 %v1036
    %v1104 = vpop.f32.mrf.mxu0
    %v1105 = vadd.f32 0.0, %v1104
    %v1106 = vpop.f32.mrf.mxu0
    %1107 = vdwg.mxu0
    %v1109 = vsel %vm1034, %v1027, 0
    %1111 = vmatprep.subr.mxu0 0.0
    %1112 = vmatpush1.msra.mxu0 0.0
    %1113 = vmatprep.subr.mxu0 0.0
    %1114 = vmatpush1.msra.mxu0 0.0
    %1115 = vmatprep.subr.mxu0 0.0
    %1116 = vmatpush1.msra.mxu0 0.0
    %1117 = vmatprep.subr.mxu0 0.0
    %1118 = vmatpush1.msra.mxu0 0.0
    %1119 = vmatprep.subr.mxu0 0.0
    %1120 = vmatpush1.msra.mxu0 0.0
    %1121 = vmatprep.subr.mxu0 0.0
    %1122 = vmatpush1.msra.mxu0 0.0
    %1123 = vmatprep.subr.mxu0 0.0
    %1124 = vmatpush1.msra.mxu0 0.0
    %1125 = vmatprep.subr.mxu0 0.0
    %1126 = vmatpush1.msra.mxu0 0.0
    %1127 = vmatprep.subr.mxu0 0.0
    %1128 = vmatpush1.msra.mxu0 0.0
    %1129 = vmatprep.subr.mxu0 0.0
    %1130 = vmatpush1.msra.mxu0 0.0
    %1131 = vmatprep.subr.mxu0 0.0
    %1132 = vmatpush1.msra.mxu0 0.0
    %1133 = vmatprep.subr.mxu0 0.0
    %1134 = vmatpush1.msra.mxu0 0.0
    %1135 = vmatprep.subr.mxu0 0.0
    %1136 = vmatpush1.msra.mxu0 0.0
    %1137 = vmatprep.subr.mxu0 0.0
    %1138 = vmatpush1.msra.mxu0 0.0
    %1139 = vmatprep.subr.mxu0 0.0
    %1140 = vmatpush1.msra.mxu0 0.0
    %1141 = vmatprep.subr.mxu0 0.0
    %1142 = vmatpush1.msra.mxu0 %v30
    %1143 = vmatprep.subr.mxu0 0.0
    %1144 = vmatpush2.msra.mxu0 0.0
    %1145 = vmatprep.subr.mxu0 0.0
    %1146 = vmatpush2.msra.mxu0 0.0
    %1147 = vmatprep.subr.mxu0 0.0
    %1148 = vmatpush2.msra.mxu0 0.0
    %1149 = vmatprep.subr.mxu0 0.0
    %1150 = vmatpush2.msra.mxu0 0.0
    %1151 = vmatprep.subr.mxu0 0.0
    %1152 = vmatpush2.msra.mxu0 0.0
    %1153 = vmatprep.subr.mxu0 0.0
    %1154 = vmatpush2.msra.mxu0 0.0
    %1155 = vmatprep.subr.mxu0 0.0
    %1156 = vmatpush2.msra.mxu0 0.0
    %1157 = vmatprep.subr.mxu0 0.0
    %1158 = vmatpush2.msra.mxu0 0.0
    %1159 = vmatprep.subr.mxu0 0.0
    %1160 = vmatpush2.msra.mxu0 0.0
    %1161 = vmatprep.subr.mxu0 0.0
    %1162 = vmatpush2.msra.mxu0 0.0
    %1163 = vmatprep.subr.mxu0 0.0
    %1164 = vmatpush2.msra.mxu0 0.0
    %1165 = vmatprep.subr.mxu0 0.0
    %1166 = vmatpush2.msra.mxu0 0.0
    %1167 = vmatprep.subr.mxu0 0.0
    %1168 = vmatpush2.msra.mxu0 0.0
    %1169 = vmatprep.subr.mxu0 0.0
    %1170 = vmatpush2.msra.mxu0 0.0
    %1171 = vmatprep.subr.mxu0 0.0
    %1172 = vmatpush2.msra.mxu0 0.0
    %1173 = vmatprep.subr.mxu0 0.0
    %1174 = vmatpush2.msra.mxu0 0.0
    %1175 = vmatprep.mubr.f32.mxu0 0.0
    %1176 = vmatmul.mubr.f32.gmra.mxu0 %v1109
    %v1177 = vpop.f32.mrf.mxu0
    %v1178 = vadd.f32 0.0, %v1177
    %v1179 = vpop.f32.mrf.mxu0
    %1180 = vdwg.mxu0
    %v1182 = vsel %vm1034, %v1028, 0
    %1184 = vmatprep.subr.mxu0 0.0
    %1185 = vmatpush1.msra.mxu0 0.0
    %1186 = vmatprep.subr.mxu0 0.0
    %1187 = vmatpush1.msra.mxu0 0.0
    %1188 = vmatprep.subr.mxu0 0.0
    %1189 = vmatpush1.msra.mxu0 0.0
    %1190 = vmatprep.subr.mxu0 0.0
    %1191 = vmatpush1.msra.mxu0 0.0
    %1192 = vmatprep.subr.mxu0 0.0
    %1193 = vmatpush1.msra.mxu0 0.0
    %1194 = vmatprep.subr.mxu0 0.0
    %1195 = vmatpush1.msra.mxu0 0.0
    %1196 = vmatprep.subr.mxu0 0.0
    %1197 = vmatpush1.msra.mxu0 0.0
    %1198 = vmatprep.subr.mxu0 0.0
    %1199 = vmatpush1.msra.mxu0 0.0
    %1200 = vmatprep.subr.mxu0 0.0
    %1201 = vmatpush1.msra.mxu0 0.0
    %1202 = vmatprep.subr.mxu0 0.0
    %1203 = vmatpush1.msra.mxu0 0.0
    %1204 = vmatprep.subr.mxu0 0.0
    %1205 = vmatpush1.msra.mxu0 0.0
    %1206 = vmatprep.subr.mxu0 0.0
    %1207 = vmatpush1.msra.mxu0 0.0
    %1208 = vmatprep.subr.mxu0 0.0
    %1209 = vmatpush1.msra.mxu0 0.0
    %1210 = vmatprep.subr.mxu0 0.0
    %1211 = vmatpush1.msra.mxu0 0.0
    %1212 = vmatprep.subr.mxu0 0.0
    %1213 = vmatpush1.msra.mxu0 0.0
    %1214 = vmatprep.subr.mxu0 0.0
    %1215 = vmatpush1.msra.mxu0 %v31
    %1216 = vmatprep.subr.mxu0 0.0
    %1217 = vmatpush2.msra.mxu0 0.0
    %1218 = vmatprep.subr.mxu0 0.0
    %1219 = vmatpush2.msra.mxu0 0.0
    %1220 = vmatprep.subr.mxu0 0.0
    %1221 = vmatpush2.msra.mxu0 0.0
    %1222 = vmatprep.subr.mxu0 0.0
    %1223 = vmatpush2.msra.mxu0 0.0
    %1224 = vmatprep.subr.mxu0 0.0
    %1225 = vmatpush2.msra.mxu0 0.0
    %1226 = vmatprep.subr.mxu0 0.0
    %1227 = vmatpush2.msra.mxu0 0.0
    %1228 = vmatprep.subr.mxu0 0.0
    %1229 = vmatpush2.msra.mxu0 0.0
    %1230 = vmatprep.subr.mxu0 0.0
    %1231 = vmatpush2.msra.mxu0 0.0
    %1232 = vmatprep.subr.mxu0 0.0
    %1233 = vmatpush2.msra.mxu0 0.0
    %1234 = vmatprep.subr.mxu0 0.0
    %1235 = vmatpush2.msra.mxu0 0.0
    %1236 = vmatprep.subr.mxu0 0.0
    %1237 = vmatpush2.msra.mxu0 0.0
    %1238 = vmatprep.subr.mxu0 0.0
    %1239 = vmatpush2.msra.mxu0 0.0
    %1240 = vmatprep.subr.mxu0 0.0
    %1241 = vmatpush2.msra.mxu0 0.0
    %1242 = vmatprep.subr.mxu0 0.0
    %1243 = vmatpush2.msra.mxu0 0.0
    %1244 = vmatprep.subr.mxu0 0.0
    %1245 = vmatpush2.msra.mxu0 0.0
    %1246 = vmatprep.subr.mxu0 0.0
    %1247 = vmatpush2.msra.mxu0 0.0
    %1248 = vmatprep.mubr.f32.mxu0 0.0
    %1249 = vmatmul.mubr.f32.gmra.mxu0 %v1182
    %v1250 = vpop.f32.mrf.mxu0
    %v1251 = vadd.f32 0.0, %v1250
    %v1252 = vpop.f32.mrf.mxu0
    %1253 = vdwg.mxu0
    %v1255 = vsel %vm1034, %v1029, 0
    %1257 = vmatprep.subr.mxu0 0.0
    %1258 = vmatpush1.msra.mxu0 0.0
    %1259 = vmatprep.subr.mxu0 0.0
    %1260 = vmatpush1.msra.mxu0 0.0
    %1261 = vmatprep.subr.mxu0 0.0
    %1262 = vmatpush1.msra.mxu0 0.0
    %1263 = vmatprep.subr.mxu0 0.0
    %1264 = vmatpush1.msra.mxu0 0.0
    %1265 = vmatprep.subr.mxu0 0.0
    %1266 = vmatpush1.msra.mxu0 0.0
    %1267 = vmatprep.subr.mxu0 0.0
    %1268 = vmatpush1.msra.mxu0 0.0
    %1269 = vmatprep.subr.mxu0 0.0
    %1270 = vmatpush1.msra.mxu0 0.0
    %1271 = vmatprep.subr.mxu0 0.0
    %1272 = vmatpush1.msra.mxu0 0.0
    %1273 = vmatprep.subr.mxu0 0.0
    %1274 = vmatpush1.msra.mxu0 0.0
    %1275 = vmatprep.subr.mxu0 0.0
    %1276 = vmatpush1.msra.mxu0 0.0
    %1277 = vmatprep.subr.mxu0 0.0
    %1278 = vmatpush1.msra.mxu0 0.0
    %1279 = vmatprep.subr.mxu0 0.0
    %1280 = vmatpush1.msra.mxu0 0.0
    %1281 = vmatprep.subr.mxu0 0.0
    %1282 = vmatpush1.msra.mxu0 0.0
    %1283 = vmatprep.subr.mxu0 0.0
    %1284 = vmatpush1.msra.mxu0 0.0
    %1285 = vmatprep.subr.mxu0 0.0
    %1286 = vmatpush1.msra.mxu0 0.0
    %1287 = vmatprep.subr.mxu0 0.0
    %1288 = vmatpush1.msra.mxu0 %v32
    %1289 = vmatprep.subr.mxu0 0.0
    %1290 = vmatpush2.msra.mxu0 0.0
    %1291 = vmatprep.subr.mxu0 0.0
    %1292 = vmatpush2.msra.mxu0 0.0
    %1293 = vmatprep.subr.mxu0 0.0
    %1294 = vmatpush2.msra.mxu0 0.0
    %1295 = vmatprep.subr.mxu0 0.0
    %1296 = vmatpush2.msra.mxu0 0.0
    %1297 = vmatprep.subr.mxu0 0.0
    %1298 = vmatpush2.msra.mxu0 0.0
    %1299 = vmatprep.subr.mxu0 0.0
    %1300 = vmatpush2.msra.mxu0 0.0
    %1301 = vmatprep.subr.mxu0 0.0
    %1302 = vmatpush2.msra.mxu0 0.0
    %1303 = vmatprep.subr.mxu0 0.0
    %1304 = vmatpush2.msra.mxu0 0.0
    %1305 = vmatprep.subr.mxu0 0.0
    %1306 = vmatpush2.msra.mxu0 0.0
    %1307 = vmatprep.subr.mxu0 0.0
    %1308 = vmatpush2.msra.mxu0 0.0
    %1309 = vmatprep.subr.mxu0 0.0
    %1310 = vmatpush2.msra.mxu0 0.0
    %1311 = vmatprep.subr.mxu0 0.0
    %1312 = vmatpush2.msra.mxu0 0.0
    %1313 = vmatprep.subr.mxu0 0.0
    %1314 = vmatpush2.msra.mxu0 0.0
    %1315 = vmatprep.subr.mxu0 0.0
    %1316 = vmatpush2.msra.mxu0 0.0
    %1317 = vmatprep.subr.mxu0 0.0
    %1318 = vmatpush2.msra.mxu0 0.0
    %1319 = vmatprep.subr.mxu0 0.0
    %1320 = vmatpush2.msra.mxu0 0.0
    %1321 = vmatprep.mubr.f32.mxu0 0.0
    %1322 = vmatmul.mubr.f32.gmra.mxu0 %v1255
    %v1323 = vpop.f32.mrf.mxu0
    %v1324 = vadd.f32 0.0, %v1323
    %v1325 = vpop.f32.mrf.mxu0
    %1326 = vdwg.mxu0
    %v1328 = vsel %vm1034, %v1030, 0
    %1330 = vmatprep.subr.mxu0 0.0
    %1331 = vmatpush1.msra.mxu0 0.0
    %1332 = vmatprep.subr.mxu0 0.0
    %1333 = vmatpush1.msra.mxu0 0.0
    %1334 = vmatprep.subr.mxu0 0.0
    %1335 = vmatpush1.msra.mxu0 0.0
    %1336 = vmatprep.subr.mxu0 0.0
    %1337 = vmatpush1.msra.mxu0 0.0
    %1338 = vmatprep.subr.mxu0 0.0
    %1339 = vmatpush1.msra.mxu0 0.0
    %1340 = vmatprep.subr.mxu0 0.0
    %1341 = vmatpush1.msra.mxu0 0.0
    %1342 = vmatprep.subr.mxu0 0.0
    %1343 = vmatpush1.msra.mxu0 0.0
    %1344 = vmatprep.subr.mxu0 0.0
    %1345 = vmatpush1.msra.mxu0 0.0
    %1346 = vmatprep.subr.mxu0 0.0
    %1347 = vmatpush1.msra.mxu0 0.0
    %1348 = vmatprep.subr.mxu0 0.0
    %1349 = vmatpush1.msra.mxu0 0.0
    %1350 = vmatprep.subr.mxu0 0.0
    %1351 = vmatpush1.msra.mxu0 0.0
    %1352 = vmatprep.subr.mxu0 0.0
    %1353 = vmatpush1.msra.mxu0 0.0
    %1354 = vmatprep.subr.mxu0 0.0
    %1355 = vmatpush1.msra.mxu0 0.0
    %1356 = vmatprep.subr.mxu0 0.0
    %1357 = vmatpush1.msra.mxu0 0.0
    %1358 = vmatprep.subr.mxu0 0.0
    %1359 = vmatpush1.msra.mxu0 0.0
    %1360 = vmatprep.subr.mxu0 0.0
    %1361 = vmatpush1.msra.mxu0 %v33
    %1362 = vmatprep.subr.mxu0 0.0
    %1363 = vmatpush2.msra.mxu0 0.0
    %1364 = vmatprep.subr.mxu0 0.0
    %1365 = vmatpush2.msra.mxu0 0.0
    %1366 = vmatprep.subr.mxu0 0.0
    %1367 = vmatpush2.msra.mxu0 0.0
    %1368 = vmatprep.subr.mxu0 0.0
    %1369 = vmatpush2.msra.mxu0 0.0
    %1370 = vmatprep.subr.mxu0 0.0
    %1371 = vmatpush2.msra.mxu0 0.0
    %1372 = vmatprep.subr.mxu0 0.0
    %1373 = vmatpush2.msra.mxu0 0.0
    %1374 = vmatprep.subr.mxu0 0.0
    %1375 = vmatpush2.msra.mxu0 0.0
    %1376 = vmatprep.subr.mxu0 0.0
    %1377 = vmatpush2.msra.mxu0 0.0
    %1378 = vmatprep.subr.mxu0 0.0
    %1379 = vmatpush2.msra.mxu0 0.0
    %1380 = vmatprep.subr.mxu0 0.0
    %1381 = vmatpush2.msra.mxu0 0.0
    %1382 = vmatprep.subr.mxu0 0.0
    %1383 = vmatpush2.msra.mxu0 0.0
    %1384 = vmatprep.subr.mxu0 0.0
    %1385 = vmatpush2.msra.mxu0 0.0
    %1386 = vmatprep.subr.mxu0 0.0
    %1387 = vmatpush2.msra.mxu0 0.0
    %1388 = vmatprep.subr.mxu0 0.0
    %1389 = vmatpush2.msra.mxu0 0.0
    %1390 = vmatprep.subr.mxu0 0.0
    %1391 = vmatpush2.msra.mxu0 0.0
    %1392 = vmatprep.subr.mxu0 0.0
    %1393 = vmatpush2.msra.mxu0 0.0
    %1394 = vmatprep.mubr.f32.mxu0 0.0
    %1395 = vmatmul.mubr.f32.gmra.mxu0 %v1328
    %v1396 = vpop.f32.mrf.mxu0
    %v1397 = vadd.f32 0.0, %v1396
    %v1398 = vpop.f32.mrf.mxu0
    %1399 = vdwg.mxu0
    %v1401 = vsel %vm1034, %v1031, 0
    %1403 = vmatprep.subr.mxu0 0.0
    %1404 = vmatpush1.msra.mxu0 0.0
    %1405 = vmatprep.subr.mxu0 0.0
    %1406 = vmatpush1.msra.mxu0 0.0
    %1407 = vmatprep.subr.mxu0 0.0
    %1408 = vmatpush1.msra.mxu0 0.0
    %1409 = vmatprep.subr.mxu0 0.0
    %1410 = vmatpush1.msra.mxu0 0.0
    %1411 = vmatprep.subr.mxu0 0.0
    %1412 = vmatpush1.msra.mxu0 0.0
    %1413 = vmatprep.subr.mxu0 0.0
    %1414 = vmatpush1.msra.mxu0 0.0
    %1415 = vmatprep.subr.mxu0 0.0
    %1416 = vmatpush1.msra.mxu0 0.0
    %1417 = vmatprep.subr.mxu0 0.0
    %1418 = vmatpush1.msra.mxu0 0.0
    %1419 = vmatprep.subr.mxu0 0.0
    %1420 = vmatpush1.msra.mxu0 0.0
    %1421 = vmatprep.subr.mxu0 0.0
    %1422 = vmatpush1.msra.mxu0 0.0
    %1423 = vmatprep.subr.mxu0 0.0
    %1424 = vmatpush1.msra.mxu0 0.0
    %1425 = vmatprep.subr.mxu0 0.0
    %1426 = vmatpush1.msra.mxu0 0.0
    %1427 = vmatprep.subr.mxu0 0.0
    %1428 = vmatpush1.msra.mxu0 0.0
    %1429 = vmatprep.subr.mxu0 0.0
    %1430 = vmatpush1.msra.mxu0 0.0
    %1431 = vmatprep.subr.mxu0 0.0
    %1432 = vmatpush1.msra.mxu0 0.0
    %1433 = vmatprep.subr.mxu0 0.0
    %1434 = vmatpush1.msra.mxu0 %v34
    %1435 = vmatprep.subr.mxu0 0.0
    %1436 = vmatpush2.msra.mxu0 0.0
    %1437 = vmatprep.subr.mxu0 0.0
    %1438 = vmatpush2.msra.mxu0 0.0
    %1439 = vmatprep.subr.mxu0 0.0
    %1440 = vmatpush2.msra.mxu0 0.0
    %1441 = vmatprep.subr.mxu0 0.0
    %1442 = vmatpush2.msra.mxu0 0.0
    %1443 = vmatprep.subr.mxu0 0.0
    %1444 = vmatpush2.msra.mxu0 0.0
    %1445 = vmatprep.subr.mxu0 0.0
    %1446 = vmatpush2.msra.mxu0 0.0
    %1447 = vmatprep.subr.mxu0 0.0
    %1448 = vmatpush2.msra.mxu0 0.0
    %1449 = vmatprep.subr.mxu0 0.0
    %1450 = vmatpush2.msra.mxu0 0.0
    %1451 = vmatprep.subr.mxu0 0.0
    %1452 = vmatpush2.msra.mxu0 0.0
    %1453 = vmatprep.subr.mxu0 0.0
    %1454 = vmatpush2.msra.mxu0 0.0
    %1455 = vmatprep.subr.mxu0 0.0
    %1456 = vmatpush2.msra.mxu0 0.0
    %1457 = vmatprep.subr.mxu0 0.0
    %1458 = vmatpush2.msra.mxu0 0.0
    %1459 = vmatprep.subr.mxu0 0.0
    %1460 = vmatpush2.msra.mxu0 0.0
    %1461 = vmatprep.subr.mxu0 0.0
    %1462 = vmatpush2.msra.mxu0 0.0
    %1463 = vmatprep.subr.mxu0 0.0
    %1464 = vmatpush2.msra.mxu0 0.0
    %1465 = vmatprep.subr.mxu0 0.0
    %1466 = vmatpush2.msra.mxu0 0.0
    %1467 = vmatprep.mubr.f32.mxu0 0.0
    %1468 = vmatmul.mubr.f32.gmra.mxu0 %v1401
    %v1469 = vpop.f32.mrf.mxu0
    %v1470 = vadd.f32 0.0, %v1469
    %v1471 = vpop.f32.mrf.mxu0
    %1472 = vdwg.mxu0
    %v1474 = vsel %vm1034, %v1032, 0
    %1476 = vmatprep.subr.mxu0 0.0
    %1477 = vmatpush1.msra.mxu0 0.0
    %1478 = vmatprep.subr.mxu0 0.0
    %1479 = vmatpush1.msra.mxu0 0.0
    %1480 = vmatprep.subr.mxu0 0.0
    %1481 = vmatpush1.msra.mxu0 0.0
    %1482 = vmatprep.subr.mxu0 0.0
    %1483 = vmatpush1.msra.mxu0 0.0
    %1484 = vmatprep.subr.mxu0 0.0
    %1485 = vmatpush1.msra.mxu0 0.0
    %1486 = vmatprep.subr.mxu0 0.0
    %1487 = vmatpush1.msra.mxu0 0.0
    %1488 = vmatprep.subr.mxu0 0.0
    %1489 = vmatpush1.msra.mxu0 0.0
    %1490 = vmatprep.subr.mxu0 0.0
    %1491 = vmatpush1.msra.mxu0 0.0
    %1492 = vmatprep.subr.mxu0 0.0
    %1493 = vmatpush1.msra.mxu0 0.0
    %1494 = vmatprep.subr.mxu0 0.0
    %1495 = vmatpush1.msra.mxu0 0.0
    %1496 = vmatprep.subr.mxu0 0.0
    %1497 = vmatpush1.msra.mxu0 0.0
    %1498 = vmatprep.subr.mxu0 0.0
    %1499 = vmatpush1.msra.mxu0 0.0
    %1500 = vmatprep.subr.mxu0 0.0
    %1501 = vmatpush1.msra.mxu0 0.0
    %1502 = vmatprep.subr.mxu0 0.0
    %1503 = vmatpush1.msra.mxu0 0.0
    %1504 = vmatprep.subr.mxu0 0.0
    %1505 = vmatpush1.msra.mxu0 0.0
    %1506 = vmatprep.subr.mxu0 0.0
    %1507 = vmatpush1.msra.mxu0 %v35
    %1508 = vmatprep.subr.mxu0 0.0
    %1509 = vmatpush2.msra.mxu0 0.0
    %1510 = vmatprep.subr.mxu0 0.0
    %1511 = vmatpush2.msra.mxu0 0.0
    %1512 = vmatprep.subr.mxu0 0.0
    %1513 = vmatpush2.msra.mxu0 0.0
    %1514 = vmatprep.subr.mxu0 0.0
    %1515 = vmatpush2.msra.mxu0 0.0
    %1516 = vmatprep.subr.mxu0 0.0
    %1517 = vmatpush2.msra.mxu0 0.0
    %1518 = vmatprep.subr.mxu0 0.0
    %1519 = vmatpush2.msra.mxu0 0.0
    %1520 = vmatprep.subr.mxu0 0.0
    %1521 = vmatpush2.msra.mxu0 0.0
    %1522 = vmatprep.subr.mxu0 0.0
    %1523 = vmatpush2.msra.mxu0 0.0
    %1524 = vmatprep.subr.mxu0 0.0
    %1525 = vmatpush2.msra.mxu0 0.0
    %1526 = vmatprep.subr.mxu0 0.0
    %1527 = vmatpush2.msra.mxu0 0.0
    %1528 = vmatprep.subr.mxu0 0.0
    %1529 = vmatpush2.msra.mxu0 0.0
    %1530 = vmatprep.subr.mxu0 0.0
    %1531 = vmatpush2.msra.mxu0 0.0
    %1532 = vmatprep.subr.mxu0 0.0
    %1533 = vmatpush2.msra.mxu0 0.0
    %1534 = vmatprep.subr.mxu0 0.0
    %1535 = vmatpush2.msra.mxu0 0.0
    %1536 = vmatprep.subr.mxu0 0.0
    %1537 = vmatpush2.msra.mxu0 0.0
    %1538 = vmatprep.subr.mxu0 0.0
    %1539 = vmatpush2.msra.mxu0 0.0
    %1540 = vmatprep.mubr.f32.mxu0 0.0
    %1541 = vmatmul.mubr.f32.gmra.mxu0 %v1474
    %v1542 = vpop.f32.mrf.mxu0
    %v1543 = vadd.f32 0.0, %v1542
    %v1544 = vpop.f32.mrf.mxu0
    %1545 = vdwg.mxu0
    %v1547 = vsel %vm1034, %v1033, 0
    %1549 = vmatprep.subr.mxu0 0.0
    %1550 = vmatpush1.msra.mxu0 0.0
    %1551 = vmatprep.subr.mxu0 0.0
    %1552 = vmatpush1.msra.mxu0 0.0
    %1553 = vmatprep.subr.mxu0 0.0
    %1554 = vmatpush1.msra.mxu0 0.0
    %1555 = vmatprep.subr.mxu0 0.0
    %1556 = vmatpush1.msra.mxu0 0.0
    %1557 = vmatprep.subr.mxu0 0.0
    %1558 = vmatpush1.msra.mxu0 0.0
    %1559 = vmatprep.subr.mxu0 0.0
    %1560 = vmatpush1.msra.mxu0 0.0
    %1561 = vmatprep.subr.mxu0 0.0
    %1562 = vmatpush1.msra.mxu0 0.0
    %1563 = vmatprep.subr.mxu0 0.0
    %1564 = vmatpush1.msra.mxu0 0.0
    %1565 = vmatprep.subr.mxu0 0.0
    %1566 = vmatpush1.msra.mxu0 0.0
    %1567 = vmatprep.subr.mxu0 0.0
    %1568 = vmatpush1.msra.mxu0 0.0
    %1569 = vmatprep.subr.mxu0 0.0
    %1570 = vmatpush1.msra.mxu0 0.0
    %1571 = vmatprep.subr.mxu0 0.0
    %1572 = vmatpush1.msra.mxu0 0.0
    %1573 = vmatprep.subr.mxu0 0.0
    %1574 = vmatpush1.msra.mxu0 0.0
    %1575 = vmatprep.subr.mxu0 0.0
    %1576 = vmatpush1.msra.mxu0 0.0
    %1577 = vmatprep.subr.mxu0 0.0
    %1578 = vmatpush1.msra.mxu0 0.0
    %1579 = vmatprep.subr.mxu0 0.0
    %1580 = vmatpush1.msra.mxu0 %v36
    %1581 = vmatprep.subr.mxu0 0.0
    %1582 = vmatpush2.msra.mxu0 0.0
    %1583 = vmatprep.subr.mxu0 0.0
    %1584 = vmatpush2.msra.mxu0 0.0
    %1585 = vmatprep.subr.mxu0 0.0
    %1586 = vmatpush2.msra.mxu0 0.0
    %1587 = vmatprep.subr.mxu0 0.0
    %1588 = vmatpush2.msra.mxu0 0.0
    %1589 = vmatprep.subr.mxu0 0.0
    %1590 = vmatpush2.msra.mxu0 0.0
    %1591 = vmatprep.subr.mxu0 0.0
    %1592 = vmatpush2.msra.mxu0 0.0
    %1593 = vmatprep.subr.mxu0 0.0
    %1594 = vmatpush2.msra.mxu0 0.0
    %1595 = vmatprep.subr.mxu0 0.0
    %1596 = vmatpush2.msra.mxu0 0.0
    %1597 = vmatprep.subr.mxu0 0.0
    %1598 = vmatpush2.msra.mxu0 0.0
    %1599 = vmatprep.subr.mxu0 0.0
    %1600 = vmatpush2.msra.mxu0 0.0
    %1601 = vmatprep.subr.mxu0 0.0
    %1602 = vmatpush2.msra.mxu0 0.0
    %1603 = vmatprep.subr.mxu0 0.0
    %1604 = vmatpush2.msra.mxu0 0.0
    %1605 = vmatprep.subr.mxu0 0.0
    %1606 = vmatpush2.msra.mxu0 0.0
    %1607 = vmatprep.subr.mxu0 0.0
    %1608 = vmatpush2.msra.mxu0 0.0
    %1609 = vmatprep.subr.mxu0 0.0
    %1610 = vmatpush2.msra.mxu0 0.0
    %1611 = vmatprep.subr.mxu0 0.0
    %1612 = vmatpush2.msra.mxu0 0.0
    %1613 = vmatprep.mubr.f32.mxu0 0.0
    %1614 = vmatmul.mubr.f32.gmra.mxu0 %v1547
    %v1615 = vpop.f32.mrf.mxu0
    %v1616 = vadd.f32 0.0, %v1615
    %v1617 = vpop.f32.mrf.mxu0
    %1618 = vdwg.mxu0
    %v1619 = vlaneseq
    %v1620 = vshrl.u32 %v1619, 7
    %v1621 = vsub.s32 0, %v1620
    %v1622 = vrot.slane %v54, %v1621
    %v1624 = vsel %vm140, %v1105, 0
    %v1627 = vsel %vm140, %v1178, 0
    %v1630 = vsel %vm140, %v1251, 0
    %v1633 = vsel %vm140, %v1324, 0
    %v1636 = vsel %vm140, %v1397, 0
    %v1639 = vsel %vm140, %v1470, 0
    %v1642 = vsel %vm140, %v1543, 0
    %v1645 = vsel %vm140, %v1616, 0
    %vm1647 = vcmask 1045504
    %v1649 = vsel %vm1647, %v53, 0
    %1651 = vmatprep.subr.mxu0 0.0
    %1652 = vmatpush1.msra.mxu0 0.0
    %1653 = vmatprep.subr.mxu0 0.0
    %1654 = vmatpush1.msra.mxu0 0.0
    %1655 = vmatprep.subr.mxu0 0.0
    %1656 = vmatpush1.msra.mxu0 0.0
    %1657 = vmatprep.subr.mxu0 0.0
    %1658 = vmatpush1.msra.mxu0 0.0
    %1659 = vmatprep.subr.mxu0 0.0
    %1660 = vmatpush1.msra.mxu0 0.0
    %1661 = vmatprep.subr.mxu0 0.0
    %1662 = vmatpush1.msra.mxu0 0.0
    %1663 = vmatprep.subr.mxu0 0.0
    %1664 = vmatpush1.msra.mxu0 0.0
    %1665 = vmatprep.subr.mxu0 0.0
    %1666 = vmatpush1.msra.mxu0 0.0
    %1667 = vmatprep.subr.mxu0 0.0
    %1668 = vmatpush1.msra.mxu0 0.0
    %1669 = vmatprep.subr.mxu0 0.0
    %1670 = vmatpush1.msra.mxu0 0.0
    %1671 = vmatprep.subr.mxu0 0.0
    %1672 = vmatpush1.msra.mxu0 0.0
    %1673 = vmatprep.subr.mxu0 0.0
    %1674 = vmatpush1.msra.mxu0 0.0
    %1675 = vmatprep.subr.mxu0 0.0
    %1676 = vmatpush1.msra.mxu0 0.0
    %1677 = vmatprep.subr.mxu0 0.0
    %1678 = vmatpush1.msra.mxu0 0.0
    %1679 = vmatprep.subr.mxu0 0.0
    %1680 = vmatpush1.msra.mxu0 0.0
    %1681 = vmatprep.subr.mxu0 0.0
    %1682 = vmatpush1.msra.mxu0 %v1649
    %1683 = vmatprep.subr.mxu0 0.0
    %1684 = vmatpush2.msra.mxu0 0.0
    %1685 = vmatprep.subr.mxu0 0.0
    %1686 = vmatpush2.msra.mxu0 0.0
    %1687 = vmatprep.subr.mxu0 0.0
    %1688 = vmatpush2.msra.mxu0 0.0
    %1689 = vmatprep.subr.mxu0 0.0
    %1690 = vmatpush2.msra.mxu0 0.0
    %1691 = vmatprep.subr.mxu0 0.0
    %1692 = vmatpush2.msra.mxu0 0.0
    %1693 = vmatprep.subr.mxu0 0.0
    %1694 = vmatpush2.msra.mxu0 0.0
    %1695 = vmatprep.subr.mxu0 0.0
    %1696 = vmatpush2.msra.mxu0 0.0
    %1697 = vmatprep.subr.mxu0 0.0
    %1698 = vmatpush2.msra.mxu0 0.0
    %1699 = vmatprep.subr.mxu0 0.0
    %1700 = vmatpush2.msra.mxu0 0.0
    %1701 = vmatprep.subr.mxu0 0.0
    %1702 = vmatpush2.msra.mxu0 0.0
    %1703 = vmatprep.subr.mxu0 0.0
    %1704 = vmatpush2.msra.mxu0 0.0
    %1705 = vmatprep.subr.mxu0 0.0
    %1706 = vmatpush2.msra.mxu0 0.0
    %1707 = vmatprep.subr.mxu0 0.0
    %1708 = vmatpush2.msra.mxu0 0.0
    %1709 = vmatprep.subr.mxu0 0.0
    %1710 = vmatpush2.msra.mxu0 0.0
    %1711 = vmatprep.subr.mxu0 0.0
    %1712 = vmatpush2.msra.mxu0 0.0
    %1713 = vmatprep.subr.mxu0 0.0
    %1714 = vmatpush2.msra.mxu0 0.0
    %1715 = vmatprep.mubr.f32.mxu0 0.0
    %1716 = vmatmul.mubr.f32.gmra.mxu0 %v1624
    %v1717 = vpop.f32.mrf.mxu0
    %v1718 = vadd.f32 %v1622, %v1717
    %v1719 = vpop.f32.mrf.mxu0
    %1720 = vmatprep.mubr.f32.mxu0 0.0
    %1721 = vmatmul.mubr.f32.gmra.mxu0 %v1627
    %v1722 = vpop.f32.mrf.mxu0
    %v1723 = vadd.f32 %v1622, %v1722
    %v1724 = vpop.f32.mrf.mxu0
    %1725 = vmatprep.mubr.f32.mxu0 0.0
    %1726 = vmatmul.mubr.f32.gmra.mxu0 %v1630
    %v1727 = vpop.f32.mrf.mxu0
    %v1728 = vadd.f32 %v1622, %v1727
    %v1729 = vpop.f32.mrf.mxu0
    %1730 = vmatprep.mubr.f32.mxu0 0.0
    %1731 = vmatmul.mubr.f32.gmra.mxu0 %v1633
    %v1732 = vpop.f32.mrf.mxu0
    %v1733 = vadd.f32 %v1622, %v1732
    %v1734 = vpop.f32.mrf.mxu0
    %1735 = vmatprep.mubr.f32.mxu0 0.0
    %1736 = vmatmul.mubr.f32.gmra.mxu0 %v1636
    %v1737 = vpop.f32.mrf.mxu0
    %v1738 = vadd.f32 %v1622, %v1737
    %v1739 = vpop.f32.mrf.mxu0
    %1740 = vmatprep.mubr.f32.mxu0 0.0
    %1741 = vmatmul.mubr.f32.gmra.mxu0 %v1639
    %v1742 = vpop.f32.mrf.mxu0
    %v1743 = vadd.f32 %v1622, %v1742
    %v1744 = vpop.f32.mrf.mxu0
    %1745 = vmatprep.mubr.f32.mxu0 0.0
    %1746 = vmatmul.mubr.f32.gmra.mxu0 %v1642
    %v1747 = vpop.f32.mrf.mxu0
    %v1748 = vadd.f32 %v1622, %v1747
    %v1749 = vpop.f32.mrf.mxu0
    %1750 = vmatprep.mubr.f32.mxu0 0.0
    %1751 = vmatmul.mubr.f32.gmra.mxu0 %v1645
    %v1752 = vpop.f32.mrf.mxu0
    %v1753 = vadd.f32 %v1622, %v1752
    %v1754 = vpop.f32.mrf.mxu0
    %1755 = vdwg.mxu0
    %v1756 = vmax.f32 %v1718, 0.0
    %v1757 = vmax.f32 %v1723, 0.0
    %v1758 = vmax.f32 %v1728, 0.0
    %v1759 = vmax.f32 %v1733, 0.0
    %v1760 = vmax.f32 %v1738, 0.0
    %v1761 = vmax.f32 %v1743, 0.0
    %v1762 = vmax.f32 %v1748, 0.0
    %v1763 = vmax.f32 %v1753, 0.0
    %v1772 = vadd.s32 %v182, 4294967276
    %v1773 = vlaneseq
    %v1774 = vshrl.u32 %v1773, 7
    %v1775 = vsub.s32 %v1772, %v1774
    %v1776 = vrot.slane %v143, %v1775
    %v1777 = vlaneseq
    %v1778 = vshrl.u32 %v1777, 7
    %v1779 = vsub.s32 %v1772, %v1778
    %v1780 = vrot.slane %v146, %v1779
    %v1781 = vlaneseq
    %v1782 = vshrl.u32 %v1781, 7
    %v1783 = vsub.s32 %v1772, %v1782
    %v1784 = vrot.slane %v149, %v1783
    %v1785 = vlaneseq
    %v1786 = vshrl.u32 %v1785, 7
    %v1787 = vsub.s32 %v1772, %v1786
    %v1788 = vrot.slane %v152, %v1787
    %v1789 = vlaneseq
    %v1790 = vshrl.u32 %v1789, 7
    %v1791 = vsub.s32 %v1772, %v1790
    %v1792 = vrot.slane %v155, %v1791
    %v1793 = vlaneseq
    %v1794 = vshrl.u32 %v1793, 7
    %v1795 = vsub.s32 %v1772, %v1794
    %v1796 = vrot.slane %v158, %v1795
    %v1797 = vlaneseq
    %v1798 = vshrl.u32 %v1797, 7
    %v1799 = vsub.s32 %v1772, %v1798
    %v1800 = vrot.slane %v161, %v1799
    %v1801 = vlaneseq
    %v1802 = vshrl.u32 %v1801, 7
    %v1803 = vsub.s32 %v1772, %v1802
    %v1804 = vrot.slane %v164, %v1803
    %v1805 = vsel %vm259, %v1776, %v1776
    %v1806 = vsel %vm261, %v1776, %v1805
    %v1807 = vsel %vm263, %v1776, %v1806
    %v1808 = vsel %vm265, %v1776, %v1807
    %v1809 = vsel %vm267, %v1776, %v1808
    %v1810 = vsel %vm269, %v1776, %v1809
    %v1811 = vsel %vm259, %v1780, %v1780
    %v1812 = vsel %vm261, %v1780, %v1811
    %v1813 = vsel %vm263, %v1780, %v1812
    %v1814 = vsel %vm265, %v1780, %v1813
    %v1815 = vsel %vm267, %v1780, %v1814
    %v1816 = vsel %vm269, %v1780, %v1815
    %v1817 = vsel %vm259, %v1784, %v1784
    %v1818 = vsel %vm261, %v1784, %v1817
    %v1819 = vsel %vm263, %v1784, %v1818
    %v1820 = vsel %vm265, %v1784, %v1819
    %v1821 = vsel %vm267, %v1784, %v1820
    %v1822 = vsel %vm269, %v1784, %v1821
    %v1823 = vsel %vm259, %v1788, %v1788
    %v1824 = vsel %vm261, %v1788, %v1823
    %v1825 = vsel %vm263, %v1788, %v1824
    %v1826 = vsel %vm265, %v1788, %v1825
    %v1827 = vsel %vm267, %v1788, %v1826
    %v1828 = vsel %vm269, %v1788, %v1827
    %v1829 = vsel %vm259, %v1792, %v1792
    %v1830 = vsel %vm261, %v1792, %v1829
    %v1831 = vsel %vm263, %v1792, %v1830
    %v1832 = vsel %vm265, %v1792, %v1831
    %v1833 = vsel %vm267, %v1792, %v1832
    %v1834 = vsel %vm269, %v1792, %v1833
    %v1835 = vsel %vm259, %v1796, %v1796
    %v1836 = vsel %vm261, %v1796, %v1835
    %v1837 = vsel %vm263, %v1796, %v1836
    %v1838 = vsel %vm265, %v1796, %v1837
    %v1839 = vsel %vm267, %v1796, %v1838
    %v1840 = vsel %vm269, %v1796, %v1839
    %v1841 = vsel %vm259, %v1800, %v1800
    %v1842 = vsel %vm261, %v1800, %v1841
    %v1843 = vsel %vm263, %v1800, %v1842
    %v1844 = vsel %vm265, %v1800, %v1843
    %v1845 = vsel %vm267, %v1800, %v1844
    %v1846 = vsel %vm269, %v1800, %v1845
    %v1847 = vsel %vm259, %v1804, %v1804
    %v1848 = vsel %vm261, %v1804, %v1847
    %v1849 = vsel %vm263, %v1804, %v1848
    %v1850 = vsel %vm265, %v1804, %v1849
    %v1851 = vsel %vm267, %v1804, %v1850
    %v1852 = vsel %vm269, %v1804, %v1851
    %v1861 = vmul.f32 %v37, %v1810
    %v1862 = vmul.f32 %v38, %v1810
    %v1863 = vmul.f32 %v39, %v1816
    %v1864 = vmul.f32 %v40, %v1816
    %v1865 = vmul.f32 %v41, %v1822
    %v1866 = vmul.f32 %v42, %v1822
    %v1867 = vmul.f32 %v43, %v1828
    %v1868 = vmul.f32 %v44, %v1828
    %v1869 = vmul.f32 %v45, %v1834
    %v1870 = vmul.f32 %v46, %v1834
    %v1871 = vmul.f32 %v47, %v1840
    %v1872 = vmul.f32 %v48, %v1840
    %v1873 = vmul.f32 %v49, %v1846
    %v1874 = vmul.f32 %v50, %v1846
    %v1875 = vmul.f32 %v51, %v1852
    %v1876 = vmul.f32 %v52, %v1852
    %1879 = vrot.lane.b32.xlu0 %v1861, 108
    %v1880 = vpop.permute.xlu0 %1879
    %1881 = vrot.lane.b32.xlu0 %v1862, 108
    %v1882 = vpop.permute.xlu0 %1881
    %1883 = vrot.lane.b32.xlu0 %v29, 114
    %v1884 = vpop.permute.xlu0 %1883
    %v1886 = vsel %vm1034, %v1880, 0
    %v1888 = vsel %vm1034, %v1882, 0
    %1890 = vmatprep.subr.mxu0 0.0
    %1891 = vmatpush1.msra.mxu0 0.0
    %1892 = vmatprep.subr.mxu0 0.0
    %1893 = vmatpush1.msra.mxu0 0.0
    %1894 = vmatprep.subr.mxu0 0.0
    %1895 = vmatpush1.msra.mxu0 0.0
    %1896 = vmatprep.subr.mxu0 0.0
    %1897 = vmatpush1.msra.mxu0 0.0
    %1898 = vmatprep.subr.mxu0 0.0
    %1899 = vmatpush1.msra.mxu0 0.0
    %1900 = vmatprep.subr.mxu0 0.0
    %1901 = vmatpush1.msra.mxu0 0.0
    %1902 = vmatprep.subr.mxu0 0.0
    %1903 = vmatpush1.msra.mxu0 0.0
    %1904 = vmatprep.subr.mxu0 0.0
    %1905 = vmatpush1.msra.mxu0 0.0
    %1906 = vmatprep.subr.mxu0 0.0
    %1907 = vmatpush1.msra.mxu0 0.0
    %1908 = vmatprep.subr.mxu0 0.0
    %1909 = vmatpush1.msra.mxu0 0.0
    %1910 = vmatprep.subr.mxu0 0.0
    %1911 = vmatpush1.msra.mxu0 0.0
    %1912 = vmatprep.subr.mxu0 0.0
    %1913 = vmatpush1.msra.mxu0 0.0
    %1914 = vmatprep.subr.mxu0 0.0
    %1915 = vmatpush1.msra.mxu0 0.0
    %1916 = vmatprep.subr.mxu0 0.0
    %1917 = vmatpush1.msra.mxu0 0.0
    %1918 = vmatprep.subr.mxu0 0.0
    %1919 = vmatpush1.msra.mxu0 0.0
    %1920 = vmatprep.subr.mxu0 0.0
    %1921 = vmatpush1.msra.mxu0 %v1884
    %1922 = vmatprep.subr.mxu0 0.0
    %1923 = vmatpush2.msra.mxu0 0.0
    %1924 = vmatprep.subr.mxu0 0.0
    %1925 = vmatpush2.msra.mxu0 0.0
    %1926 = vmatprep.subr.mxu0 0.0
    %1927 = vmatpush2.msra.mxu0 0.0
    %1928 = vmatprep.subr.mxu0 0.0
    %1929 = vmatpush2.msra.mxu0 0.0
    %1930 = vmatprep.subr.mxu0 0.0
    %1931 = vmatpush2.msra.mxu0 0.0
    %1932 = vmatprep.subr.mxu0 0.0
    %1933 = vmatpush2.msra.mxu0 0.0
    %1934 = vmatprep.subr.mxu0 0.0
    %1935 = vmatpush2.msra.mxu0 0.0
    %1936 = vmatprep.subr.mxu0 0.0
    %1937 = vmatpush2.msra.mxu0 0.0
    %1938 = vmatprep.subr.mxu0 0.0
    %1939 = vmatpush2.msra.mxu0 0.0
    %1940 = vmatprep.subr.mxu0 0.0
    %1941 = vmatpush2.msra.mxu0 0.0
    %1942 = vmatprep.subr.mxu0 0.0
    %1943 = vmatpush2.msra.mxu0 0.0
    %1944 = vmatprep.subr.mxu0 0.0
    %1945 = vmatpush2.msra.mxu0 0.0
    %1946 = vmatprep.subr.mxu0 0.0
    %1947 = vmatpush2.msra.mxu0 0.0
    %1948 = vmatprep.subr.mxu0 0.0
    %1949 = vmatpush2.msra.mxu0 0.0
    %1950 = vmatprep.subr.mxu0 0.0
    %1951 = vmatpush2.msra.mxu0 0.0
    %1952 = vmatprep.subr.mxu0 0.0
    %1953 = vmatpush2.msra.mxu0 0.0
    %1954 = vmatprep.mubr.f32.mxu0 0.0
    %1955 = vmatmul.mubr.f32.gmra.mxu0 %v1886
    %v1956 = vpop.f32.mrf.mxu0
    %v1957 = vadd.f32 0.0, %v1956
    %v1958 = vpop.f32.mrf.mxu0
    %1959 = vmatprep.mubr.f32.mxu0 0.0
    %1960 = vmatmul.mubr.f32.gmra.mxu0 %v1888
    %v1961 = vpop.f32.mrf.mxu0
    %v1962 = vadd.f32 0.0, %v1961
    %v1963 = vpop.f32.mrf.mxu0
    %1964 = vdwg.mxu0
    %1967 = vrot.lane.b32.xlu0 %v1863, 108
    %v1968 = vpop.permute.xlu0 %1967
    %1969 = vrot.lane.b32.xlu0 %v1864, 108
    %v1970 = vpop.permute.xlu0 %1969
    %1971 = vrot.lane.b32.xlu0 %v30, 114
    %v1972 = vpop.permute.xlu0 %1971
    %v1974 = vsel %vm1034, %v1968, 0
    %v1976 = vsel %vm1034, %v1970, 0
    %1978 = vmatprep.subr.mxu0 0.0
    %1979 = vmatpush1.msra.mxu0 0.0
    %1980 = vmatprep.subr.mxu0 0.0
    %1981 = vmatpush1.msra.mxu0 0.0
    %1982 = vmatprep.subr.mxu0 0.0
    %1983 = vmatpush1.msra.mxu0 0.0
    %1984 = vmatprep.subr.mxu0 0.0
    %1985 = vmatpush1.msra.mxu0 0.0
    %1986 = vmatprep.subr.mxu0 0.0
    %1987 = vmatpush1.msra.mxu0 0.0
    %1988 = vmatprep.subr.mxu0 0.0
    %1989 = vmatpush1.msra.mxu0 0.0
    %1990 = vmatprep.subr.mxu0 0.0
    %1991 = vmatpush1.msra.mxu0 0.0
    %1992 = vmatprep.subr.mxu0 0.0
    %1993 = vmatpush1.msra.mxu0 0.0
    %1994 = vmatprep.subr.mxu0 0.0
    %1995 = vmatpush1.msra.mxu0 0.0
    %1996 = vmatprep.subr.mxu0 0.0
    %1997 = vmatpush1.msra.mxu0 0.0
    %1998 = vmatprep.subr.mxu0 0.0
    %1999 = vmatpush1.msra.mxu0 0.0
    %2000 = vmatprep.subr.mxu0 0.0
    %2001 = vmatpush1.msra.mxu0 0.0
    %2002 = vmatprep.subr.mxu0 0.0
    %2003 = vmatpush1.msra.mxu0 0.0
    %2004 = vmatprep.subr.mxu0 0.0
    %2005 = vmatpush1.msra.mxu0 0.0
    %2006 = vmatprep.subr.mxu0 0.0
    %2007 = vmatpush1.msra.mxu0 0.0
    %2008 = vmatprep.subr.mxu0 0.0
    %2009 = vmatpush1.msra.mxu0 %v1972
    %2010 = vmatprep.subr.mxu0 0.0
    %2011 = vmatpush2.msra.mxu0 0.0
    %2012 = vmatprep.subr.mxu0 0.0
    %2013 = vmatpush2.msra.mxu0 0.0
    %2014 = vmatprep.subr.mxu0 0.0
    %2015 = vmatpush2.msra.mxu0 0.0
    %2016 = vmatprep.subr.mxu0 0.0
    %2017 = vmatpush2.msra.mxu0 0.0
    %2018 = vmatprep.subr.mxu0 0.0
    %2019 = vmatpush2.msra.mxu0 0.0
    %2020 = vmatprep.subr.mxu0 0.0
    %2021 = vmatpush2.msra.mxu0 0.0
    %2022 = vmatprep.subr.mxu0 0.0
    %2023 = vmatpush2.msra.mxu0 0.0
    %2024 = vmatprep.subr.mxu0 0.0
    %2025 = vmatpush2.msra.mxu0 0.0
    %2026 = vmatprep.subr.mxu0 0.0
    %2027 = vmatpush2.msra.mxu0 0.0
    %2028 = vmatprep.subr.mxu0 0.0
    %2029 = vmatpush2.msra.mxu0 0.0
    %2030 = vmatprep.subr.mxu0 0.0
    %2031 = vmatpush2.msra.mxu0 0.0
    %2032 = vmatprep.subr.mxu0 0.0
    %2033 = vmatpush2.msra.mxu0 0.0
    %2034 = vmatprep.subr.mxu0 0.0
    %2035 = vmatpush2.msra.mxu0 0.0
    %2036 = vmatprep.subr.mxu0 0.0
    %2037 = vmatpush2.msra.mxu0 0.0
    %2038 = vmatprep.subr.mxu0 0.0
    %2039 = vmatpush2.msra.mxu0 0.0
    %2040 = vmatprep.subr.mxu0 0.0
    %2041 = vmatpush2.msra.mxu0 0.0
    %2042 = vmatprep.mubr.f32.mxu0 0.0
    %2043 = vmatmul.mubr.f32.gmra.mxu0 %v1974
    %v2044 = vpop.f32.mrf.mxu0
    %v2045 = vadd.f32 0.0, %v2044
    %v2046 = vpop.f32.mrf.mxu0
    %2047 = vmatprep.mubr.f32.mxu0 0.0
    %2048 = vmatmul.mubr.f32.gmra.mxu0 %v1976
    %v2049 = vpop.f32.mrf.mxu0
    %v2050 = vadd.f32 0.0, %v2049
    %v2051 = vpop.f32.mrf.mxu0
    %2052 = vdwg.mxu0
    %2055 = vrot.lane.b32.xlu0 %v1865, 108
    %v2056 = vpop.permute.xlu0 %2055
    %2057 = vrot.lane.b32.xlu0 %v1866, 108
    %v2058 = vpop.permute.xlu0 %2057
    %2059 = vrot.lane.b32.xlu0 %v31, 114
    %v2060 = vpop.permute.xlu0 %2059
    %v2062 = vsel %vm1034, %v2056, 0
    %v2064 = vsel %vm1034, %v2058, 0
    %2066 = vmatprep.subr.mxu0 0.0
    %2067 = vmatpush1.msra.mxu0 0.0
    %2068 = vmatprep.subr.mxu0 0.0
    %2069 = vmatpush1.msra.mxu0 0.0
    %2070 = vmatprep.subr.mxu0 0.0
    %2071 = vmatpush1.msra.mxu0 0.0
    %2072 = vmatprep.subr.mxu0 0.0
    %2073 = vmatpush1.msra.mxu0 0.0
    %2074 = vmatprep.subr.mxu0 0.0
    %2075 = vmatpush1.msra.mxu0 0.0
    %2076 = vmatprep.subr.mxu0 0.0
    %2077 = vmatpush1.msra.mxu0 0.0
    %2078 = vmatprep.subr.mxu0 0.0
    %2079 = vmatpush1.msra.mxu0 0.0
    %2080 = vmatprep.subr.mxu0 0.0
    %2081 = vmatpush1.msra.mxu0 0.0
    %2082 = vmatprep.subr.mxu0 0.0
    %2083 = vmatpush1.msra.mxu0 0.0
    %2084 = vmatprep.subr.mxu0 0.0
    %2085 = vmatpush1.msra.mxu0 0.0
    %2086 = vmatprep.subr.mxu0 0.0
    %2087 = vmatpush1.msra.mxu0 0.0
    %2088 = vmatprep.subr.mxu0 0.0
    %2089 = vmatpush1.msra.mxu0 0.0
    %2090 = vmatprep.subr.mxu0 0.0
    %2091 = vmatpush1.msra.mxu0 0.0
    %2092 = vmatprep.subr.mxu0 0.0
    %2093 = vmatpush1.msra.mxu0 0.0
    %2094 = vmatprep.subr.mxu0 0.0
    %2095 = vmatpush1.msra.mxu0 0.0
    %2096 = vmatprep.subr.mxu0 0.0
    %2097 = vmatpush1.msra.mxu0 %v2060
    %2098 = vmatprep.subr.mxu0 0.0
    %2099 = vmatpush2.msra.mxu0 0.0
    %2100 = vmatprep.subr.mxu0 0.0
    %2101 = vmatpush2.msra.mxu0 0.0
    %2102 = vmatprep.subr.mxu0 0.0
    %2103 = vmatpush2.msra.mxu0 0.0
    %2104 = vmatprep.subr.mxu0 0.0
    %2105 = vmatpush2.msra.mxu0 0.0
    %2106 = vmatprep.subr.mxu0 0.0
    %2107 = vmatpush2.msra.mxu0 0.0
    %2108 = vmatprep.subr.mxu0 0.0
    %2109 = vmatpush2.msra.mxu0 0.0
    %2110 = vmatprep.subr.mxu0 0.0
    %2111 = vmatpush2.msra.mxu0 0.0
    %2112 = vmatprep.subr.mxu0 0.0
    %2113 = vmatpush2.msra.mxu0 0.0
    %2114 = vmatprep.subr.mxu0 0.0
    %2115 = vmatpush2.msra.mxu0 0.0
    %2116 = vmatprep.subr.mxu0 0.0
    %2117 = vmatpush2.msra.mxu0 0.0
    %2118 = vmatprep.subr.mxu0 0.0
    %2119 = vmatpush2.msra.mxu0 0.0
    %2120 = vmatprep.subr.mxu0 0.0
    %2121 = vmatpush2.msra.mxu0 0.0
    %2122 = vmatprep.subr.mxu0 0.0
    %2123 = vmatpush2.msra.mxu0 0.0
    %2124 = vmatprep.subr.mxu0 0.0
    %2125 = vmatpush2.msra.mxu0 0.0
    %2126 = vmatprep.subr.mxu0 0.0
    %2127 = vmatpush2.msra.mxu0 0.0
    %2128 = vmatprep.subr.mxu0 0.0
    %2129 = vmatpush2.msra.mxu0 0.0
    %2130 = vmatprep.mubr.f32.mxu0 0.0
    %2131 = vmatmul.mubr.f32.gmra.mxu0 %v2062
    %v2132 = vpop.f32.mrf.mxu0
    %v2133 = vadd.f32 0.0, %v2132
    %v2134 = vpop.f32.mrf.mxu0
    %2135 = vmatprep.mubr.f32.mxu0 0.0
    %2136 = vmatmul.mubr.f32.gmra.mxu0 %v2064
    %v2137 = vpop.f32.mrf.mxu0
    %v2138 = vadd.f32 0.0, %v2137
    %v2139 = vpop.f32.mrf.mxu0
    %2140 = vdwg.mxu0
    %2143 = vrot.lane.b32.xlu0 %v1867, 108
    %v2144 = vpop.permute.xlu0 %2143
    %2145 = vrot.lane.b32.xlu0 %v1868, 108
    %v2146 = vpop.permute.xlu0 %2145
    %2147 = vrot.lane.b32.xlu0 %v32, 114
    %v2148 = vpop.permute.xlu0 %2147
    %v2150 = vsel %vm1034, %v2144, 0
    %v2152 = vsel %vm1034, %v2146, 0
    %2154 = vmatprep.subr.mxu0 0.0
    %2155 = vmatpush1.msra.mxu0 0.0
    %2156 = vmatprep.subr.mxu0 0.0
    %2157 = vmatpush1.msra.mxu0 0.0
    %2158 = vmatprep.subr.mxu0 0.0
    %2159 = vmatpush1.msra.mxu0 0.0
    %2160 = vmatprep.subr.mxu0 0.0
    %2161 = vmatpush1.msra.mxu0 0.0
    %2162 = vmatprep.subr.mxu0 0.0
    %2163 = vmatpush1.msra.mxu0 0.0
    %2164 = vmatprep.subr.mxu0 0.0
    %2165 = vmatpush1.msra.mxu0 0.0
    %2166 = vmatprep.subr.mxu0 0.0
    %2167 = vmatpush1.msra.mxu0 0.0
    %2168 = vmatprep.subr.mxu0 0.0
    %2169 = vmatpush1.msra.mxu0 0.0
    %2170 = vmatprep.subr.mxu0 0.0
    %2171 = vmatpush1.msra.mxu0 0.0
    %2172 = vmatprep.subr.mxu0 0.0
    %2173 = vmatpush1.msra.mxu0 0.0
    %2174 = vmatprep.subr.mxu0 0.0
    %2175 = vmatpush1.msra.mxu0 0.0
    %2176 = vmatprep.subr.mxu0 0.0
    %2177 = vmatpush1.msra.mxu0 0.0
    %2178 = vmatprep.subr.mxu0 0.0
    %2179 = vmatpush1.msra.mxu0 0.0
    %2180 = vmatprep.subr.mxu0 0.0
    %2181 = vmatpush1.msra.mxu0 0.0
    %2182 = vmatprep.subr.mxu0 0.0
    %2183 = vmatpush1.msra.mxu0 0.0
    %2184 = vmatprep.subr.mxu0 0.0
    %2185 = vmatpush1.msra.mxu0 %v2148
    %2186 = vmatprep.subr.mxu0 0.0
    %2187 = vmatpush2.msra.mxu0 0.0
    %2188 = vmatprep.subr.mxu0 0.0
    %2189 = vmatpush2.msra.mxu0 0.0
    %2190 = vmatprep.subr.mxu0 0.0
    %2191 = vmatpush2.msra.mxu0 0.0
    %2192 = vmatprep.subr.mxu0 0.0
    %2193 = vmatpush2.msra.mxu0 0.0
    %2194 = vmatprep.subr.mxu0 0.0
    %2195 = vmatpush2.msra.mxu0 0.0
    %2196 = vmatprep.subr.mxu0 0.0
    %2197 = vmatpush2.msra.mxu0 0.0
    %2198 = vmatprep.subr.mxu0 0.0
    %2199 = vmatpush2.msra.mxu0 0.0
    %2200 = vmatprep.subr.mxu0 0.0
    %2201 = vmatpush2.msra.mxu0 0.0
    %2202 = vmatprep.subr.mxu0 0.0
    %2203 = vmatpush2.msra.mxu0 0.0
    %2204 = vmatprep.subr.mxu0 0.0
    %2205 = vmatpush2.msra.mxu0 0.0
    %2206 = vmatprep.subr.mxu0 0.0
    %2207 = vmatpush2.msra.mxu0 0.0
    %2208 = vmatprep.subr.mxu0 0.0
    %2209 = vmatpush2.msra.mxu0 0.0
    %2210 = vmatprep.subr.mxu0 0.0
    %2211 = vmatpush2.msra.mxu0 0.0
    %2212 = vmatprep.subr.mxu0 0.0
    %2213 = vmatpush2.msra.mxu0 0.0
    %2214 = vmatprep.subr.mxu0 0.0
    %2215 = vmatpush2.msra.mxu0 0.0
    %2216 = vmatprep.subr.mxu0 0.0
    %2217 = vmatpush2.msra.mxu0 0.0
    %2218 = vmatprep.mubr.f32.mxu0 0.0
    %2219 = vmatmul.mubr.f32.gmra.mxu0 %v2150
    %v2220 = vpop.f32.mrf.mxu0
    %v2221 = vadd.f32 0.0, %v2220
    %v2222 = vpop.f32.mrf.mxu0
    %2223 = vmatprep.mubr.f32.mxu0 0.0
    %2224 = vmatmul.mubr.f32.gmra.mxu0 %v2152
    %v2225 = vpop.f32.mrf.mxu0
    %v2226 = vadd.f32 0.0, %v2225
    %v2227 = vpop.f32.mrf.mxu0
    %2228 = vdwg.mxu0
    %2231 = vrot.lane.b32.xlu0 %v1869, 108
    %v2232 = vpop.permute.xlu0 %2231
    %2233 = vrot.lane.b32.xlu0 %v1870, 108
    %v2234 = vpop.permute.xlu0 %2233
    %2235 = vrot.lane.b32.xlu0 %v33, 114
    %v2236 = vpop.permute.xlu0 %2235
    %v2238 = vsel %vm1034, %v2232, 0
    %v2240 = vsel %vm1034, %v2234, 0
    %2242 = vmatprep.subr.mxu0 0.0
    %2243 = vmatpush1.msra.mxu0 0.0
    %2244 = vmatprep.subr.mxu0 0.0
    %2245 = vmatpush1.msra.mxu0 0.0
    %2246 = vmatprep.subr.mxu0 0.0
    %2247 = vmatpush1.msra.mxu0 0.0
    %2248 = vmatprep.subr.mxu0 0.0
    %2249 = vmatpush1.msra.mxu0 0.0
    %2250 = vmatprep.subr.mxu0 0.0
    %2251 = vmatpush1.msra.mxu0 0.0
    %2252 = vmatprep.subr.mxu0 0.0
    %2253 = vmatpush1.msra.mxu0 0.0
    %2254 = vmatprep.subr.mxu0 0.0
    %2255 = vmatpush1.msra.mxu0 0.0
    %2256 = vmatprep.subr.mxu0 0.0
    %2257 = vmatpush1.msra.mxu0 0.0
    %2258 = vmatprep.subr.mxu0 0.0
    %2259 = vmatpush1.msra.mxu0 0.0
    %2260 = vmatprep.subr.mxu0 0.0
    %2261 = vmatpush1.msra.mxu0 0.0
    %2262 = vmatprep.subr.mxu0 0.0
    %2263 = vmatpush1.msra.mxu0 0.0
    %2264 = vmatprep.subr.mxu0 0.0
    %2265 = vmatpush1.msra.mxu0 0.0
    %2266 = vmatprep.subr.mxu0 0.0
    %2267 = vmatpush1.msra.mxu0 0.0
    %2268 = vmatprep.subr.mxu0 0.0
    %2269 = vmatpush1.msra.mxu0 0.0
    %2270 = vmatprep.subr.mxu0 0.0
    %2271 = vmatpush1.msra.mxu0 0.0
    %2272 = vmatprep.subr.mxu0 0.0
    %2273 = vmatpush1.msra.mxu0 %v2236
    %2274 = vmatprep.subr.mxu0 0.0
    %2275 = vmatpush2.msra.mxu0 0.0
    %2276 = vmatprep.subr.mxu0 0.0
    %2277 = vmatpush2.msra.mxu0 0.0
    %2278 = vmatprep.subr.mxu0 0.0
    %2279 = vmatpush2.msra.mxu0 0.0
    %2280 = vmatprep.subr.mxu0 0.0
    %2281 = vmatpush2.msra.mxu0 0.0
    %2282 = vmatprep.subr.mxu0 0.0
    %2283 = vmatpush2.msra.mxu0 0.0
    %2284 = vmatprep.subr.mxu0 0.0
    %2285 = vmatpush2.msra.mxu0 0.0
    %2286 = vmatprep.subr.mxu0 0.0
    %2287 = vmatpush2.msra.mxu0 0.0
    %2288 = vmatprep.subr.mxu0 0.0
    %2289 = vmatpush2.msra.mxu0 0.0
    %2290 = vmatprep.subr.mxu0 0.0
    %2291 = vmatpush2.msra.mxu0 0.0
    %2292 = vmatprep.subr.mxu0 0.0
    %2293 = vmatpush2.msra.mxu0 0.0
    %2294 = vmatprep.subr.mxu0 0.0
    %2295 = vmatpush2.msra.mxu0 0.0
    %2296 = vmatprep.subr.mxu0 0.0
    %2297 = vmatpush2.msra.mxu0 0.0
    %2298 = vmatprep.subr.mxu0 0.0
    %2299 = vmatpush2.msra.mxu0 0.0
    %2300 = vmatprep.subr.mxu0 0.0
    %2301 = vmatpush2.msra.mxu0 0.0
    %2302 = vmatprep.subr.mxu0 0.0
    %2303 = vmatpush2.msra.mxu0 0.0
    %2304 = vmatprep.subr.mxu0 0.0
    %2305 = vmatpush2.msra.mxu0 0.0
    %2306 = vmatprep.mubr.f32.mxu0 0.0
    %2307 = vmatmul.mubr.f32.gmra.mxu0 %v2238
    %v2308 = vpop.f32.mrf.mxu0
    %v2309 = vadd.f32 0.0, %v2308
    %v2310 = vpop.f32.mrf.mxu0
    %2311 = vmatprep.mubr.f32.mxu0 0.0
    %2312 = vmatmul.mubr.f32.gmra.mxu0 %v2240
    %v2313 = vpop.f32.mrf.mxu0
    %v2314 = vadd.f32 0.0, %v2313
    %v2315 = vpop.f32.mrf.mxu0
    %2316 = vdwg.mxu0
    %2319 = vrot.lane.b32.xlu0 %v1871, 108
    %v2320 = vpop.permute.xlu0 %2319
    %2321 = vrot.lane.b32.xlu0 %v1872, 108
    %v2322 = vpop.permute.xlu0 %2321
    %2323 = vrot.lane.b32.xlu0 %v34, 114
    %v2324 = vpop.permute.xlu0 %2323
    %v2326 = vsel %vm1034, %v2320, 0
    %v2328 = vsel %vm1034, %v2322, 0
    %2330 = vmatprep.subr.mxu0 0.0
    %2331 = vmatpush1.msra.mxu0 0.0
    %2332 = vmatprep.subr.mxu0 0.0
    %2333 = vmatpush1.msra.mxu0 0.0
    %2334 = vmatprep.subr.mxu0 0.0
    %2335 = vmatpush1.msra.mxu0 0.0
    %2336 = vmatprep.subr.mxu0 0.0
    %2337 = vmatpush1.msra.mxu0 0.0
    %2338 = vmatprep.subr.mxu0 0.0
    %2339 = vmatpush1.msra.mxu0 0.0
    %2340 = vmatprep.subr.mxu0 0.0
    %2341 = vmatpush1.msra.mxu0 0.0
    %2342 = vmatprep.subr.mxu0 0.0
    %2343 = vmatpush1.msra.mxu0 0.0
    %2344 = vmatprep.subr.mxu0 0.0
    %2345 = vmatpush1.msra.mxu0 0.0
    %2346 = vmatprep.subr.mxu0 0.0
    %2347 = vmatpush1.msra.mxu0 0.0
    %2348 = vmatprep.subr.mxu0 0.0
    %2349 = vmatpush1.msra.mxu0 0.0
    %2350 = vmatprep.subr.mxu0 0.0
    %2351 = vmatpush1.msra.mxu0 0.0
    %2352 = vmatprep.subr.mxu0 0.0
    %2353 = vmatpush1.msra.mxu0 0.0
    %2354 = vmatprep.subr.mxu0 0.0
    %2355 = vmatpush1.msra.mxu0 0.0
    %2356 = vmatprep.subr.mxu0 0.0
    %2357 = vmatpush1.msra.mxu0 0.0
    %2358 = vmatprep.subr.mxu0 0.0
    %2359 = vmatpush1.msra.mxu0 0.0
    %2360 = vmatprep.subr.mxu0 0.0
    %2361 = vmatpush1.msra.mxu0 %v2324
    %2362 = vmatprep.subr.mxu0 0.0
    %2363 = vmatpush2.msra.mxu0 0.0
    %2364 = vmatprep.subr.mxu0 0.0
    %2365 = vmatpush2.msra.mxu0 0.0
    %2366 = vmatprep.subr.mxu0 0.0
    %2367 = vmatpush2.msra.mxu0 0.0
    %2368 = vmatprep.subr.mxu0 0.0
    %2369 = vmatpush2.msra.mxu0 0.0
    %2370 = vmatprep.subr.mxu0 0.0
    %2371 = vmatpush2.msra.mxu0 0.0
    %2372 = vmatprep.subr.mxu0 0.0
    %2373 = vmatpush2.msra.mxu0 0.0
    %2374 = vmatprep.subr.mxu0 0.0
    %2375 = vmatpush2.msra.mxu0 0.0
    %2376 = vmatprep.subr.mxu0 0.0
    %2377 = vmatpush2.msra.mxu0 0.0
    %2378 = vmatprep.subr.mxu0 0.0
    %2379 = vmatpush2.msra.mxu0 0.0
    %2380 = vmatprep.subr.mxu0 0.0
    %2381 = vmatpush2.msra.mxu0 0.0
    %2382 = vmatprep.subr.mxu0 0.0
    %2383 = vmatpush2.msra.mxu0 0.0
    %2384 = vmatprep.subr.mxu0 0.0
    %2385 = vmatpush2.msra.mxu0 0.0
    %2386 = vmatprep.subr.mxu0 0.0
    %2387 = vmatpush2.msra.mxu0 0.0
    %2388 = vmatprep.subr.mxu0 0.0
    %2389 = vmatpush2.msra.mxu0 0.0
    %2390 = vmatprep.subr.mxu0 0.0
    %2391 = vmatpush2.msra.mxu0 0.0
    %2392 = vmatprep.subr.mxu0 0.0
    %2393 = vmatpush2.msra.mxu0 0.0
    %2394 = vmatprep.mubr.f32.mxu0 0.0
    %2395 = vmatmul.mubr.f32.gmra.mxu0 %v2326
    %v2396 = vpop.f32.mrf.mxu0
    %v2397 = vadd.f32 0.0, %v2396
    %v2398 = vpop.f32.mrf.mxu0
    %2399 = vmatprep.mubr.f32.mxu0 0.0
    %2400 = vmatmul.mubr.f32.gmra.mxu0 %v2328
    %v2401 = vpop.f32.mrf.mxu0
    %v2402 = vadd.f32 0.0, %v2401
    %v2403 = vpop.f32.mrf.mxu0
    %2404 = vdwg.mxu0
    %2407 = vrot.lane.b32.xlu0 %v1873, 108
    %v2408 = vpop.permute.xlu0 %2407
    %2409 = vrot.lane.b32.xlu0 %v1874, 108
    %v2410 = vpop.permute.xlu0 %2409
    %2411 = vrot.lane.b32.xlu0 %v35, 114
    %v2412 = vpop.permute.xlu0 %2411
    %v2414 = vsel %vm1034, %v2408, 0
    %v2416 = vsel %vm1034, %v2410, 0
    %2418 = vmatprep.subr.mxu0 0.0
    %2419 = vmatpush1.msra.mxu0 0.0
    %2420 = vmatprep.subr.mxu0 0.0
    %2421 = vmatpush1.msra.mxu0 0.0
    %2422 = vmatprep.subr.mxu0 0.0
    %2423 = vmatpush1.msra.mxu0 0.0
    %2424 = vmatprep.subr.mxu0 0.0
    %2425 = vmatpush1.msra.mxu0 0.0
    %2426 = vmatprep.subr.mxu0 0.0
    %2427 = vmatpush1.msra.mxu0 0.0
    %2428 = vmatprep.subr.mxu0 0.0
    %2429 = vmatpush1.msra.mxu0 0.0
    %2430 = vmatprep.subr.mxu0 0.0
    %2431 = vmatpush1.msra.mxu0 0.0
    %2432 = vmatprep.subr.mxu0 0.0
    %2433 = vmatpush1.msra.mxu0 0.0
    %2434 = vmatprep.subr.mxu0 0.0
    %2435 = vmatpush1.msra.mxu0 0.0
    %2436 = vmatprep.subr.mxu0 0.0
    %2437 = vmatpush1.msra.mxu0 0.0
    %2438 = vmatprep.subr.mxu0 0.0
    %2439 = vmatpush1.msra.mxu0 0.0
    %2440 = vmatprep.subr.mxu0 0.0
    %2441 = vmatpush1.msra.mxu0 0.0
    %2442 = vmatprep.subr.mxu0 0.0
    %2443 = vmatpush1.msra.mxu0 0.0
    %2444 = vmatprep.subr.mxu0 0.0
    %2445 = vmatpush1.msra.mxu0 0.0
    %2446 = vmatprep.subr.mxu0 0.0
    %2447 = vmatpush1.msra.mxu0 0.0
    %2448 = vmatprep.subr.mxu0 0.0
    %2449 = vmatpush1.msra.mxu0 %v2412
    %2450 = vmatprep.subr.mxu0 0.0
    %2451 = vmatpush2.msra.mxu0 0.0
    %2452 = vmatprep.subr.mxu0 0.0
    %2453 = vmatpush2.msra.mxu0 0.0
    %2454 = vmatprep.subr.mxu0 0.0
    %2455 = vmatpush2.msra.mxu0 0.0
    %2456 = vmatprep.subr.mxu0 0.0
    %2457 = vmatpush2.msra.mxu0 0.0
    %2458 = vmatprep.subr.mxu0 0.0
    %2459 = vmatpush2.msra.mxu0 0.0
    %2460 = vmatprep.subr.mxu0 0.0
    %2461 = vmatpush2.msra.mxu0 0.0
    %2462 = vmatprep.subr.mxu0 0.0
    %2463 = vmatpush2.msra.mxu0 0.0
    %2464 = vmatprep.subr.mxu0 0.0
    %2465 = vmatpush2.msra.mxu0 0.0
    %2466 = vmatprep.subr.mxu0 0.0
    %2467 = vmatpush2.msra.mxu0 0.0
    %2468 = vmatprep.subr.mxu0 0.0
    %2469 = vmatpush2.msra.mxu0 0.0
    %2470 = vmatprep.subr.mxu0 0.0
    %2471 = vmatpush2.msra.mxu0 0.0
    %2472 = vmatprep.subr.mxu0 0.0
    %2473 = vmatpush2.msra.mxu0 0.0
    %2474 = vmatprep.subr.mxu0 0.0
    %2475 = vmatpush2.msra.mxu0 0.0
    %2476 = vmatprep.subr.mxu0 0.0
    %2477 = vmatpush2.msra.mxu0 0.0
    %2478 = vmatprep.subr.mxu0 0.0
    %2479 = vmatpush2.msra.mxu0 0.0
    %2480 = vmatprep.subr.mxu0 0.0
    %2481 = vmatpush2.msra.mxu0 0.0
    %2482 = vmatprep.mubr.f32.mxu0 0.0
    %2483 = vmatmul.mubr.f32.gmra.mxu0 %v2414
    %v2484 = vpop.f32.mrf.mxu0
    %v2485 = vadd.f32 0.0, %v2484
    %v2486 = vpop.f32.mrf.mxu0
    %2487 = vmatprep.mubr.f32.mxu0 0.0
    %2488 = vmatmul.mubr.f32.gmra.mxu0 %v2416
    %v2489 = vpop.f32.mrf.mxu0
    %v2490 = vadd.f32 0.0, %v2489
    %v2491 = vpop.f32.mrf.mxu0
    %2492 = vdwg.mxu0
    %2495 = vrot.lane.b32.xlu0 %v1875, 108
    %v2496 = vpop.permute.xlu0 %2495
    %2497 = vrot.lane.b32.xlu0 %v1876, 108
    %v2498 = vpop.permute.xlu0 %2497
    %2499 = vrot.lane.b32.xlu0 %v36, 114
    %v2500 = vpop.permute.xlu0 %2499
    %v2502 = vsel %vm1034, %v2496, 0
    %v2504 = vsel %vm1034, %v2498, 0
    %2506 = vmatprep.subr.mxu0 0.0
    %2507 = vmatpush1.msra.mxu0 0.0
    %2508 = vmatprep.subr.mxu0 0.0
    %2509 = vmatpush1.msra.mxu0 0.0
    %2510 = vmatprep.subr.mxu0 0.0
    %2511 = vmatpush1.msra.mxu0 0.0
    %2512 = vmatprep.subr.mxu0 0.0
    %2513 = vmatpush1.msra.mxu0 0.0
    %2514 = vmatprep.subr.mxu0 0.0
    %2515 = vmatpush1.msra.mxu0 0.0
    %2516 = vmatprep.subr.mxu0 0.0
    %2517 = vmatpush1.msra.mxu0 0.0
    %2518 = vmatprep.subr.mxu0 0.0
    %2519 = vmatpush1.msra.mxu0 0.0
    %2520 = vmatprep.subr.mxu0 0.0
    %2521 = vmatpush1.msra.mxu0 0.0
    %2522 = vmatprep.subr.mxu0 0.0
    %2523 = vmatpush1.msra.mxu0 0.0
    %2524 = vmatprep.subr.mxu0 0.0
    %2525 = vmatpush1.msra.mxu0 0.0
    %2526 = vmatprep.subr.mxu0 0.0
    %2527 = vmatpush1.msra.mxu0 0.0
    %2528 = vmatprep.subr.mxu0 0.0
    %2529 = vmatpush1.msra.mxu0 0.0
    %2530 = vmatprep.subr.mxu0 0.0
    %2531 = vmatpush1.msra.mxu0 0.0
    %2532 = vmatprep.subr.mxu0 0.0
    %2533 = vmatpush1.msra.mxu0 0.0
    %2534 = vmatprep.subr.mxu0 0.0
    %2535 = vmatpush1.msra.mxu0 0.0
    %2536 = vmatprep.subr.mxu0 0.0
    %2537 = vmatpush1.msra.mxu0 %v2500
    %2538 = vmatprep.subr.mxu0 0.0
    %2539 = vmatpush2.msra.mxu0 0.0
    %2540 = vmatprep.subr.mxu0 0.0
    %2541 = vmatpush2.msra.mxu0 0.0
    %2542 = vmatprep.subr.mxu0 0.0
    %2543 = vmatpush2.msra.mxu0 0.0
    %2544 = vmatprep.subr.mxu0 0.0
    %2545 = vmatpush2.msra.mxu0 0.0
    %2546 = vmatprep.subr.mxu0 0.0
    %2547 = vmatpush2.msra.mxu0 0.0
    %2548 = vmatprep.subr.mxu0 0.0
    %2549 = vmatpush2.msra.mxu0 0.0
    %2550 = vmatprep.subr.mxu0 0.0
    %2551 = vmatpush2.msra.mxu0 0.0
    %2552 = vmatprep.subr.mxu0 0.0
    %2553 = vmatpush2.msra.mxu0 0.0
    %2554 = vmatprep.subr.mxu0 0.0
    %2555 = vmatpush2.msra.mxu0 0.0
    %2556 = vmatprep.subr.mxu0 0.0
    %2557 = vmatpush2.msra.mxu0 0.0
    %2558 = vmatprep.subr.mxu0 0.0
    %2559 = vmatpush2.msra.mxu0 0.0
    %2560 = vmatprep.subr.mxu0 0.0
    %2561 = vmatpush2.msra.mxu0 0.0
    %2562 = vmatprep.subr.mxu0 0.0
    %2563 = vmatpush2.msra.mxu0 0.0
    %2564 = vmatprep.subr.mxu0 0.0
    %2565 = vmatpush2.msra.mxu0 0.0
    %2566 = vmatprep.subr.mxu0 0.0
    %2567 = vmatpush2.msra.mxu0 0.0
    %2568 = vmatprep.subr.mxu0 0.0
    %2569 = vmatpush2.msra.mxu0 0.0
    %2570 = vmatprep.mubr.f32.mxu0 0.0
    %2571 = vmatmul.mubr.f32.gmra.mxu0 %v2502
    %v2572 = vpop.f32.mrf.mxu0
    %v2573 = vadd.f32 0.0, %v2572
    %v2574 = vpop.f32.mrf.mxu0
    %2575 = vmatprep.mubr.f32.mxu0 0.0
    %2576 = vmatmul.mubr.f32.gmra.mxu0 %v2504
    %v2577 = vpop.f32.mrf.mxu0
    %v2578 = vadd.f32 0.0, %v2577
    %v2579 = vpop.f32.mrf.mxu0
    %2580 = vdwg.mxu0
    %2581 = vrot.lane.b32.xlu0 %v37, 124
    %v2582 = vpop.permute.xlu0 %2581
    %2583 = vrot.lane.b32.xlu0 %v38, 124
    %v2584 = vpop.permute.xlu0 %2583
    %2585 = vrot.lane.b32.xlu0 %v39, 124
    %v2586 = vpop.permute.xlu0 %2585
    %2587 = vrot.lane.b32.xlu0 %v40, 124
    %v2588 = vpop.permute.xlu0 %2587
    %2589 = vrot.lane.b32.xlu0 %v41, 124
    %v2590 = vpop.permute.xlu0 %2589
    %2591 = vrot.lane.b32.xlu0 %v42, 124
    %v2592 = vpop.permute.xlu0 %2591
    %2593 = vrot.lane.b32.xlu0 %v43, 124
    %v2594 = vpop.permute.xlu0 %2593
    %2595 = vrot.lane.b32.xlu0 %v44, 124
    %v2596 = vpop.permute.xlu0 %2595
    %2597 = vrot.lane.b32.xlu0 %v45, 124
    %v2598 = vpop.permute.xlu0 %2597
    %2599 = vrot.lane.b32.xlu0 %v46, 124
    %v2600 = vpop.permute.xlu0 %2599
    %2601 = vrot.lane.b32.xlu0 %v47, 124
    %v2602 = vpop.permute.xlu0 %2601
    %2603 = vrot.lane.b32.xlu0 %v48, 124
    %v2604 = vpop.permute.xlu0 %2603
    %2605 = vrot.lane.b32.xlu0 %v49, 124
    %v2606 = vpop.permute.xlu0 %2605
    %2607 = vrot.lane.b32.xlu0 %v50, 124
    %v2608 = vpop.permute.xlu0 %2607
    %2609 = vrot.lane.b32.xlu0 %v51, 124
    %v2610 = vpop.permute.xlu0 %2609
    %2611 = vrot.lane.b32.xlu0 %v52, 124
    %v2612 = vpop.permute.xlu0 %2611
    %v2629 = vmul.f32 %v1957, %v2582
    %v2630 = vmul.f32 %v1962, %v2584
    %v2631 = vmul.f32 %v2045, %v2586
    %v2632 = vmul.f32 %v2050, %v2588
    %v2633 = vmul.f32 %v2133, %v2590
    %v2634 = vmul.f32 %v2138, %v2592
    %v2635 = vmul.f32 %v2221, %v2594
    %v2636 = vmul.f32 %v2226, %v2596
    %v2637 = vmul.f32 %v2309, %v2598
    %v2638 = vmul.f32 %v2314, %v2600
    %v2639 = vmul.f32 %v2397, %v2602
    %v2640 = vmul.f32 %v2402, %v2604
    %v2641 = vmul.f32 %v2485, %v2606
    %v2642 = vmul.f32 %v2490, %v2608
    %v2643 = vmul.f32 %v2573, %v2610
    %v2644 = vmul.f32 %v2578, %v2612
    %v2646 = vsel %vm340, %v2629, 0
    %v2649 = vsel %vm340, %v2630, 0
    %2651 = vmatprep.subr.mxu0 0.0
    %2652 = vmatpush1.msra.mxu0 0.0
    %2653 = vmatprep.subr.mxu0 0.0
    %2654 = vmatpush1.msra.mxu0 0.0
    %2655 = vmatprep.subr.mxu0 0.0
    %2656 = vmatpush1.msra.mxu0 0.0
    %2657 = vmatprep.subr.mxu0 0.0
    %2658 = vmatpush1.msra.mxu0 0.0
    %2659 = vmatprep.subr.mxu0 0.0
    %2660 = vmatpush1.msra.mxu0 0.0
    %2661 = vmatprep.subr.mxu0 0.0
    %2662 = vmatpush1.msra.mxu0 0.0
    %2663 = vmatprep.subr.mxu0 0.0
    %2664 = vmatpush1.msra.mxu0 0.0
    %2665 = vmatprep.subr.mxu0 0.0
    %2666 = vmatpush1.msra.mxu0 0.0
    %2667 = vmatprep.subr.mxu0 0.0
    %2668 = vmatpush1.msra.mxu0 0.0
    %2669 = vmatprep.subr.mxu0 0.0
    %2670 = vmatpush1.msra.mxu0 0.0
    %2671 = vmatprep.subr.mxu0 0.0
    %2672 = vmatpush1.msra.mxu0 0.0
    %2673 = vmatprep.subr.mxu0 0.0
    %2674 = vmatpush1.msra.mxu0 0.0
    %2675 = vmatprep.subr.mxu0 0.0
    %2676 = vmatpush1.msra.mxu0 0.0
    %2677 = vmatprep.subr.mxu0 0.0
    %2678 = vmatpush1.msra.mxu0 0.0
    %2679 = vmatprep.subr.mxu0 0.0
    %2680 = vmatpush1.msra.mxu0 %v38
    %2681 = vmatprep.subr.mxu0 0.0
    %2682 = vmatpush1.msra.mxu0 %v37
    %2683 = vmatprep.subr.mxu0 0.0
    %2684 = vmatpush2.msra.mxu0 0.0
    %2685 = vmatprep.subr.mxu0 0.0
    %2686 = vmatpush2.msra.mxu0 0.0
    %2687 = vmatprep.subr.mxu0 0.0
    %2688 = vmatpush2.msra.mxu0 0.0
    %2689 = vmatprep.subr.mxu0 0.0
    %2690 = vmatpush2.msra.mxu0 0.0
    %2691 = vmatprep.subr.mxu0 0.0
    %2692 = vmatpush2.msra.mxu0 0.0
    %2693 = vmatprep.subr.mxu0 0.0
    %2694 = vmatpush2.msra.mxu0 0.0
    %2695 = vmatprep.subr.mxu0 0.0
    %2696 = vmatpush2.msra.mxu0 0.0
    %2697 = vmatprep.subr.mxu0 0.0
    %2698 = vmatpush2.msra.mxu0 0.0
    %2699 = vmatprep.subr.mxu0 0.0
    %2700 = vmatpush2.msra.mxu0 0.0
    %2701 = vmatprep.subr.mxu0 0.0
    %2702 = vmatpush2.msra.mxu0 0.0
    %2703 = vmatprep.subr.mxu0 0.0
    %2704 = vmatpush2.msra.mxu0 0.0
    %2705 = vmatprep.subr.mxu0 0.0
    %2706 = vmatpush2.msra.mxu0 0.0
    %2707 = vmatprep.subr.mxu0 0.0
    %2708 = vmatpush2.msra.mxu0 0.0
    %2709 = vmatprep.subr.mxu0 0.0
    %2710 = vmatpush2.msra.mxu0 0.0
    %2711 = vmatprep.subr.mxu0 0.0
    %2712 = vmatpush2.msra.mxu0 0.0
    %2713 = vmatprep.subr.mxu0 0.0
    %2714 = vmatpush2.msra.mxu0 0.0
    %2715 = vmatprep.mubr.f32.mxu0 0.0
    %2716 = vmatmul.mubr.f32.gmra.mxu0 %v2646
    %v2717 = vpop.f32.mrf.mxu0
    %v2718 = vadd.f32 0.0, %v2717
    %v2719 = vpop.f32.mrf.mxu0
    %2720 = vmatprep.mubr.f32.mxu0 0.0
    %2721 = vmatmul.mubr.f32.gmra.mxu0 %v2649
    %v2722 = vpop.f32.mrf.mxu0
    %v2723 = vadd.f32 0.0, %v2722
    %v2724 = vpop.f32.mrf.mxu0
    %2725 = vdwg.mxu0
    %v2727 = vsel %vm340, %v2631, 0
    %v2730 = vsel %vm340, %v2632, 0
    %2732 = vmatprep.subr.mxu0 0.0
    %2733 = vmatpush1.msra.mxu0 0.0
    %2734 = vmatprep.subr.mxu0 0.0
    %2735 = vmatpush1.msra.mxu0 0.0
    %2736 = vmatprep.subr.mxu0 0.0
    %2737 = vmatpush1.msra.mxu0 0.0
    %2738 = vmatprep.subr.mxu0 0.0
    %2739 = vmatpush1.msra.mxu0 0.0
    %2740 = vmatprep.subr.mxu0 0.0
    %2741 = vmatpush1.msra.mxu0 0.0
    %2742 = vmatprep.subr.mxu0 0.0
    %2743 = vmatpush1.msra.mxu0 0.0
    %2744 = vmatprep.subr.mxu0 0.0
    %2745 = vmatpush1.msra.mxu0 0.0
    %2746 = vmatprep.subr.mxu0 0.0
    %2747 = vmatpush1.msra.mxu0 0.0
    %2748 = vmatprep.subr.mxu0 0.0
    %2749 = vmatpush1.msra.mxu0 0.0
    %2750 = vmatprep.subr.mxu0 0.0
    %2751 = vmatpush1.msra.mxu0 0.0
    %2752 = vmatprep.subr.mxu0 0.0
    %2753 = vmatpush1.msra.mxu0 0.0
    %2754 = vmatprep.subr.mxu0 0.0
    %2755 = vmatpush1.msra.mxu0 0.0
    %2756 = vmatprep.subr.mxu0 0.0
    %2757 = vmatpush1.msra.mxu0 0.0
    %2758 = vmatprep.subr.mxu0 0.0
    %2759 = vmatpush1.msra.mxu0 0.0
    %2760 = vmatprep.subr.mxu0 0.0
    %2761 = vmatpush1.msra.mxu0 %v40
    %2762 = vmatprep.subr.mxu0 0.0
    %2763 = vmatpush1.msra.mxu0 %v39
    %2764 = vmatprep.subr.mxu0 0.0
    %2765 = vmatpush2.msra.mxu0 0.0
    %2766 = vmatprep.subr.mxu0 0.0
    %2767 = vmatpush2.msra.mxu0 0.0
    %2768 = vmatprep.subr.mxu0 0.0
    %2769 = vmatpush2.msra.mxu0 0.0
    %2770 = vmatprep.subr.mxu0 0.0
    %2771 = vmatpush2.msra.mxu0 0.0
    %2772 = vmatprep.subr.mxu0 0.0
    %2773 = vmatpush2.msra.mxu0 0.0
    %2774 = vmatprep.subr.mxu0 0.0
    %2775 = vmatpush2.msra.mxu0 0.0
    %2776 = vmatprep.subr.mxu0 0.0
    %2777 = vmatpush2.msra.mxu0 0.0
    %2778 = vmatprep.subr.mxu0 0.0
    %2779 = vmatpush2.msra.mxu0 0.0
    %2780 = vmatprep.subr.mxu0 0.0
    %2781 = vmatpush2.msra.mxu0 0.0
    %2782 = vmatprep.subr.mxu0 0.0
    %2783 = vmatpush2.msra.mxu0 0.0
    %2784 = vmatprep.subr.mxu0 0.0
    %2785 = vmatpush2.msra.mxu0 0.0
    %2786 = vmatprep.subr.mxu0 0.0
    %2787 = vmatpush2.msra.mxu0 0.0
    %2788 = vmatprep.subr.mxu0 0.0
    %2789 = vmatpush2.msra.mxu0 0.0
    %2790 = vmatprep.subr.mxu0 0.0
    %2791 = vmatpush2.msra.mxu0 0.0
    %2792 = vmatprep.subr.mxu0 0.0
    %2793 = vmatpush2.msra.mxu0 0.0
    %2794 = vmatprep.subr.mxu0 0.0
    %2795 = vmatpush2.msra.mxu0 0.0
    %2796 = vmatprep.mubr.f32.mxu0 0.0
    %2797 = vmatmul.mubr.f32.gmra.mxu0 %v2727
    %v2798 = vpop.f32.mrf.mxu0
    %v2799 = vadd.f32 0.0, %v2798
    %v2800 = vpop.f32.mrf.mxu0
    %2801 = vmatprep.mubr.f32.mxu0 0.0
    %2802 = vmatmul.mubr.f32.gmra.mxu0 %v2730
    %v2803 = vpop.f32.mrf.mxu0
    %v2804 = vadd.f32 0.0, %v2803
    %v2805 = vpop.f32.mrf.mxu0
    %2806 = vdwg.mxu0
    %v2808 = vsel %vm340, %v2633, 0
    %v2811 = vsel %vm340, %v2634, 0
    %2813 = vmatprep.subr.mxu0 0.0
    %2814 = vmatpush1.msra.mxu0 0.0
    %2815 = vmatprep.subr.mxu0 0.0
    %2816 = vmatpush1.msra.mxu0 0.0
    %2817 = vmatprep.subr.mxu0 0.0
    %2818 = vmatpush1.msra.mxu0 0.0
    %2819 = vmatprep.subr.mxu0 0.0
    %2820 = vmatpush1.msra.mxu0 0.0
    %2821 = vmatprep.subr.mxu0 0.0
    %2822 = vmatpush1.msra.mxu0 0.0
    %2823 = vmatprep.subr.mxu0 0.0
    %2824 = vmatpush1.msra.mxu0 0.0
    %2825 = vmatprep.subr.mxu0 0.0
    %2826 = vmatpush1.msra.mxu0 0.0
    %2827 = vmatprep.subr.mxu0 0.0
    %2828 = vmatpush1.msra.mxu0 0.0
    %2829 = vmatprep.subr.mxu0 0.0
    %2830 = vmatpush1.msra.mxu0 0.0
    %2831 = vmatprep.subr.mxu0 0.0
    %2832 = vmatpush1.msra.mxu0 0.0
    %2833 = vmatprep.subr.mxu0 0.0
    %2834 = vmatpush1.msra.mxu0 0.0
    %2835 = vmatprep.subr.mxu0 0.0
    %2836 = vmatpush1.msra.mxu0 0.0
    %2837 = vmatprep.subr.mxu0 0.0
    %2838 = vmatpush1.msra.mxu0 0.0
    %2839 = vmatprep.subr.mxu0 0.0
    %2840 = vmatpush1.msra.mxu0 0.0
    %2841 = vmatprep.subr.mxu0 0.0
    %2842 = vmatpush1.msra.mxu0 %v42
    %2843 = vmatprep.subr.mxu0 0.0
    %2844 = vmatpush1.msra.mxu0 %v41
    %2845 = vmatprep.subr.mxu0 0.0
    %2846 = vmatpush2.msra.mxu0 0.0
    %2847 = vmatprep.subr.mxu0 0.0
    %2848 = vmatpush2.msra.mxu0 0.0
    %2849 = vmatprep.subr.mxu0 0.0
    %2850 = vmatpush2.msra.mxu0 0.0
    %2851 = vmatprep.subr.mxu0 0.0
    %2852 = vmatpush2.msra.mxu0 0.0
    %2853 = vmatprep.subr.mxu0 0.0
    %2854 = vmatpush2.msra.mxu0 0.0
    %2855 = vmatprep.subr.mxu0 0.0
    %2856 = vmatpush2.msra.mxu0 0.0
    %2857 = vmatprep.subr.mxu0 0.0
    %2858 = vmatpush2.msra.mxu0 0.0
    %2859 = vmatprep.subr.mxu0 0.0
    %2860 = vmatpush2.msra.mxu0 0.0
    %2861 = vmatprep.subr.mxu0 0.0
    %2862 = vmatpush2.msra.mxu0 0.0
    %2863 = vmatprep.subr.mxu0 0.0
    %2864 = vmatpush2.msra.mxu0 0.0
    %2865 = vmatprep.subr.mxu0 0.0
    %2866 = vmatpush2.msra.mxu0 0.0
    %2867 = vmatprep.subr.mxu0 0.0
    %2868 = vmatpush2.msra.mxu0 0.0
    %2869 = vmatprep.subr.mxu0 0.0
    %2870 = vmatpush2.msra.mxu0 0.0
    %2871 = vmatprep.subr.mxu0 0.0
    %2872 = vmatpush2.msra.mxu0 0.0
    %2873 = vmatprep.subr.mxu0 0.0
    %2874 = vmatpush2.msra.mxu0 0.0
    %2875 = vmatprep.subr.mxu0 0.0
    %2876 = vmatpush2.msra.mxu0 0.0
    %2877 = vmatprep.mubr.f32.mxu0 0.0
    %2878 = vmatmul.mubr.f32.gmra.mxu0 %v2808
    %v2879 = vpop.f32.mrf.mxu0
    %v2880 = vadd.f32 0.0, %v2879
    %v2881 = vpop.f32.mrf.mxu0
    %2882 = vmatprep.mubr.f32.mxu0 0.0
    %2883 = vmatmul.mubr.f32.gmra.mxu0 %v2811
    %v2884 = vpop.f32.mrf.mxu0
    %v2885 = vadd.f32 0.0, %v2884
    %v2886 = vpop.f32.mrf.mxu0
    %2887 = vdwg.mxu0
    %v2889 = vsel %vm340, %v2635, 0
    %v2892 = vsel %vm340, %v2636, 0
    %2894 = vmatprep.subr.mxu0 0.0
    %2895 = vmatpush1.msra.mxu0 0.0
    %2896 = vmatprep.subr.mxu0 0.0
    %2897 = vmatpush1.msra.mxu0 0.0
    %2898 = vmatprep.subr.mxu0 0.0
    %2899 = vmatpush1.msra.mxu0 0.0
    %2900 = vmatprep.subr.mxu0 0.0
    %2901 = vmatpush1.msra.mxu0 0.0
    %2902 = vmatprep.subr.mxu0 0.0
    %2903 = vmatpush1.msra.mxu0 0.0
    %2904 = vmatprep.subr.mxu0 0.0
    %2905 = vmatpush1.msra.mxu0 0.0
    %2906 = vmatprep.subr.mxu0 0.0
    %2907 = vmatpush1.msra.mxu0 0.0
    %2908 = vmatprep.subr.mxu0 0.0
    %2909 = vmatpush1.msra.mxu0 0.0
    %2910 = vmatprep.subr.mxu0 0.0
    %2911 = vmatpush1.msra.mxu0 0.0
    %2912 = vmatprep.subr.mxu0 0.0
    %2913 = vmatpush1.msra.mxu0 0.0
    %2914 = vmatprep.subr.mxu0 0.0
    %2915 = vmatpush1.msra.mxu0 0.0
    %2916 = vmatprep.subr.mxu0 0.0
    %2917 = vmatpush1.msra.mxu0 0.0
    %2918 = vmatprep.subr.mxu0 0.0
    %2919 = vmatpush1.msra.mxu0 0.0
    %2920 = vmatprep.subr.mxu0 0.0
    %2921 = vmatpush1.msra.mxu0 0.0
    %2922 = vmatprep.subr.mxu0 0.0
    %2923 = vmatpush1.msra.mxu0 %v44
    %2924 = vmatprep.subr.mxu0 0.0
    %2925 = vmatpush1.msra.mxu0 %v43
    %2926 = vmatprep.subr.mxu0 0.0
    %2927 = vmatpush2.msra.mxu0 0.0
    %2928 = vmatprep.subr.mxu0 0.0
    %2929 = vmatpush2.msra.mxu0 0.0
    %2930 = vmatprep.subr.mxu0 0.0
    %2931 = vmatpush2.msra.mxu0 0.0
    %2932 = vmatprep.subr.mxu0 0.0
    %2933 = vmatpush2.msra.mxu0 0.0
    %2934 = vmatprep.subr.mxu0 0.0
    %2935 = vmatpush2.msra.mxu0 0.0
    %2936 = vmatprep.subr.mxu0 0.0
    %2937 = vmatpush2.msra.mxu0 0.0
    %2938 = vmatprep.subr.mxu0 0.0
    %2939 = vmatpush2.msra.mxu0 0.0
    %2940 = vmatprep.subr.mxu0 0.0
    %2941 = vmatpush2.msra.mxu0 0.0
    %2942 = vmatprep.subr.mxu0 0.0
    %2943 = vmatpush2.msra.mxu0 0.0
    %2944 = vmatprep.subr.mxu0 0.0
    %2945 = vmatpush2.msra.mxu0 0.0
    %2946 = vmatprep.subr.mxu0 0.0
    %2947 = vmatpush2.msra.mxu0 0.0
    %2948 = vmatprep.subr.mxu0 0.0
    %2949 = vmatpush2.msra.mxu0 0.0
    %2950 = vmatprep.subr.mxu0 0.0
    %2951 = vmatpush2.msra.mxu0 0.0
    %2952 = vmatprep.subr.mxu0 0.0
    %2953 = vmatpush2.msra.mxu0 0.0
    %2954 = vmatprep.subr.mxu0 0.0
    %2955 = vmatpush2.msra.mxu0 0.0
    %2956 = vmatprep.subr.mxu0 0.0
    %2957 = vmatpush2.msra.mxu0 0.0
    %2958 = vmatprep.mubr.f32.mxu0 0.0
    %2959 = vmatmul.mubr.f32.gmra.mxu0 %v2889
    %v2960 = vpop.f32.mrf.mxu0
    %v2961 = vadd.f32 0.0, %v2960
    %v2962 = vpop.f32.mrf.mxu0
    %2963 = vmatprep.mubr.f32.mxu0 0.0
    %2964 = vmatmul.mubr.f32.gmra.mxu0 %v2892
    %v2965 = vpop.f32.mrf.mxu0
    %v2966 = vadd.f32 0.0, %v2965
    %v2967 = vpop.f32.mrf.mxu0
    %2968 = vdwg.mxu0
    %v2970 = vsel %vm340, %v2637, 0
    %v2973 = vsel %vm340, %v2638, 0
    %2975 = vmatprep.subr.mxu0 0.0
    %2976 = vmatpush1.msra.mxu0 0.0
    %2977 = vmatprep.subr.mxu0 0.0
    %2978 = vmatpush1.msra.mxu0 0.0
    %2979 = vmatprep.subr.mxu0 0.0
    %2980 = vmatpush1.msra.mxu0 0.0
    %2981 = vmatprep.subr.mxu0 0.0
    %2982 = vmatpush1.msra.mxu0 0.0
    %2983 = vmatprep.subr.mxu0 0.0
    %2984 = vmatpush1.msra.mxu0 0.0
    %2985 = vmatprep.subr.mxu0 0.0
    %2986 = vmatpush1.msra.mxu0 0.0
    %2987 = vmatprep.subr.mxu0 0.0
    %2988 = vmatpush1.msra.mxu0 0.0
    %2989 = vmatprep.subr.mxu0 0.0
    %2990 = vmatpush1.msra.mxu0 0.0
    %2991 = vmatprep.subr.mxu0 0.0
    %2992 = vmatpush1.msra.mxu0 0.0
    %2993 = vmatprep.subr.mxu0 0.0
    %2994 = vmatpush1.msra.mxu0 0.0
    %2995 = vmatprep.subr.mxu0 0.0
    %2996 = vmatpush1.msra.mxu0 0.0
    %2997 = vmatprep.subr.mxu0 0.0
    %2998 = vmatpush1.msra.mxu0 0.0
    %2999 = vmatprep.subr.mxu0 0.0
    %3000 = vmatpush1.msra.mxu0 0.0
    %3001 = vmatprep.subr.mxu0 0.0
    %3002 = vmatpush1.msra.mxu0 0.0
    %3003 = vmatprep.subr.mxu0 0.0
    %3004 = vmatpush1.msra.mxu0 %v46
    %3005 = vmatprep.subr.mxu0 0.0
    %3006 = vmatpush1.msra.mxu0 %v45
    %3007 = vmatprep.subr.mxu0 0.0
    %3008 = vmatpush2.msra.mxu0 0.0
    %3009 = vmatprep.subr.mxu0 0.0
    %3010 = vmatpush2.msra.mxu0 0.0
    %3011 = vmatprep.subr.mxu0 0.0
    %3012 = vmatpush2.msra.mxu0 0.0
    %3013 = vmatprep.subr.mxu0 0.0
    %3014 = vmatpush2.msra.mxu0 0.0
    %3015 = vmatprep.subr.mxu0 0.0
    %3016 = vmatpush2.msra.mxu0 0.0
    %3017 = vmatprep.subr.mxu0 0.0
    %3018 = vmatpush2.msra.mxu0 0.0
    %3019 = vmatprep.subr.mxu0 0.0
    %3020 = vmatpush2.msra.mxu0 0.0
    %3021 = vmatprep.subr.mxu0 0.0
    %3022 = vmatpush2.msra.mxu0 0.0
    %3023 = vmatprep.subr.mxu0 0.0
    %3024 = vmatpush2.msra.mxu0 0.0
    %3025 = vmatprep.subr.mxu0 0.0
    %3026 = vmatpush2.msra.mxu0 0.0
    %3027 = vmatprep.subr.mxu0 0.0
    %3028 = vmatpush2.msra.mxu0 0.0
    %3029 = vmatprep.subr.mxu0 0.0
    %3030 = vmatpush2.msra.mxu0 0.0
    %3031 = vmatprep.subr.mxu0 0.0
    %3032 = vmatpush2.msra.mxu0 0.0
    %3033 = vmatprep.subr.mxu0 0.0
    %3034 = vmatpush2.msra.mxu0 0.0
    %3035 = vmatprep.subr.mxu0 0.0
    %3036 = vmatpush2.msra.mxu0 0.0
    %3037 = vmatprep.subr.mxu0 0.0
    %3038 = vmatpush2.msra.mxu0 0.0
    %3039 = vmatprep.mubr.f32.mxu0 0.0
    %3040 = vmatmul.mubr.f32.gmra.mxu0 %v2970
    %v3041 = vpop.f32.mrf.mxu0
    %v3042 = vadd.f32 0.0, %v3041
    %v3043 = vpop.f32.mrf.mxu0
    %3044 = vmatprep.mubr.f32.mxu0 0.0
    %3045 = vmatmul.mubr.f32.gmra.mxu0 %v2973
    %v3046 = vpop.f32.mrf.mxu0
    %v3047 = vadd.f32 0.0, %v3046
    %v3048 = vpop.f32.mrf.mxu0
    %3049 = vdwg.mxu0
    %v3051 = vsel %vm340, %v2639, 0
    %v3054 = vsel %vm340, %v2640, 0
    %3056 = vmatprep.subr.mxu0 0.0
    %3057 = vmatpush1.msra.mxu0 0.0
    %3058 = vmatprep.subr.mxu0 0.0
    %3059 = vmatpush1.msra.mxu0 0.0
    %3060 = vmatprep.subr.mxu0 0.0
    %3061 = vmatpush1.msra.mxu0 0.0
    %3062 = vmatprep.subr.mxu0 0.0
    %3063 = vmatpush1.msra.mxu0 0.0
    %3064 = vmatprep.subr.mxu0 0.0
    %3065 = vmatpush1.msra.mxu0 0.0
    %3066 = vmatprep.subr.mxu0 0.0
    %3067 = vmatpush1.msra.mxu0 0.0
    %3068 = vmatprep.subr.mxu0 0.0
    %3069 = vmatpush1.msra.mxu0 0.0
    %3070 = vmatprep.subr.mxu0 0.0
    %3071 = vmatpush1.msra.mxu0 0.0
    %3072 = vmatprep.subr.mxu0 0.0
    %3073 = vmatpush1.msra.mxu0 0.0
    %3074 = vmatprep.subr.mxu0 0.0
    %3075 = vmatpush1.msra.mxu0 0.0
    %3076 = vmatprep.subr.mxu0 0.0
    %3077 = vmatpush1.msra.mxu0 0.0
    %3078 = vmatprep.subr.mxu0 0.0
    %3079 = vmatpush1.msra.mxu0 0.0
    %3080 = vmatprep.subr.mxu0 0.0
    %3081 = vmatpush1.msra.mxu0 0.0
    %3082 = vmatprep.subr.mxu0 0.0
    %3083 = vmatpush1.msra.mxu0 0.0
    %3084 = vmatprep.subr.mxu0 0.0
    %3085 = vmatpush1.msra.mxu0 %v48
    %3086 = vmatprep.subr.mxu0 0.0
    %3087 = vmatpush1.msra.mxu0 %v47
    %3088 = vmatprep.subr.mxu0 0.0
    %3089 = vmatpush2.msra.mxu0 0.0
    %3090 = vmatprep.subr.mxu0 0.0
    %3091 = vmatpush2.msra.mxu0 0.0
    %3092 = vmatprep.subr.mxu0 0.0
    %3093 = vmatpush2.msra.mxu0 0.0
    %3094 = vmatprep.subr.mxu0 0.0
    %3095 = vmatpush2.msra.mxu0 0.0
    %3096 = vmatprep.subr.mxu0 0.0
    %3097 = vmatpush2.msra.mxu0 0.0
    %3098 = vmatprep.subr.mxu0 0.0
    %3099 = vmatpush2.msra.mxu0 0.0
    %3100 = vmatprep.subr.mxu0 0.0
    %3101 = vmatpush2.msra.mxu0 0.0
    %3102 = vmatprep.subr.mxu0 0.0
    %3103 = vmatpush2.msra.mxu0 0.0
    %3104 = vmatprep.subr.mxu0 0.0
    %3105 = vmatpush2.msra.mxu0 0.0
    %3106 = vmatprep.subr.mxu0 0.0
    %3107 = vmatpush2.msra.mxu0 0.0
    %3108 = vmatprep.subr.mxu0 0.0
    %3109 = vmatpush2.msra.mxu0 0.0
    %3110 = vmatprep.subr.mxu0 0.0
    %3111 = vmatpush2.msra.mxu0 0.0
    %3112 = vmatprep.subr.mxu0 0.0
    %3113 = vmatpush2.msra.mxu0 0.0
    %3114 = vmatprep.subr.mxu0 0.0
    %3115 = vmatpush2.msra.mxu0 0.0
    %3116 = vmatprep.subr.mxu0 0.0
    %3117 = vmatpush2.msra.mxu0 0.0
    %3118 = vmatprep.subr.mxu0 0.0
    %3119 = vmatpush2.msra.mxu0 0.0
    %3120 = vmatprep.mubr.f32.mxu0 0.0
    %3121 = vmatmul.mubr.f32.gmra.mxu0 %v3051
    %v3122 = vpop.f32.mrf.mxu0
    %v3123 = vadd.f32 0.0, %v3122
    %v3124 = vpop.f32.mrf.mxu0
    %3125 = vmatprep.mubr.f32.mxu0 0.0
    %3126 = vmatmul.mubr.f32.gmra.mxu0 %v3054
    %v3127 = vpop.f32.mrf.mxu0
    %v3128 = vadd.f32 0.0, %v3127
    %v3129 = vpop.f32.mrf.mxu0
    %3130 = vdwg.mxu0
    %v3132 = vsel %vm340, %v2641, 0
    %v3135 = vsel %vm340, %v2642, 0
    %3137 = vmatprep.subr.mxu0 0.0
    %3138 = vmatpush1.msra.mxu0 0.0
    %3139 = vmatprep.subr.mxu0 0.0
    %3140 = vmatpush1.msra.mxu0 0.0
    %3141 = vmatprep.subr.mxu0 0.0
    %3142 = vmatpush1.msra.mxu0 0.0
    %3143 = vmatprep.subr.mxu0 0.0
    %3144 = vmatpush1.msra.mxu0 0.0
    %3145 = vmatprep.subr.mxu0 0.0
    %3146 = vmatpush1.msra.mxu0 0.0
    %3147 = vmatprep.subr.mxu0 0.0
    %3148 = vmatpush1.msra.mxu0 0.0
    %3149 = vmatprep.subr.mxu0 0.0
    %3150 = vmatpush1.msra.mxu0 0.0
    %3151 = vmatprep.subr.mxu0 0.0
    %3152 = vmatpush1.msra.mxu0 0.0
    %3153 = vmatprep.subr.mxu0 0.0
    %3154 = vmatpush1.msra.mxu0 0.0
    %3155 = vmatprep.subr.mxu0 0.0
    %3156 = vmatpush1.msra.mxu0 0.0
    %3157 = vmatprep.subr.mxu0 0.0
    %3158 = vmatpush1.msra.mxu0 0.0
    %3159 = vmatprep.subr.mxu0 0.0
    %3160 = vmatpush1.msra.mxu0 0.0
    %3161 = vmatprep.subr.mxu0 0.0
    %3162 = vmatpush1.msra.mxu0 0.0
    %3163 = vmatprep.subr.mxu0 0.0
    %3164 = vmatpush1.msra.mxu0 0.0
    %3165 = vmatprep.subr.mxu0 0.0
    %3166 = vmatpush1.msra.mxu0 %v50
    %3167 = vmatprep.subr.mxu0 0.0
    %3168 = vmatpush1.msra.mxu0 %v49
    %3169 = vmatprep.subr.mxu0 0.0
    %3170 = vmatpush2.msra.mxu0 0.0
    %3171 = vmatprep.subr.mxu0 0.0
    %3172 = vmatpush2.msra.mxu0 0.0
    %3173 = vmatprep.subr.mxu0 0.0
    %3174 = vmatpush2.msra.mxu0 0.0
    %3175 = vmatprep.subr.mxu0 0.0
    %3176 = vmatpush2.msra.mxu0 0.0
    %3177 = vmatprep.subr.mxu0 0.0
    %3178 = vmatpush2.msra.mxu0 0.0
    %3179 = vmatprep.subr.mxu0 0.0
    %3180 = vmatpush2.msra.mxu0 0.0
    %3181 = vmatprep.subr.mxu0 0.0
    %3182 = vmatpush2.msra.mxu0 0.0
    %3183 = vmatprep.subr.mxu0 0.0
    %3184 = vmatpush2.msra.mxu0 0.0
    %3185 = vmatprep.subr.mxu0 0.0
    %3186 = vmatpush2.msra.mxu0 0.0
    %3187 = vmatprep.subr.mxu0 0.0
    %3188 = vmatpush2.msra.mxu0 0.0
    %3189 = vmatprep.subr.mxu0 0.0
    %3190 = vmatpush2.msra.mxu0 0.0
    %3191 = vmatprep.subr.mxu0 0.0
    %3192 = vmatpush2.msra.mxu0 0.0
    %3193 = vmatprep.subr.mxu0 0.0
    %3194 = vmatpush2.msra.mxu0 0.0
    %3195 = vmatprep.subr.mxu0 0.0
    %3196 = vmatpush2.msra.mxu0 0.0
    %3197 = vmatprep.subr.mxu0 0.0
    %3198 = vmatpush2.msra.mxu0 0.0
    %3199 = vmatprep.subr.mxu0 0.0
    %3200 = vmatpush2.msra.mxu0 0.0
    %3201 = vmatprep.mubr.f32.mxu0 0.0
    %3202 = vmatmul.mubr.f32.gmra.mxu0 %v3132
    %v3203 = vpop.f32.mrf.mxu0
    %v3204 = vadd.f32 0.0, %v3203
    %v3205 = vpop.f32.mrf.mxu0
    %3206 = vmatprep.mubr.f32.mxu0 0.0
    %3207 = vmatmul.mubr.f32.gmra.mxu0 %v3135
    %v3208 = vpop.f32.mrf.mxu0
    %v3209 = vadd.f32 0.0, %v3208
    %v3210 = vpop.f32.mrf.mxu0
    %3211 = vdwg.mxu0
    %v3213 = vsel %vm340, %v2643, 0
    %v3216 = vsel %vm340, %v2644, 0
    %3218 = vmatprep.subr.mxu0 0.0
    %3219 = vmatpush1.msra.mxu0 0.0
    %3220 = vmatprep.subr.mxu0 0.0
    %3221 = vmatpush1.msra.mxu0 0.0
    %3222 = vmatprep.subr.mxu0 0.0
    %3223 = vmatpush1.msra.mxu0 0.0
    %3224 = vmatprep.subr.mxu0 0.0
    %3225 = vmatpush1.msra.mxu0 0.0
    %3226 = vmatprep.subr.mxu0 0.0
    %3227 = vmatpush1.msra.mxu0 0.0
    %3228 = vmatprep.subr.mxu0 0.0
    %3229 = vmatpush1.msra.mxu0 0.0
    %3230 = vmatprep.subr.mxu0 0.0
    %3231 = vmatpush1.msra.mxu0 0.0
    %3232 = vmatprep.subr.mxu0 0.0
    %3233 = vmatpush1.msra.mxu0 0.0
    %3234 = vmatprep.subr.mxu0 0.0
    %3235 = vmatpush1.msra.mxu0 0.0
    %3236 = vmatprep.subr.mxu0 0.0
    %3237 = vmatpush1.msra.mxu0 0.0
    %3238 = vmatprep.subr.mxu0 0.0
    %3239 = vmatpush1.msra.mxu0 0.0
    %3240 = vmatprep.subr.mxu0 0.0
    %3241 = vmatpush1.msra.mxu0 0.0
    %3242 = vmatprep.subr.mxu0 0.0
    %3243 = vmatpush1.msra.mxu0 0.0
    %3244 = vmatprep.subr.mxu0 0.0
    %3245 = vmatpush1.msra.mxu0 0.0
    %3246 = vmatprep.subr.mxu0 0.0
    %3247 = vmatpush1.msra.mxu0 %v52
    %3248 = vmatprep.subr.mxu0 0.0
    %3249 = vmatpush1.msra.mxu0 %v51
    %3250 = vmatprep.subr.mxu0 0.0
    %3251 = vmatpush2.msra.mxu0 0.0
    %3252 = vmatprep.subr.mxu0 0.0
    %3253 = vmatpush2.msra.mxu0 0.0
    %3254 = vmatprep.subr.mxu0 0.0
    %3255 = vmatpush2.msra.mxu0 0.0
    %3256 = vmatprep.subr.mxu0 0.0
    %3257 = vmatpush2.msra.mxu0 0.0
    %3258 = vmatprep.subr.mxu0 0.0
    %3259 = vmatpush2.msra.mxu0 0.0
    %3260 = vmatprep.subr.mxu0 0.0
    %3261 = vmatpush2.msra.mxu0 0.0
    %3262 = vmatprep.subr.mxu0 0.0
    %3263 = vmatpush2.msra.mxu0 0.0
    %3264 = vmatprep.subr.mxu0 0.0
    %3265 = vmatpush2.msra.mxu0 0.0
    %3266 = vmatprep.subr.mxu0 0.0
    %3267 = vmatpush2.msra.mxu0 0.0
    %3268 = vmatprep.subr.mxu0 0.0
    %3269 = vmatpush2.msra.mxu0 0.0
    %3270 = vmatprep.subr.mxu0 0.0
    %3271 = vmatpush2.msra.mxu0 0.0
    %3272 = vmatprep.subr.mxu0 0.0
    %3273 = vmatpush2.msra.mxu0 0.0
    %3274 = vmatprep.subr.mxu0 0.0
    %3275 = vmatpush2.msra.mxu0 0.0
    %3276 = vmatprep.subr.mxu0 0.0
    %3277 = vmatpush2.msra.mxu0 0.0
    %3278 = vmatprep.subr.mxu0 0.0
    %3279 = vmatpush2.msra.mxu0 0.0
    %3280 = vmatprep.subr.mxu0 0.0
    %3281 = vmatpush2.msra.mxu0 0.0
    %3282 = vmatprep.mubr.f32.mxu0 0.0
    %3283 = vmatmul.mubr.f32.gmra.mxu0 %v3213
    %v3284 = vpop.f32.mrf.mxu0
    %v3285 = vadd.f32 0.0, %v3284
    %v3286 = vpop.f32.mrf.mxu0
    %3287 = vmatprep.mubr.f32.mxu0 0.0
    %3288 = vmatmul.mubr.f32.gmra.mxu0 %v3216
    %v3289 = vpop.f32.mrf.mxu0
    %v3290 = vadd.f32 0.0, %v3289
    %v3291 = vpop.f32.mrf.mxu0
    %3292 = vdwg.mxu0
    %v3293 = vlaneseq
    %v3294 = vshrl.u32 %v3293, 7
    %v3295 = vsub.s32 0, %v3294
    %v3296 = vrot.slane %v56, %v3295
    %v3298 = vsel %vm79, %v2718, 0
    %v3301 = vsel %vm79, %v2723, 0
    %v3304 = vsel %vm79, %v2799, 0
    %v3307 = vsel %vm79, %v2804, 0
    %v3310 = vsel %vm79, %v2880, 0
    %v3313 = vsel %vm79, %v2885, 0
    %v3316 = vsel %vm79, %v2961, 0
    %v3319 = vsel %vm79, %v2966, 0
    %v3322 = vsel %vm79, %v3042, 0
    %v3325 = vsel %vm79, %v3047, 0
    %v3328 = vsel %vm79, %v3123, 0
    %v3331 = vsel %vm79, %v3128, 0
    %v3334 = vsel %vm79, %v3204, 0
    %v3337 = vsel %vm79, %v3209, 0
    %v3340 = vsel %vm79, %v3285, 0
    %v3343 = vsel %vm79, %v3290, 0
    %vm3345 = vcmask 1043456
    %v3347 = vsel %vm3345, %v55, 0
    %3349 = vmatprep.subr.mxu0 0.0
    %3350 = vmatpush1.msra.mxu0 0.0
    %3351 = vmatprep.subr.mxu0 0.0
    %3352 = vmatpush1.msra.mxu0 0.0
    %3353 = vmatprep.subr.mxu0 0.0
    %3354 = vmatpush1.msra.mxu0 0.0
    %3355 = vmatprep.subr.mxu0 0.0
    %3356 = vmatpush1.msra.mxu0 0.0
    %3357 = vmatprep.subr.mxu0 0.0
    %3358 = vmatpush1.msra.mxu0 0.0
    %3359 = vmatprep.subr.mxu0 0.0
    %3360 = vmatpush1.msra.mxu0 0.0
    %3361 = vmatprep.subr.mxu0 0.0
    %3362 = vmatpush1.msra.mxu0 0.0
    %3363 = vmatprep.subr.mxu0 0.0
    %3364 = vmatpush1.msra.mxu0 0.0
    %3365 = vmatprep.subr.mxu0 0.0
    %3366 = vmatpush1.msra.mxu0 0.0
    %3367 = vmatprep.subr.mxu0 0.0
    %3368 = vmatpush1.msra.mxu0 0.0
    %3369 = vmatprep.subr.mxu0 0.0
    %3370 = vmatpush1.msra.mxu0 0.0
    %3371 = vmatprep.subr.mxu0 0.0
    %3372 = vmatpush1.msra.mxu0 0.0
    %3373 = vmatprep.subr.mxu0 0.0
    %3374 = vmatpush1.msra.mxu0 0.0
    %3375 = vmatprep.subr.mxu0 0.0
    %3376 = vmatpush1.msra.mxu0 0.0
    %3377 = vmatprep.subr.mxu0 0.0
    %3378 = vmatpush1.msra.mxu0 0.0
    %3379 = vmatprep.subr.mxu0 0.0
    %3380 = vmatpush1.msra.mxu0 %v3347
    %3381 = vmatprep.subr.mxu0 0.0
    %3382 = vmatpush2.msra.mxu0 0.0
    %3383 = vmatprep.subr.mxu0 0.0
    %3384 = vmatpush2.msra.mxu0 0.0
    %3385 = vmatprep.subr.mxu0 0.0
    %3386 = vmatpush2.msra.mxu0 0.0
    %3387 = vmatprep.subr.mxu0 0.0
    %3388 = vmatpush2.msra.mxu0 0.0
    %3389 = vmatprep.subr.mxu0 0.0
    %3390 = vmatpush2.msra.mxu0 0.0
    %3391 = vmatprep.subr.mxu0 0.0
    %3392 = vmatpush2.msra.mxu0 0.0
    %3393 = vmatprep.subr.mxu0 0.0
    %3394 = vmatpush2.msra.mxu0 0.0
    %3395 = vmatprep.subr.mxu0 0.0
    %3396 = vmatpush2.msra.mxu0 0.0
    %3397 = vmatprep.subr.mxu0 0.0
    %3398 = vmatpush2.msra.mxu0 0.0
    %3399 = vmatprep.subr.mxu0 0.0
    %3400 = vmatpush2.msra.mxu0 0.0
    %3401 = vmatprep.subr.mxu0 0.0
    %3402 = vmatpush2.msra.mxu0 0.0
    %3403 = vmatprep.subr.mxu0 0.0
    %3404 = vmatpush2.msra.mxu0 0.0
    %3405 = vmatprep.subr.mxu0 0.0
    %3406 = vmatpush2.msra.mxu0 0.0
    %3407 = vmatprep.subr.mxu0 0.0
    %3408 = vmatpush2.msra.mxu0 0.0
    %3409 = vmatprep.subr.mxu0 0.0
    %3410 = vmatpush2.msra.mxu0 0.0
    %3411 = vmatprep.subr.mxu0 0.0
    %3412 = vmatpush2.msra.mxu0 0.0
    %3413 = vmatprep.mubr.f32.mxu0 0.0
    %3414 = vmatmul.mubr.f32.gmra.mxu0 %v3298
    %v3415 = vpop.f32.mrf.mxu0
    %v3416 = vadd.f32 %v3296, %v3415
    %v3417 = vpop.f32.mrf.mxu0
    %3418 = vmatprep.mubr.f32.mxu0 0.0
    %3419 = vmatmul.mubr.f32.gmra.mxu0 %v3301
    %v3420 = vpop.f32.mrf.mxu0
    %v3421 = vadd.f32 %v3296, %v3420
    %v3422 = vpop.f32.mrf.mxu0
    %3423 = vmatprep.mubr.f32.mxu0 0.0
    %3424 = vmatmul.mubr.f32.gmra.mxu0 %v3304
    %v3425 = vpop.f32.mrf.mxu0
    %v3426 = vadd.f32 %v3296, %v3425
    %v3427 = vpop.f32.mrf.mxu0
    %3428 = vmatprep.mubr.f32.mxu0 0.0
    %3429 = vmatmul.mubr.f32.gmra.mxu0 %v3307
    %v3430 = vpop.f32.mrf.mxu0
    %v3431 = vadd.f32 %v3296, %v3430
    %v3432 = vpop.f32.mrf.mxu0
    %3433 = vmatprep.mubr.f32.mxu0 0.0
    %3434 = vmatmul.mubr.f32.gmra.mxu0 %v3310
    %v3435 = vpop.f32.mrf.mxu0
    %v3436 = vadd.f32 %v3296, %v3435
    %v3437 = vpop.f32.mrf.mxu0
    %3438 = vmatprep.mubr.f32.mxu0 0.0
    %3439 = vmatmul.mubr.f32.gmra.mxu0 %v3313
    %v3440 = vpop.f32.mrf.mxu0
    %v3441 = vadd.f32 %v3296, %v3440
    %v3442 = vpop.f32.mrf.mxu0
    %3443 = vmatprep.mubr.f32.mxu0 0.0
    %3444 = vmatmul.mubr.f32.gmra.mxu0 %v3316
    %v3445 = vpop.f32.mrf.mxu0
    %v3446 = vadd.f32 %v3296, %v3445
    %v3447 = vpop.f32.mrf.mxu0
    %3448 = vmatprep.mubr.f32.mxu0 0.0
    %3449 = vmatmul.mubr.f32.gmra.mxu0 %v3319
    %v3450 = vpop.f32.mrf.mxu0
    %v3451 = vadd.f32 %v3296, %v3450
    %v3452 = vpop.f32.mrf.mxu0
    %3453 = vmatprep.mubr.f32.mxu0 0.0
    %3454 = vmatmul.mubr.f32.gmra.mxu0 %v3322
    %v3455 = vpop.f32.mrf.mxu0
    %v3456 = vadd.f32 %v3296, %v3455
    %v3457 = vpop.f32.mrf.mxu0
    %3458 = vmatprep.mubr.f32.mxu0 0.0
    %3459 = vmatmul.mubr.f32.gmra.mxu0 %v3325
    %v3460 = vpop.f32.mrf.mxu0
    %v3461 = vadd.f32 %v3296, %v3460
    %v3462 = vpop.f32.mrf.mxu0
    %3463 = vmatprep.mubr.f32.mxu0 0.0
    %3464 = vmatmul.mubr.f32.gmra.mxu0 %v3328
    %v3465 = vpop.f32.mrf.mxu0
    %v3466 = vadd.f32 %v3296, %v3465
    %v3467 = vpop.f32.mrf.mxu0
    %3468 = vmatprep.mubr.f32.mxu0 0.0
    %3469 = vmatmul.mubr.f32.gmra.mxu0 %v3331
    %v3470 = vpop.f32.mrf.mxu0
    %v3471 = vadd.f32 %v3296, %v3470
    %v3472 = vpop.f32.mrf.mxu0
    %3473 = vmatprep.mubr.f32.mxu0 0.0
    %3474 = vmatmul.mubr.f32.gmra.mxu0 %v3334
    %v3475 = vpop.f32.mrf.mxu0
    %v3476 = vadd.f32 %v3296, %v3475
    %v3477 = vpop.f32.mrf.mxu0
    %3478 = vmatprep.mubr.f32.mxu0 0.0
    %3479 = vmatmul.mubr.f32.gmra.mxu0 %v3337
    %v3480 = vpop.f32.mrf.mxu0
    %v3481 = vadd.f32 %v3296, %v3480
    %v3482 = vpop.f32.mrf.mxu0
    %3483 = vmatprep.mubr.f32.mxu0 0.0
    %3484 = vmatmul.mubr.f32.gmra.mxu0 %v3340
    %v3485 = vpop.f32.mrf.mxu0
    %v3486 = vadd.f32 %v3296, %v3485
    %v3487 = vpop.f32.mrf.mxu0
    %3488 = vmatprep.mubr.f32.mxu0 0.0
    %3489 = vmatmul.mubr.f32.gmra.mxu0 %v3343
    %v3490 = vpop.f32.mrf.mxu0
    %v3491 = vadd.f32 %v3296, %v3490
    %v3492 = vpop.f32.mrf.mxu0
    %3493 = vdwg.mxu0
    %v3494 = vmax.f32 %v3416, 0.0
    %v3495 = vmax.f32 %v3421, 0.0
    %v3496 = vmax.f32 %v3426, 0.0
    %v3497 = vmax.f32 %v3431, 0.0
    %v3498 = vmax.f32 %v3436, 0.0
    %v3499 = vmax.f32 %v3441, 0.0
    %v3500 = vmax.f32 %v3446, 0.0
    %v3501 = vmax.f32 %v3451, 0.0
    %v3502 = vmax.f32 %v3456, 0.0
    %v3503 = vmax.f32 %v3461, 0.0
    %v3504 = vmax.f32 %v3466, 0.0
    %v3505 = vmax.f32 %v3471, 0.0
    %v3506 = vmax.f32 %v3476, 0.0
    %v3507 = vmax.f32 %v3481, 0.0
    %v3508 = vmax.f32 %v3486, 0.0
    %v3509 = vmax.f32 %v3491, 0.0
    %v3510 = vld [vmem:[%s2 + $0x30] sm:$0xff]
    %v3511 = vld [vmem:[%s2 + $0x38] sm:$0xff]
    %v3512 = vld [vmem:[%s2 + $0x40] sm:$0x1]
    %v3513 = vld [vmem:[%s2 + $0x58] sm:$0x1]
    %v3514 = vlaneseq
    %v3515 = vshrl.u32 %v3514, 7
    %v3516 = vsub.s32 0, %v3515
    %v3517 = vrot.slane %v3513, %v3516
    %v3518 = vmul.f32 %v3494, %v3517
    %v3519 = vmul.f32 %v3495, %v3517
    %v3520 = vmul.f32 %v3496, %v3517
    %v3521 = vmul.f32 %v3497, %v3517
    %v3522 = vmul.f32 %v3498, %v3517
    %v3523 = vmul.f32 %v3499, %v3517
    %v3524 = vmul.f32 %v3500, %v3517
    %v3525 = vmul.f32 %v3501, %v3517
    %v3526 = vmul.f32 %v3502, %v3517
    %v3527 = vmul.f32 %v3503, %v3517
    %v3528 = vmul.f32 %v3504, %v3517
    %v3529 = vmul.f32 %v3505, %v3517
    %v3530 = vmul.f32 %v3506, %v3517
    %v3531 = vmul.f32 %v3507, %v3517
    %v3532 = vmul.f32 %v3508, %v3517
    %v3533 = vmul.f32 %v3509, %v3517
    %v3534 = vsel %vm1034, %v3518, 0.0
    %3535 = vadd.xlane.f32.xlu0 %v3534
    %v3536 = vpop.xlane.xlu0 %3535
    %v3537 = vsel %vm1034, %v3519, 0.0
    %3538 = vadd.xlane.f32.xlu0 %v3537
    %v3539 = vpop.xlane.xlu0 %3538
    %v3540 = vsel %vm1034, %v3520, 0.0
    %3541 = vadd.xlane.f32.xlu0 %v3540
    %v3542 = vpop.xlane.xlu0 %3541
    %v3543 = vsel %vm1034, %v3521, 0.0
    %3544 = vadd.xlane.f32.xlu0 %v3543
    %v3545 = vpop.xlane.xlu0 %3544
    %v3546 = vsel %vm1034, %v3522, 0.0
    %3547 = vadd.xlane.f32.xlu0 %v3546
    %v3548 = vpop.xlane.xlu0 %3547
    %v3549 = vsel %vm1034, %v3523, 0.0
    %3550 = vadd.xlane.f32.xlu0 %v3549
    %v3551 = vpop.xlane.xlu0 %3550
    %v3552 = vsel %vm1034, %v3524, 0.0
    %3553 = vadd.xlane.f32.xlu0 %v3552
    %v3554 = vpop.xlane.xlu0 %3553
    %v3555 = vsel %vm1034, %v3525, 0.0
    %3556 = vadd.xlane.f32.xlu0 %v3555
    %v3557 = vpop.xlane.xlu0 %3556
    %v3558 = vsel %vm1034, %v3526, 0.0
    %3559 = vadd.xlane.f32.xlu0 %v3558
    %v3560 = vpop.xlane.xlu0 %3559
    %v3561 = vsel %vm1034, %v3527, 0.0
    %3562 = vadd.xlane.f32.xlu0 %v3561
    %v3563 = vpop.xlane.xlu0 %3562
    %v3564 = vsel %vm1034, %v3528, 0.0
    %3565 = vadd.xlane.f32.xlu0 %v3564
    %v3566 = vpop.xlane.xlu0 %3565
    %v3567 = vsel %vm1034, %v3529, 0.0
    %3568 = vadd.xlane.f32.xlu0 %v3567
    %v3569 = vpop.xlane.xlu0 %3568
    %v3570 = vsel %vm1034, %v3530, 0.0
    %3571 = vadd.xlane.f32.xlu0 %v3570
    %v3572 = vpop.xlane.xlu0 %3571
    %v3573 = vsel %vm1034, %v3531, 0.0
    %3574 = vadd.xlane.f32.xlu0 %v3573
    %v3575 = vpop.xlane.xlu0 %3574
    %v3576 = vsel %vm1034, %v3532, 0.0
    %3577 = vadd.xlane.f32.xlu0 %v3576
    %v3578 = vpop.xlane.xlu0 %3577
    %v3579 = vsel %vm1034, %v3533, 0.0
    %3580 = vadd.xlane.f32.xlu0 %v3579
    %v3581 = vpop.xlane.xlu0 %3580
    %v3598 = vlaneseq
    %v3599 = vshrl.u32 %v3598, 7
    %v3600 = vsub.s32 %v183, %v3599
    %v3601 = vrot.slane %v3536, %v3600
    %v3602 = vlaneseq
    %v3603 = vshrl.u32 %v3602, 7
    %v3604 = vsub.s32 %v188, %v3603
    %v3605 = vrot.slane %v3539, %v3604
    %v3606 = vsel %vm193, %v3605, %v3601
    %v3607 = vlaneseq
    %v3608 = vshrl.u32 %v3607, 7
    %v3609 = vsub.s32 %v183, %v3608
    %v3610 = vrot.slane %v3542, %v3609
    %v3611 = vlaneseq
    %v3612 = vshrl.u32 %v3611, 7
    %v3613 = vsub.s32 %v188, %v3612
    %v3614 = vrot.slane %v3545, %v3613
    %v3615 = vsel %vm193, %v3614, %v3610
    %v3616 = vlaneseq
    %v3617 = vshrl.u32 %v3616, 7
    %v3618 = vsub.s32 %v183, %v3617
    %v3619 = vrot.slane %v3548, %v3618
    %v3620 = vlaneseq
    %v3621 = vshrl.u32 %v3620, 7
    %v3622 = vsub.s32 %v188, %v3621
    %v3623 = vrot.slane %v3551, %v3622
    %v3624 = vsel %vm193, %v3623, %v3619
    %v3625 = vlaneseq
    %v3626 = vshrl.u32 %v3625, 7
    %v3627 = vsub.s32 %v183, %v3626
    %v3628 = vrot.slane %v3554, %v3627
    %v3629 = vlaneseq
    %v3630 = vshrl.u32 %v3629, 7
    %v3631 = vsub.s32 %v188, %v3630
    %v3632 = vrot.slane %v3557, %v3631
    %v3633 = vsel %vm193, %v3632, %v3628
    %v3634 = vlaneseq
    %v3635 = vshrl.u32 %v3634, 7
    %v3636 = vsub.s32 %v183, %v3635
    %v3637 = vrot.slane %v3560, %v3636
    %v3638 = vlaneseq
    %v3639 = vshrl.u32 %v3638, 7
    %v3640 = vsub.s32 %v188, %v3639
    %v3641 = vrot.slane %v3563, %v3640
    %v3642 = vsel %vm193, %v3641, %v3637
    %v3643 = vlaneseq
    %v3644 = vshrl.u32 %v3643, 7
    %v3645 = vsub.s32 %v183, %v3644
    %v3646 = vrot.slane %v3566, %v3645
    %v3647 = vlaneseq
    %v3648 = vshrl.u32 %v3647, 7
    %v3649 = vsub.s32 %v188, %v3648
    %v3650 = vrot.slane %v3569, %v3649
    %v3651 = vsel %vm193, %v3650, %v3646
    %v3652 = vlaneseq
    %v3653 = vshrl.u32 %v3652, 7
    %v3654 = vsub.s32 %v183, %v3653
    %v3655 = vrot.slane %v3572, %v3654
    %v3656 = vlaneseq
    %v3657 = vshrl.u32 %v3656, 7
    %v3658 = vsub.s32 %v188, %v3657
    %v3659 = vrot.slane %v3575, %v3658
    %v3660 = vsel %vm193, %v3659, %v3655
    %v3661 = vlaneseq
    %v3662 = vshrl.u32 %v3661, 7
    %v3663 = vsub.s32 %v183, %v3662
    %v3664 = vrot.slane %v3578, %v3663
    %v3665 = vlaneseq
    %v3666 = vshrl.u32 %v3665, 7
    %v3667 = vsub.s32 %v188, %v3666
    %v3668 = vrot.slane %v3581, %v3667
    %v3669 = vsel %vm193, %v3668, %v3664
    %v3670 = vsel %vm259, %v3606, %v3606
    %v3671 = vsel %vm261, %v3606, %v3670
    %v3672 = vsel %vm263, %v3606, %v3671
    %v3673 = vsel %vm265, %v3606, %v3672
    %v3674 = vsel %vm267, %v3606, %v3673
    %v3675 = vsel %vm269, %v3606, %v3674
    %v3676 = vsel %vm259, %v3615, %v3615
    %v3677 = vsel %vm261, %v3615, %v3676
    %v3678 = vsel %vm263, %v3615, %v3677
    %v3679 = vsel %vm265, %v3615, %v3678
    %v3680 = vsel %vm267, %v3615, %v3679
    %v3681 = vsel %vm269, %v3615, %v3680
    %v3682 = vsel %vm259, %v3624, %v3624
    %v3683 = vsel %vm261, %v3624, %v3682
    %v3684 = vsel %vm263, %v3624, %v3683
    %v3685 = vsel %vm265, %v3624, %v3684
    %v3686 = vsel %vm267, %v3624, %v3685
    %v3687 = vsel %vm269, %v3624, %v3686
    %v3688 = vsel %vm259, %v3633, %v3633
    %v3689 = vsel %vm261, %v3633, %v3688
    %v3690 = vsel %vm263, %v3633, %v3689
    %v3691 = vsel %vm265, %v3633, %v3690
    %v3692 = vsel %vm267, %v3633, %v3691
    %v3693 = vsel %vm269, %v3633, %v3692
    %v3694 = vsel %vm259, %v3642, %v3642
    %v3695 = vsel %vm261, %v3642, %v3694
    %v3696 = vsel %vm263, %v3642, %v3695
    %v3697 = vsel %vm265, %v3642, %v3696
    %v3698 = vsel %vm267, %v3642, %v3697
    %v3699 = vsel %vm269, %v3642, %v3698
    %v3700 = vsel %vm259, %v3651, %v3651
    %v3701 = vsel %vm261, %v3651, %v3700
    %v3702 = vsel %vm263, %v3651, %v3701
    %v3703 = vsel %vm265, %v3651, %v3702
    %v3704 = vsel %vm267, %v3651, %v3703
    %v3705 = vsel %vm269, %v3651, %v3704
    %v3706 = vsel %vm259, %v3660, %v3660
    %v3707 = vsel %vm261, %v3660, %v3706
    %v3708 = vsel %vm263, %v3660, %v3707
    %v3709 = vsel %vm265, %v3660, %v3708
    %v3710 = vsel %vm267, %v3660, %v3709
    %v3711 = vsel %vm269, %v3660, %v3710
    %v3712 = vsel %vm259, %v3669, %v3669
    %v3713 = vsel %vm261, %v3669, %v3712
    %v3714 = vsel %vm263, %v3669, %v3713
    %v3715 = vsel %vm265, %v3669, %v3714
    %v3716 = vsel %vm267, %v3669, %v3715
    %v3717 = vsel %vm269, %v3669, %v3716
    %v3726 = vmul.f32 %v29, %v3675
    %v3727 = vmul.f32 %v30, %v3681
    %v3728 = vmul.f32 %v31, %v3687
    %v3729 = vmul.f32 %v32, %v3693
    %v3730 = vmul.f32 %v33, %v3699
    %v3731 = vmul.f32 %v34, %v3705
    %v3732 = vmul.f32 %v35, %v3711
    %v3733 = vmul.f32 %v36, %v3717
    %3735 = vrot.lane.b32.xlu0 %v3726, 114
    %v3736 = vpop.permute.xlu0 %3735
    %v3737 = vsel %vm340, %v3736, 0
    %3739 = vmatprep.subr.mxu0 0.0
    %3740 = vmatpush1.msra.mxu0 0.0
    %3741 = vmatprep.subr.mxu0 0.0
    %3742 = vmatpush1.msra.mxu0 0.0
    %3743 = vmatprep.subr.mxu0 0.0
    %3744 = vmatpush1.msra.mxu0 0.0
    %3745 = vmatprep.subr.mxu0 0.0
    %3746 = vmatpush1.msra.mxu0 0.0
    %3747 = vmatprep.subr.mxu0 0.0
    %3748 = vmatpush1.msra.mxu0 0.0
    %3749 = vmatprep.subr.mxu0 0.0
    %3750 = vmatpush1.msra.mxu0 0.0
    %3751 = vmatprep.subr.mxu0 0.0
    %3752 = vmatpush1.msra.mxu0 0.0
    %3753 = vmatprep.subr.mxu0 0.0
    %3754 = vmatpush1.msra.mxu0 0.0
    %3755 = vmatprep.subr.mxu0 0.0
    %3756 = vmatpush1.msra.mxu0 0.0
    %3757 = vmatprep.subr.mxu0 0.0
    %3758 = vmatpush1.msra.mxu0 0.0
    %3759 = vmatprep.subr.mxu0 0.0
    %3760 = vmatpush1.msra.mxu0 0.0
    %3761 = vmatprep.subr.mxu0 0.0
    %3762 = vmatpush1.msra.mxu0 0.0
    %3763 = vmatprep.subr.mxu0 0.0
    %3764 = vmatpush1.msra.mxu0 0.0
    %3765 = vmatprep.subr.mxu0 0.0
    %3766 = vmatpush1.msra.mxu0 0.0
    %3767 = vmatprep.subr.mxu0 0.0
    %3768 = vmatpush1.msra.mxu0 %v337
    %3769 = vmatprep.subr.mxu0 0.0
    %3770 = vmatpush1.msra.mxu0 %v335
    %3771 = vmatprep.subr.mxu0 0.0
    %3772 = vmatpush2.msra.mxu0 0.0
    %3773 = vmatprep.subr.mxu0 0.0
    %3774 = vmatpush2.msra.mxu0 0.0
    %3775 = vmatprep.subr.mxu0 0.0
    %3776 = vmatpush2.msra.mxu0 0.0
    %3777 = vmatprep.subr.mxu0 0.0
    %3778 = vmatpush2.msra.mxu0 0.0
    %3779 = vmatprep.subr.mxu0 0.0
    %3780 = vmatpush2.msra.mxu0 0.0
    %3781 = vmatprep.subr.mxu0 0.0
    %3782 = vmatpush2.msra.mxu0 0.0
    %3783 = vmatprep.subr.mxu0 0.0
    %3784 = vmatpush2.msra.mxu0 0.0
    %3785 = vmatprep.subr.mxu0 0.0
    %3786 = vmatpush2.msra.mxu0 0.0
    %3787 = vmatprep.subr.mxu0 0.0
    %3788 = vmatpush2.msra.mxu0 0.0
    %3789 = vmatprep.subr.mxu0 0.0
    %3790 = vmatpush2.msra.mxu0 0.0
    %3791 = vmatprep.subr.mxu0 0.0
    %3792 = vmatpush2.msra.mxu0 0.0
    %3793 = vmatprep.subr.mxu0 0.0
    %3794 = vmatpush2.msra.mxu0 0.0
    %3795 = vmatprep.subr.mxu0 0.0
    %3796 = vmatpush2.msra.mxu0 0.0
    %3797 = vmatprep.subr.mxu0 0.0
    %3798 = vmatpush2.msra.mxu0 0.0
    %3799 = vmatprep.subr.mxu0 0.0
    %3800 = vmatpush2.msra.mxu0 0.0
    %3801 = vmatprep.subr.mxu0 0.0
    %3802 = vmatpush2.msra.mxu0 0.0
    %3803 = vmatprep.mubr.f32.mxu0 0.0
    %3804 = vmatmul.mubr.f32.gmra.mxu0 %v3737
    %v3805 = vpop.f32.mrf.mxu0
    %v3806 = vadd.f32 0.0, %v3805
    %v3807 = vpop.f32.mrf.mxu0
    %3808 = vdwg.mxu0
    %3810 = vrot.lane.b32.xlu0 %v3727, 114
    %v3811 = vpop.permute.xlu0 %3810
    %v3812 = vsel %vm340, %v3811, 0
    %3814 = vmatprep.subr.mxu0 0.0
    %3815 = vmatpush1.msra.mxu0 0.0
    %3816 = vmatprep.subr.mxu0 0.0
    %3817 = vmatpush1.msra.mxu0 0.0
    %3818 = vmatprep.subr.mxu0 0.0
    %3819 = vmatpush1.msra.mxu0 0.0
    %3820 = vmatprep.subr.mxu0 0.0
    %3821 = vmatpush1.msra.mxu0 0.0
    %3822 = vmatprep.subr.mxu0 0.0
    %3823 = vmatpush1.msra.mxu0 0.0
    %3824 = vmatprep.subr.mxu0 0.0
    %3825 = vmatpush1.msra.mxu0 0.0
    %3826 = vmatprep.subr.mxu0 0.0
    %3827 = vmatpush1.msra.mxu0 0.0
    %3828 = vmatprep.subr.mxu0 0.0
    %3829 = vmatpush1.msra.mxu0 0.0
    %3830 = vmatprep.subr.mxu0 0.0
    %3831 = vmatpush1.msra.mxu0 0.0
    %3832 = vmatprep.subr.mxu0 0.0
    %3833 = vmatpush1.msra.mxu0 0.0
    %3834 = vmatprep.subr.mxu0 0.0
    %3835 = vmatpush1.msra.mxu0 0.0
    %3836 = vmatprep.subr.mxu0 0.0
    %3837 = vmatpush1.msra.mxu0 0.0
    %3838 = vmatprep.subr.mxu0 0.0
    %3839 = vmatpush1.msra.mxu0 0.0
    %3840 = vmatprep.subr.mxu0 0.0
    %3841 = vmatpush1.msra.mxu0 0.0
    %3842 = vmatprep.subr.mxu0 0.0
    %3843 = vmatpush1.msra.mxu0 %v421
    %3844 = vmatprep.subr.mxu0 0.0
    %3845 = vmatpush1.msra.mxu0 %v419
    %3846 = vmatprep.subr.mxu0 0.0
    %3847 = vmatpush2.msra.mxu0 0.0
    %3848 = vmatprep.subr.mxu0 0.0
    %3849 = vmatpush2.msra.mxu0 0.0
    %3850 = vmatprep.subr.mxu0 0.0
    %3851 = vmatpush2.msra.mxu0 0.0
    %3852 = vmatprep.subr.mxu0 0.0
    %3853 = vmatpush2.msra.mxu0 0.0
    %3854 = vmatprep.subr.mxu0 0.0
    %3855 = vmatpush2.msra.mxu0 0.0
    %3856 = vmatprep.subr.mxu0 0.0
    %3857 = vmatpush2.msra.mxu0 0.0
    %3858 = vmatprep.subr.mxu0 0.0
    %3859 = vmatpush2.msra.mxu0 0.0
    %3860 = vmatprep.subr.mxu0 0.0
    %3861 = vmatpush2.msra.mxu0 0.0
    %3862 = vmatprep.subr.mxu0 0.0
    %3863 = vmatpush2.msra.mxu0 0.0
    %3864 = vmatprep.subr.mxu0 0.0
    %3865 = vmatpush2.msra.mxu0 0.0
    %3866 = vmatprep.subr.mxu0 0.0
    %3867 = vmatpush2.msra.mxu0 0.0
    %3868 = vmatprep.subr.mxu0 0.0
    %3869 = vmatpush2.msra.mxu0 0.0
    %3870 = vmatprep.subr.mxu0 0.0
    %3871 = vmatpush2.msra.mxu0 0.0
    %3872 = vmatprep.subr.mxu0 0.0
    %3873 = vmatpush2.msra.mxu0 0.0
    %3874 = vmatprep.subr.mxu0 0.0
    %3875 = vmatpush2.msra.mxu0 0.0
    %3876 = vmatprep.subr.mxu0 0.0
    %3877 = vmatpush2.msra.mxu0 0.0
    %3878 = vmatprep.mubr.f32.mxu0 0.0
    %3879 = vmatmul.mubr.f32.gmra.mxu0 %v3812
    %v3880 = vpop.f32.mrf.mxu0
    %v3881 = vadd.f32 0.0, %v3880
    %v3882 = vpop.f32.mrf.mxu0
    %3883 = vdwg.mxu0
    %3885 = vrot.lane.b32.xlu0 %v3728, 114
    %v3886 = vpop.permute.xlu0 %3885
    %v3887 = vsel %vm340, %v3886, 0
    %3889 = vmatprep.subr.mxu0 0.0
    %3890 = vmatpush1.msra.mxu0 0.0
    %3891 = vmatprep.subr.mxu0 0.0
    %3892 = vmatpush1.msra.mxu0 0.0
    %3893 = vmatprep.subr.mxu0 0.0
    %3894 = vmatpush1.msra.mxu0 0.0
    %3895 = vmatprep.subr.mxu0 0.0
    %3896 = vmatpush1.msra.mxu0 0.0
    %3897 = vmatprep.subr.mxu0 0.0
    %3898 = vmatpush1.msra.mxu0 0.0
    %3899 = vmatprep.subr.mxu0 0.0
    %3900 = vmatpush1.msra.mxu0 0.0
    %3901 = vmatprep.subr.mxu0 0.0
    %3902 = vmatpush1.msra.mxu0 0.0
    %3903 = vmatprep.subr.mxu0 0.0
    %3904 = vmatpush1.msra.mxu0 0.0
    %3905 = vmatprep.subr.mxu0 0.0
    %3906 = vmatpush1.msra.mxu0 0.0
    %3907 = vmatprep.subr.mxu0 0.0
    %3908 = vmatpush1.msra.mxu0 0.0
    %3909 = vmatprep.subr.mxu0 0.0
    %3910 = vmatpush1.msra.mxu0 0.0
    %3911 = vmatprep.subr.mxu0 0.0
    %3912 = vmatpush1.msra.mxu0 0.0
    %3913 = vmatprep.subr.mxu0 0.0
    %3914 = vmatpush1.msra.mxu0 0.0
    %3915 = vmatprep.subr.mxu0 0.0
    %3916 = vmatpush1.msra.mxu0 0.0
    %3917 = vmatprep.subr.mxu0 0.0
    %3918 = vmatpush1.msra.mxu0 %v504
    %3919 = vmatprep.subr.mxu0 0.0
    %3920 = vmatpush1.msra.mxu0 %v502
    %3921 = vmatprep.subr.mxu0 0.0
    %3922 = vmatpush2.msra.mxu0 0.0
    %3923 = vmatprep.subr.mxu0 0.0
    %3924 = vmatpush2.msra.mxu0 0.0
    %3925 = vmatprep.subr.mxu0 0.0
    %3926 = vmatpush2.msra.mxu0 0.0
    %3927 = vmatprep.subr.mxu0 0.0
    %3928 = vmatpush2.msra.mxu0 0.0
    %3929 = vmatprep.subr.mxu0 0.0
    %3930 = vmatpush2.msra.mxu0 0.0
    %3931 = vmatprep.subr.mxu0 0.0
    %3932 = vmatpush2.msra.mxu0 0.0
    %3933 = vmatprep.subr.mxu0 0.0
    %3934 = vmatpush2.msra.mxu0 0.0
    %3935 = vmatprep.subr.mxu0 0.0
    %3936 = vmatpush2.msra.mxu0 0.0
    %3937 = vmatprep.subr.mxu0 0.0
    %3938 = vmatpush2.msra.mxu0 0.0
    %3939 = vmatprep.subr.mxu0 0.0
    %3940 = vmatpush2.msra.mxu0 0.0
    %3941 = vmatprep.subr.mxu0 0.0
    %3942 = vmatpush2.msra.mxu0 0.0
    %3943 = vmatprep.subr.mxu0 0.0
    %3944 = vmatpush2.msra.mxu0 0.0
    %3945 = vmatprep.subr.mxu0 0.0
    %3946 = vmatpush2.msra.mxu0 0.0
    %3947 = vmatprep.subr.mxu0 0.0
    %3948 = vmatpush2.msra.mxu0 0.0
    %3949 = vmatprep.subr.mxu0 0.0
    %3950 = vmatpush2.msra.mxu0 0.0
    %3951 = vmatprep.subr.mxu0 0.0
    %3952 = vmatpush2.msra.mxu0 0.0
    %3953 = vmatprep.mubr.f32.mxu0 0.0
    %3954 = vmatmul.mubr.f32.gmra.mxu0 %v3887
    %v3955 = vpop.f32.mrf.mxu0
    %v3956 = vadd.f32 0.0, %v3955
    %v3957 = vpop.f32.mrf.mxu0
    %3958 = vdwg.mxu0
    %3960 = vrot.lane.b32.xlu0 %v3729, 114
    %v3961 = vpop.permute.xlu0 %3960
    %v3962 = vsel %vm340, %v3961, 0
    %3964 = vmatprep.subr.mxu0 0.0
    %3965 = vmatpush1.msra.mxu0 0.0
    %3966 = vmatprep.subr.mxu0 0.0
    %3967 = vmatpush1.msra.mxu0 0.0
    %3968 = vmatprep.subr.mxu0 0.0
    %3969 = vmatpush1.msra.mxu0 0.0
    %3970 = vmatprep.subr.mxu0 0.0
    %3971 = vmatpush1.msra.mxu0 0.0
    %3972 = vmatprep.subr.mxu0 0.0
    %3973 = vmatpush1.msra.mxu0 0.0
    %3974 = vmatprep.subr.mxu0 0.0
    %3975 = vmatpush1.msra.mxu0 0.0
    %3976 = vmatprep.subr.mxu0 0.0
    %3977 = vmatpush1.msra.mxu0 0.0
    %3978 = vmatprep.subr.mxu0 0.0
    %3979 = vmatpush1.msra.mxu0 0.0
    %3980 = vmatprep.subr.mxu0 0.0
    %3981 = vmatpush1.msra.mxu0 0.0
    %3982 = vmatprep.subr.mxu0 0.0
    %3983 = vmatpush1.msra.mxu0 0.0
    %3984 = vmatprep.subr.mxu0 0.0
    %3985 = vmatpush1.msra.mxu0 0.0
    %3986 = vmatprep.subr.mxu0 0.0
    %3987 = vmatpush1.msra.mxu0 0.0
    %3988 = vmatprep.subr.mxu0 0.0
    %3989 = vmatpush1.msra.mxu0 0.0
    %3990 = vmatprep.subr.mxu0 0.0
    %3991 = vmatpush1.msra.mxu0 0.0
    %3992 = vmatprep.subr.mxu0 0.0
    %3993 = vmatpush1.msra.mxu0 %v587
    %3994 = vmatprep.subr.mxu0 0.0
    %3995 = vmatpush1.msra.mxu0 %v585
    %3996 = vmatprep.subr.mxu0 0.0
    %3997 = vmatpush2.msra.mxu0 0.0
    %3998 = vmatprep.subr.mxu0 0.0
    %3999 = vmatpush2.msra.mxu0 0.0
    %4000 = vmatprep.subr.mxu0 0.0
    %4001 = vmatpush2.msra.mxu0 0.0
    %4002 = vmatprep.subr.mxu0 0.0
    %4003 = vmatpush2.msra.mxu0 0.0
    %4004 = vmatprep.subr.mxu0 0.0
    %4005 = vmatpush2.msra.mxu0 0.0
    %4006 = vmatprep.subr.mxu0 0.0
    %4007 = vmatpush2.msra.mxu0 0.0
    %4008 = vmatprep.subr.mxu0 0.0
    %4009 = vmatpush2.msra.mxu0 0.0
    %4010 = vmatprep.subr.mxu0 0.0
    %4011 = vmatpush2.msra.mxu0 0.0
    %4012 = vmatprep.subr.mxu0 0.0
    %4013 = vmatpush2.msra.mxu0 0.0
    %4014 = vmatprep.subr.mxu0 0.0
    %4015 = vmatpush2.msra.mxu0 0.0
    %4016 = vmatprep.subr.mxu0 0.0
    %4017 = vmatpush2.msra.mxu0 0.0
    %4018 = vmatprep.subr.mxu0 0.0
    %4019 = vmatpush2.msra.mxu0 0.0
    %4020 = vmatprep.subr.mxu0 0.0
    %4021 = vmatpush2.msra.mxu0 0.0
    %4022 = vmatprep.subr.mxu0 0.0
    %4023 = vmatpush2.msra.mxu0 0.0
    %4024 = vmatprep.subr.mxu0 0.0
    %4025 = vmatpush2.msra.mxu0 0.0
    %4026 = vmatprep.subr.mxu0 0.0
    %4027 = vmatpush2.msra.mxu0 0.0
    %4028 = vmatprep.mubr.f32.mxu0 0.0
    %4029 = vmatmul.mubr.f32.gmra.mxu0 %v3962
    %v4030 = vpop.f32.mrf.mxu0
    %v4031 = vadd.f32 0.0, %v4030
    %v4032 = vpop.f32.mrf.mxu0
    %4033 = vdwg.mxu0
    %4035 = vrot.lane.b32.xlu0 %v3730, 114
    %v4036 = vpop.permute.xlu0 %4035
    %v4037 = vsel %vm340, %v4036, 0
    %4039 = vmatprep.subr.mxu0 0.0
    %4040 = vmatpush1.msra.mxu0 0.0
    %4041 = vmatprep.subr.mxu0 0.0
    %4042 = vmatpush1.msra.mxu0 0.0
    %4043 = vmatprep.subr.mxu0 0.0
    %4044 = vmatpush1.msra.mxu0 0.0
    %4045 = vmatprep.subr.mxu0 0.0
    %4046 = vmatpush1.msra.mxu0 0.0
    %4047 = vmatprep.subr.mxu0 0.0
    %4048 = vmatpush1.msra.mxu0 0.0
    %4049 = vmatprep.subr.mxu0 0.0
    %4050 = vmatpush1.msra.mxu0 0.0
    %4051 = vmatprep.subr.mxu0 0.0
    %4052 = vmatpush1.msra.mxu0 0.0
    %4053 = vmatprep.subr.mxu0 0.0
    %4054 = vmatpush1.msra.mxu0 0.0
    %4055 = vmatprep.subr.mxu0 0.0
    %4056 = vmatpush1.msra.mxu0 0.0
    %4057 = vmatprep.subr.mxu0 0.0
    %4058 = vmatpush1.msra.mxu0 0.0
    %4059 = vmatprep.subr.mxu0 0.0
    %4060 = vmatpush1.msra.mxu0 0.0
    %4061 = vmatprep.subr.mxu0 0.0
    %4062 = vmatpush1.msra.mxu0 0.0
    %4063 = vmatprep.subr.mxu0 0.0
    %4064 = vmatpush1.msra.mxu0 0.0
    %4065 = vmatprep.subr.mxu0 0.0
    %4066 = vmatpush1.msra.mxu0 0.0
    %4067 = vmatprep.subr.mxu0 0.0
    %4068 = vmatpush1.msra.mxu0 %v670
    %4069 = vmatprep.subr.mxu0 0.0
    %4070 = vmatpush1.msra.mxu0 %v668
    %4071 = vmatprep.subr.mxu0 0.0
    %4072 = vmatpush2.msra.mxu0 0.0
    %4073 = vmatprep.subr.mxu0 0.0
    %4074 = vmatpush2.msra.mxu0 0.0
    %4075 = vmatprep.subr.mxu0 0.0
    %4076 = vmatpush2.msra.mxu0 0.0
    %4077 = vmatprep.subr.mxu0 0.0
    %4078 = vmatpush2.msra.mxu0 0.0
    %4079 = vmatprep.subr.mxu0 0.0
    %4080 = vmatpush2.msra.mxu0 0.0
    %4081 = vmatprep.subr.mxu0 0.0
    %4082 = vmatpush2.msra.mxu0 0.0
    %4083 = vmatprep.subr.mxu0 0.0
    %4084 = vmatpush2.msra.mxu0 0.0
    %4085 = vmatprep.subr.mxu0 0.0
    %4086 = vmatpush2.msra.mxu0 0.0
    %4087 = vmatprep.subr.mxu0 0.0
    %4088 = vmatpush2.msra.mxu0 0.0
    %4089 = vmatprep.subr.mxu0 0.0
    %4090 = vmatpush2.msra.mxu0 0.0
    %4091 = vmatprep.subr.mxu0 0.0
    %4092 = vmatpush2.msra.mxu0 0.0
    %4093 = vmatprep.subr.mxu0 0.0
    %4094 = vmatpush2.msra.mxu0 0.0
    %4095 = vmatprep.subr.mxu0 0.0
    %4096 = vmatpush2.msra.mxu0 0.0
    %4097 = vmatprep.subr.mxu0 0.0
    %4098 = vmatpush2.msra.mxu0 0.0
    %4099 = vmatprep.subr.mxu0 0.0
    %4100 = vmatpush2.msra.mxu0 0.0
    %4101 = vmatprep.subr.mxu0 0.0
    %4102 = vmatpush2.msra.mxu0 0.0
    %4103 = vmatprep.mubr.f32.mxu0 0.0
    %4104 = vmatmul.mubr.f32.gmra.mxu0 %v4037
    %v4105 = vpop.f32.mrf.mxu0
    %v4106 = vadd.f32 0.0, %v4105
    %v4107 = vpop.f32.mrf.mxu0
    %4108 = vdwg.mxu0
    %4110 = vrot.lane.b32.xlu0 %v3731, 114
    %v4111 = vpop.permute.xlu0 %4110
    %v4112 = vsel %vm340, %v4111, 0
    %4114 = vmatprep.subr.mxu0 0.0
    %4115 = vmatpush1.msra.mxu0 0.0
    %4116 = vmatprep.subr.mxu0 0.0
    %4117 = vmatpush1.msra.mxu0 0.0
    %4118 = vmatprep.subr.mxu0 0.0
    %4119 = vmatpush1.msra.mxu0 0.0
    %4120 = vmatprep.subr.mxu0 0.0
    %4121 = vmatpush1.msra.mxu0 0.0
    %4122 = vmatprep.subr.mxu0 0.0
    %4123 = vmatpush1.msra.mxu0 0.0
    %4124 = vmatprep.subr.mxu0 0.0
    %4125 = vmatpush1.msra.mxu0 0.0
    %4126 = vmatprep.subr.mxu0 0.0
    %4127 = vmatpush1.msra.mxu0 0.0
    %4128 = vmatprep.subr.mxu0 0.0
    %4129 = vmatpush1.msra.mxu0 0.0
    %4130 = vmatprep.subr.mxu0 0.0
    %4131 = vmatpush1.msra.mxu0 0.0
    %4132 = vmatprep.subr.mxu0 0.0
    %4133 = vmatpush1.msra.mxu0 0.0
    %4134 = vmatprep.subr.mxu0 0.0
    %4135 = vmatpush1.msra.mxu0 0.0
    %4136 = vmatprep.subr.mxu0 0.0
    %4137 = vmatpush1.msra.mxu0 0.0
    %4138 = vmatprep.subr.mxu0 0.0
    %4139 = vmatpush1.msra.mxu0 0.0
    %4140 = vmatprep.subr.mxu0 0.0
    %4141 = vmatpush1.msra.mxu0 0.0
    %4142 = vmatprep.subr.mxu0 0.0
    %4143 = vmatpush1.msra.mxu0 %v753
    %4144 = vmatprep.subr.mxu0 0.0
    %4145 = vmatpush1.msra.mxu0 %v751
    %4146 = vmatprep.subr.mxu0 0.0
    %4147 = vmatpush2.msra.mxu0 0.0
    %4148 = vmatprep.subr.mxu0 0.0
    %4149 = vmatpush2.msra.mxu0 0.0
    %4150 = vmatprep.subr.mxu0 0.0
    %4151 = vmatpush2.msra.mxu0 0.0
    %4152 = vmatprep.subr.mxu0 0.0
    %4153 = vmatpush2.msra.mxu0 0.0
    %4154 = vmatprep.subr.mxu0 0.0
    %4155 = vmatpush2.msra.mxu0 0.0
    %4156 = vmatprep.subr.mxu0 0.0
    %4157 = vmatpush2.msra.mxu0 0.0
    %4158 = vmatprep.subr.mxu0 0.0
    %4159 = vmatpush2.msra.mxu0 0.0
    %4160 = vmatprep.subr.mxu0 0.0
    %4161 = vmatpush2.msra.mxu0 0.0
    %4162 = vmatprep.subr.mxu0 0.0
    %4163 = vmatpush2.msra.mxu0 0.0
    %4164 = vmatprep.subr.mxu0 0.0
    %4165 = vmatpush2.msra.mxu0 0.0
    %4166 = vmatprep.subr.mxu0 0.0
    %4167 = vmatpush2.msra.mxu0 0.0
    %4168 = vmatprep.subr.mxu0 0.0
    %4169 = vmatpush2.msra.mxu0 0.0
    %4170 = vmatprep.subr.mxu0 0.0
    %4171 = vmatpush2.msra.mxu0 0.0
    %4172 = vmatprep.subr.mxu0 0.0
    %4173 = vmatpush2.msra.mxu0 0.0
    %4174 = vmatprep.subr.mxu0 0.0
    %4175 = vmatpush2.msra.mxu0 0.0
    %4176 = vmatprep.subr.mxu0 0.0
    %4177 = vmatpush2.msra.mxu0 0.0
    %4178 = vmatprep.mubr.f32.mxu0 0.0
    %4179 = vmatmul.mubr.f32.gmra.mxu0 %v4112
    %v4180 = vpop.f32.mrf.mxu0
    %v4181 = vadd.f32 0.0, %v4180
    %v4182 = vpop.f32.mrf.mxu0
    %4183 = vdwg.mxu0
    %4185 = vrot.lane.b32.xlu0 %v3732, 114
    %v4186 = vpop.permute.xlu0 %4185
    %v4187 = vsel %vm340, %v4186, 0
    %4189 = vmatprep.subr.mxu0 0.0
    %4190 = vmatpush1.msra.mxu0 0.0
    %4191 = vmatprep.subr.mxu0 0.0
    %4192 = vmatpush1.msra.mxu0 0.0
    %4193 = vmatprep.subr.mxu0 0.0
    %4194 = vmatpush1.msra.mxu0 0.0
    %4195 = vmatprep.subr.mxu0 0.0
    %4196 = vmatpush1.msra.mxu0 0.0
    %4197 = vmatprep.subr.mxu0 0.0
    %4198 = vmatpush1.msra.mxu0 0.0
    %4199 = vmatprep.subr.mxu0 0.0
    %4200 = vmatpush1.msra.mxu0 0.0
    %4201 = vmatprep.subr.mxu0 0.0
    %4202 = vmatpush1.msra.mxu0 0.0
    %4203 = vmatprep.subr.mxu0 0.0
    %4204 = vmatpush1.msra.mxu0 0.0
    %4205 = vmatprep.subr.mxu0 0.0
    %4206 = vmatpush1.msra.mxu0 0.0
    %4207 = vmatprep.subr.mxu0 0.0
    %4208 = vmatpush1.msra.mxu0 0.0
    %4209 = vmatprep.subr.mxu0 0.0
    %4210 = vmatpush1.msra.mxu0 0.0
    %4211 = vmatprep.subr.mxu0 0.0
    %4212 = vmatpush1.msra.mxu0 0.0
    %4213 = vmatprep.subr.mxu0 0.0
    %4214 = vmatpush1.msra.mxu0 0.0
    %4215 = vmatprep.subr.mxu0 0.0
    %4216 = vmatpush1.msra.mxu0 0.0
    %4217 = vmatprep.subr.mxu0 0.0
    %4218 = vmatpush1.msra.mxu0 %v836
    %4219 = vmatprep.subr.mxu0 0.0
    %4220 = vmatpush1.msra.mxu0 %v834
    %4221 = vmatprep.subr.mxu0 0.0
    %4222 = vmatpush2.msra.mxu0 0.0
    %4223 = vmatprep.subr.mxu0 0.0
    %4224 = vmatpush2.msra.mxu0 0.0
    %4225 = vmatprep.subr.mxu0 0.0
    %4226 = vmatpush2.msra.mxu0 0.0
    %4227 = vmatprep.subr.mxu0 0.0
    %4228 = vmatpush2.msra.mxu0 0.0
    %4229 = vmatprep.subr.mxu0 0.0
    %4230 = vmatpush2.msra.mxu0 0.0
    %4231 = vmatprep.subr.mxu0 0.0
    %4232 = vmatpush2.msra.mxu0 0.0
    %4233 = vmatprep.subr.mxu0 0.0
    %4234 = vmatpush2.msra.mxu0 0.0
    %4235 = vmatprep.subr.mxu0 0.0
    %4236 = vmatpush2.msra.mxu0 0.0
    %4237 = vmatprep.subr.mxu0 0.0
    %4238 = vmatpush2.msra.mxu0 0.0
    %4239 = vmatprep.subr.mxu0 0.0
    %4240 = vmatpush2.msra.mxu0 0.0
    %4241 = vmatprep.subr.mxu0 0.0
    %4242 = vmatpush2.msra.mxu0 0.0
    %4243 = vmatprep.subr.mxu0 0.0
    %4244 = vmatpush2.msra.mxu0 0.0
    %4245 = vmatprep.subr.mxu0 0.0
    %4246 = vmatpush2.msra.mxu0 0.0
    %4247 = vmatprep.subr.mxu0 0.0
    %4248 = vmatpush2.msra.mxu0 0.0
    %4249 = vmatprep.subr.mxu0 0.0
    %4250 = vmatpush2.msra.mxu0 0.0
    %4251 = vmatprep.subr.mxu0 0.0
    %4252 = vmatpush2.msra.mxu0 0.0
    %4253 = vmatprep.mubr.f32.mxu0 0.0
    %4254 = vmatmul.mubr.f32.gmra.mxu0 %v4187
    %v4255 = vpop.f32.mrf.mxu0
    %v4256 = vadd.f32 0.0, %v4255
    %v4257 = vpop.f32.mrf.mxu0
    %4258 = vdwg.mxu0
    %4260 = vrot.lane.b32.xlu0 %v3733, 114
    %v4261 = vpop.permute.xlu0 %4260
    %v4262 = vsel %vm340, %v4261, 0
    %4264 = vmatprep.subr.mxu0 0.0
    %4265 = vmatpush1.msra.mxu0 0.0
    %4266 = vmatprep.subr.mxu0 0.0
    %4267 = vmatpush1.msra.mxu0 0.0
    %4268 = vmatprep.subr.mxu0 0.0
    %4269 = vmatpush1.msra.mxu0 0.0
    %4270 = vmatprep.subr.mxu0 0.0
    %4271 = vmatpush1.msra.mxu0 0.0
    %4272 = vmatprep.subr.mxu0 0.0
    %4273 = vmatpush1.msra.mxu0 0.0
    %4274 = vmatprep.subr.mxu0 0.0
    %4275 = vmatpush1.msra.mxu0 0.0
    %4276 = vmatprep.subr.mxu0 0.0
    %4277 = vmatpush1.msra.mxu0 0.0
    %4278 = vmatprep.subr.mxu0 0.0
    %4279 = vmatpush1.msra.mxu0 0.0
    %4280 = vmatprep.subr.mxu0 0.0
    %4281 = vmatpush1.msra.mxu0 0.0
    %4282 = vmatprep.subr.mxu0 0.0
    %4283 = vmatpush1.msra.mxu0 0.0
    %4284 = vmatprep.subr.mxu0 0.0
    %4285 = vmatpush1.msra.mxu0 0.0
    %4286 = vmatprep.subr.mxu0 0.0
    %4287 = vmatpush1.msra.mxu0 0.0
    %4288 = vmatprep.subr.mxu0 0.0
    %4289 = vmatpush1.msra.mxu0 0.0
    %4290 = vmatprep.subr.mxu0 0.0
    %4291 = vmatpush1.msra.mxu0 0.0
    %4292 = vmatprep.subr.mxu0 0.0
    %4293 = vmatpush1.msra.mxu0 %v919
    %4294 = vmatprep.subr.mxu0 0.0
    %4295 = vmatpush1.msra.mxu0 %v917
    %4296 = vmatprep.subr.mxu0 0.0
    %4297 = vmatpush2.msra.mxu0 0.0
    %4298 = vmatprep.subr.mxu0 0.0
    %4299 = vmatpush2.msra.mxu0 0.0
    %4300 = vmatprep.subr.mxu0 0.0
    %4301 = vmatpush2.msra.mxu0 0.0
    %4302 = vmatprep.subr.mxu0 0.0
    %4303 = vmatpush2.msra.mxu0 0.0
    %4304 = vmatprep.subr.mxu0 0.0
    %4305 = vmatpush2.msra.mxu0 0.0
    %4306 = vmatprep.subr.mxu0 0.0
    %4307 = vmatpush2.msra.mxu0 0.0
    %4308 = vmatprep.subr.mxu0 0.0
    %4309 = vmatpush2.msra.mxu0 0.0
    %4310 = vmatprep.subr.mxu0 0.0
    %4311 = vmatpush2.msra.mxu0 0.0
    %4312 = vmatprep.subr.mxu0 0.0
    %4313 = vmatpush2.msra.mxu0 0.0
    %4314 = vmatprep.subr.mxu0 0.0
    %4315 = vmatpush2.msra.mxu0 0.0
    %4316 = vmatprep.subr.mxu0 0.0
    %4317 = vmatpush2.msra.mxu0 0.0
    %4318 = vmatprep.subr.mxu0 0.0
    %4319 = vmatpush2.msra.mxu0 0.0
    %4320 = vmatprep.subr.mxu0 0.0
    %4321 = vmatpush2.msra.mxu0 0.0
    %4322 = vmatprep.subr.mxu0 0.0
    %4323 = vmatpush2.msra.mxu0 0.0
    %4324 = vmatprep.subr.mxu0 0.0
    %4325 = vmatpush2.msra.mxu0 0.0
    %4326 = vmatprep.subr.mxu0 0.0
    %4327 = vmatpush2.msra.mxu0 0.0
    %4328 = vmatprep.mubr.f32.mxu0 0.0
    %4329 = vmatmul.mubr.f32.gmra.mxu0 %v4262
    %v4330 = vpop.f32.mrf.mxu0
    %v4331 = vadd.f32 0.0, %v4330
    %v4332 = vpop.f32.mrf.mxu0
    %4333 = vdwg.mxu0
    %v4334 = vmul.f32 %v3806, %v1003
    %v4335 = vmul.f32 %v3881, %v1005
    %v4336 = vmul.f32 %v3956, %v1007
    %v4337 = vmul.f32 %v4031, %v1009
    %v4338 = vmul.f32 %v4106, %v1011
    %v4339 = vmul.f32 %v4181, %v1013
    %v4340 = vmul.f32 %v4256, %v1015
    %v4341 = vmul.f32 %v4331, %v1017
    %v4343 = vsel %vm1034, %v4334, 0
    %4345 = vmatprep.subr.mxu0 0.0
    %4346 = vmatpush1.msra.mxu0 0.0
    %4347 = vmatprep.subr.mxu0 0.0
    %4348 = vmatpush1.msra.mxu0 0.0
    %4349 = vmatprep.subr.mxu0 0.0
    %4350 = vmatpush1.msra.mxu0 0.0
    %4351 = vmatprep.subr.mxu0 0.0
    %4352 = vmatpush1.msra.mxu0 0.0
    %4353 = vmatprep.subr.mxu0 0.0
    %4354 = vmatpush1.msra.mxu0 0.0
    %4355 = vmatprep.subr.mxu0 0.0
    %4356 = vmatpush1.msra.mxu0 0.0
    %4357 = vmatprep.subr.mxu0 0.0
    %4358 = vmatpush1.msra.mxu0 0.0
    %4359 = vmatprep.subr.mxu0 0.0
    %4360 = vmatpush1.msra.mxu0 0.0
    %4361 = vmatprep.subr.mxu0 0.0
    %4362 = vmatpush1.msra.mxu0 0.0
    %4363 = vmatprep.subr.mxu0 0.0
    %4364 = vmatpush1.msra.mxu0 0.0
    %4365 = vmatprep.subr.mxu0 0.0
    %4366 = vmatpush1.msra.mxu0 0.0
    %4367 = vmatprep.subr.mxu0 0.0
    %4368 = vmatpush1.msra.mxu0 0.0
    %4369 = vmatprep.subr.mxu0 0.0
    %4370 = vmatpush1.msra.mxu0 0.0
    %4371 = vmatprep.subr.mxu0 0.0
    %4372 = vmatpush1.msra.mxu0 0.0
    %4373 = vmatprep.subr.mxu0 0.0
    %4374 = vmatpush1.msra.mxu0 0.0
    %4375 = vmatprep.subr.mxu0 0.0
    %4376 = vmatpush1.msra.mxu0 %v1756
    %4377 = vmatprep.subr.mxu0 0.0
    %4378 = vmatpush2.msra.mxu0 0.0
    %4379 = vmatprep.subr.mxu0 0.0
    %4380 = vmatpush2.msra.mxu0 0.0
    %4381 = vmatprep.subr.mxu0 0.0
    %4382 = vmatpush2.msra.mxu0 0.0
    %4383 = vmatprep.subr.mxu0 0.0
    %4384 = vmatpush2.msra.mxu0 0.0
    %4385 = vmatprep.subr.mxu0 0.0
    %4386 = vmatpush2.msra.mxu0 0.0
    %4387 = vmatprep.subr.mxu0 0.0
    %4388 = vmatpush2.msra.mxu0 0.0
    %4389 = vmatprep.subr.mxu0 0.0
    %4390 = vmatpush2.msra.mxu0 0.0
    %4391 = vmatprep.subr.mxu0 0.0
    %4392 = vmatpush2.msra.mxu0 0.0
    %4393 = vmatprep.subr.mxu0 0.0
    %4394 = vmatpush2.msra.mxu0 0.0
    %4395 = vmatprep.subr.mxu0 0.0
    %4396 = vmatpush2.msra.mxu0 0.0
    %4397 = vmatprep.subr.mxu0 0.0
    %4398 = vmatpush2.msra.mxu0 0.0
    %4399 = vmatprep.subr.mxu0 0.0
    %4400 = vmatpush2.msra.mxu0 0.0
    %4401 = vmatprep.subr.mxu0 0.0
    %4402 = vmatpush2.msra.mxu0 0.0
    %4403 = vmatprep.subr.mxu0 0.0
    %4404 = vmatpush2.msra.mxu0 0.0
    %4405 = vmatprep.subr.mxu0 0.0
    %4406 = vmatpush2.msra.mxu0 0.0
    %4407 = vmatprep.subr.mxu0 0.0
    %4408 = vmatpush2.msra.mxu0 0.0
    %4409 = vmatprep.mubr.f32.mxu0 0.0
    %4410 = vmatmul.mubr.f32.gmra.mxu0 %v4343
    %v4411 = vpop.f32.mrf.mxu0
    %v4412 = vadd.f32 0.0, %v4411
    %v4413 = vpop.f32.mrf.mxu0
    %4414 = vdwg.mxu0
    %v4416 = vsel %vm1034, %v4335, 0
    %4418 = vmatprep.subr.mxu0 0.0
    %4419 = vmatpush1.msra.mxu0 0.0
    %4420 = vmatprep.subr.mxu0 0.0
    %4421 = vmatpush1.msra.mxu0 0.0
    %4422 = vmatprep.subr.mxu0 0.0
    %4423 = vmatpush1.msra.mxu0 0.0
    %4424 = vmatprep.subr.mxu0 0.0
    %4425 = vmatpush1.msra.mxu0 0.0
    %4426 = vmatprep.subr.mxu0 0.0
    %4427 = vmatpush1.msra.mxu0 0.0
    %4428 = vmatprep.subr.mxu0 0.0
    %4429 = vmatpush1.msra.mxu0 0.0
    %4430 = vmatprep.subr.mxu0 0.0
    %4431 = vmatpush1.msra.mxu0 0.0
    %4432 = vmatprep.subr.mxu0 0.0
    %4433 = vmatpush1.msra.mxu0 0.0
    %4434 = vmatprep.subr.mxu0 0.0
    %4435 = vmatpush1.msra.mxu0 0.0
    %4436 = vmatprep.subr.mxu0 0.0
    %4437 = vmatpush1.msra.mxu0 0.0
    %4438 = vmatprep.subr.mxu0 0.0
    %4439 = vmatpush1.msra.mxu0 0.0
    %4440 = vmatprep.subr.mxu0 0.0
    %4441 = vmatpush1.msra.mxu0 0.0
    %4442 = vmatprep.subr.mxu0 0.0
    %4443 = vmatpush1.msra.mxu0 0.0
    %4444 = vmatprep.subr.mxu0 0.0
    %4445 = vmatpush1.msra.mxu0 0.0
    %4446 = vmatprep.subr.mxu0 0.0
    %4447 = vmatpush1.msra.mxu0 0.0
    %4448 = vmatprep.subr.mxu0 0.0
    %4449 = vmatpush1.msra.mxu0 %v1757
    %4450 = vmatprep.subr.mxu0 0.0
    %4451 = vmatpush2.msra.mxu0 0.0
    %4452 = vmatprep.subr.mxu0 0.0
    %4453 = vmatpush2.msra.mxu0 0.0
    %4454 = vmatprep.subr.mxu0 0.0
    %4455 = vmatpush2.msra.mxu0 0.0
    %4456 = vmatprep.subr.mxu0 0.0
    %4457 = vmatpush2.msra.mxu0 0.0
    %4458 = vmatprep.subr.mxu0 0.0
    %4459 = vmatpush2.msra.mxu0 0.0
    %4460 = vmatprep.subr.mxu0 0.0
    %4461 = vmatpush2.msra.mxu0 0.0
    %4462 = vmatprep.subr.mxu0 0.0
    %4463 = vmatpush2.msra.mxu0 0.0
    %4464 = vmatprep.subr.mxu0 0.0
    %4465 = vmatpush2.msra.mxu0 0.0
    %4466 = vmatprep.subr.mxu0 0.0
    %4467 = vmatpush2.msra.mxu0 0.0
    %4468 = vmatprep.subr.mxu0 0.0
    %4469 = vmatpush2.msra.mxu0 0.0
    %4470 = vmatprep.subr.mxu0 0.0
    %4471 = vmatpush2.msra.mxu0 0.0
    %4472 = vmatprep.subr.mxu0 0.0
    %4473 = vmatpush2.msra.mxu0 0.0
    %4474 = vmatprep.subr.mxu0 0.0
    %4475 = vmatpush2.msra.mxu0 0.0
    %4476 = vmatprep.subr.mxu0 0.0
    %4477 = vmatpush2.msra.mxu0 0.0
    %4478 = vmatprep.subr.mxu0 0.0
    %4479 = vmatpush2.msra.mxu0 0.0
    %4480 = vmatprep.subr.mxu0 0.0
    %4481 = vmatpush2.msra.mxu0 0.0
    %4482 = vmatprep.mubr.f32.mxu0 0.0
    %4483 = vmatmul.mubr.f32.gmra.mxu0 %v4416
    %v4484 = vpop.f32.mrf.mxu0
    %v4485 = vadd.f32 0.0, %v4484
    %v4486 = vpop.f32.mrf.mxu0
    %4487 = vdwg.mxu0
    %v4489 = vsel %vm1034, %v4336, 0
    %4491 = vmatprep.subr.mxu0 0.0
    %4492 = vmatpush1.msra.mxu0 0.0
    %4493 = vmatprep.subr.mxu0 0.0
    %4494 = vmatpush1.msra.mxu0 0.0
    %4495 = vmatprep.subr.mxu0 0.0
    %4496 = vmatpush1.msra.mxu0 0.0
    %4497 = vmatprep.subr.mxu0 0.0
    %4498 = vmatpush1.msra.mxu0 0.0
    %4499 = vmatprep.subr.mxu0 0.0
    %4500 = vmatpush1.msra.mxu0 0.0
    %4501 = vmatprep.subr.mxu0 0.0
    %4502 = vmatpush1.msra.mxu0 0.0
    %4503 = vmatprep.subr.mxu0 0.0
    %4504 = vmatpush1.msra.mxu0 0.0
    %4505 = vmatprep.subr.mxu0 0.0
    %4506 = vmatpush1.msra.mxu0 0.0
    %4507 = vmatprep.subr.mxu0 0.0
    %4508 = vmatpush1.msra.mxu0 0.0
    %4509 = vmatprep.subr.mxu0 0.0
    %4510 = vmatpush1.msra.mxu0 0.0
    %4511 = vmatprep.subr.mxu0 0.0
    %4512 = vmatpush1.msra.mxu0 0.0
    %4513 = vmatprep.subr.mxu0 0.0
    %4514 = vmatpush1.msra.mxu0 0.0
    %4515 = vmatprep.subr.mxu0 0.0
    %4516 = vmatpush1.msra.mxu0 0.0
    %4517 = vmatprep.subr.mxu0 0.0
    %4518 = vmatpush1.msra.mxu0 0.0
    %4519 = vmatprep.subr.mxu0 0.0
    %4520 = vmatpush1.msra.mxu0 0.0
    %4521 = vmatprep.subr.mxu0 0.0
    %4522 = vmatpush1.msra.mxu0 %v1758
    %4523 = vmatprep.subr.mxu0 0.0
    %4524 = vmatpush2.msra.mxu0 0.0
    %4525 = vmatprep.subr.mxu0 0.0
    %4526 = vmatpush2.msra.mxu0 0.0
    %4527 = vmatprep.subr.mxu0 0.0
    %4528 = vmatpush2.msra.mxu0 0.0
    %4529 = vmatprep.subr.mxu0 0.0
    %4530 = vmatpush2.msra.mxu0 0.0
    %4531 = vmatprep.subr.mxu0 0.0
    %4532 = vmatpush2.msra.mxu0 0.0
    %4533 = vmatprep.subr.mxu0 0.0
    %4534 = vmatpush2.msra.mxu0 0.0
    %4535 = vmatprep.subr.mxu0 0.0
    %4536 = vmatpush2.msra.mxu0 0.0
    %4537 = vmatprep.subr.mxu0 0.0
    %4538 = vmatpush2.msra.mxu0 0.0
    %4539 = vmatprep.subr.mxu0 0.0
    %4540 = vmatpush2.msra.mxu0 0.0
    %4541 = vmatprep.subr.mxu0 0.0
    %4542 = vmatpush2.msra.mxu0 0.0
    %4543 = vmatprep.subr.mxu0 0.0
    %4544 = vmatpush2.msra.mxu0 0.0
    %4545 = vmatprep.subr.mxu0 0.0
    %4546 = vmatpush2.msra.mxu0 0.0
    %4547 = vmatprep.subr.mxu0 0.0
    %4548 = vmatpush2.msra.mxu0 0.0
    %4549 = vmatprep.subr.mxu0 0.0
    %4550 = vmatpush2.msra.mxu0 0.0
    %4551 = vmatprep.subr.mxu0 0.0
    %4552 = vmatpush2.msra.mxu0 0.0
    %4553 = vmatprep.subr.mxu0 0.0
    %4554 = vmatpush2.msra.mxu0 0.0
    %4555 = vmatprep.mubr.f32.mxu0 0.0
    %4556 = vmatmul.mubr.f32.gmra.mxu0 %v4489
    %v4557 = vpop.f32.mrf.mxu0
    %v4558 = vadd.f32 0.0, %v4557
    %v4559 = vpop.f32.mrf.mxu0
    %4560 = vdwg.mxu0
    %v4562 = vsel %vm1034, %v4337, 0
    %4564 = vmatprep.subr.mxu0 0.0
    %4565 = vmatpush1.msra.mxu0 0.0
    %4566 = vmatprep.subr.mxu0 0.0
    %4567 = vmatpush1.msra.mxu0 0.0
    %4568 = vmatprep.subr.mxu0 0.0
    %4569 = vmatpush1.msra.mxu0 0.0
    %4570 = vmatprep.subr.mxu0 0.0
    %4571 = vmatpush1.msra.mxu0 0.0
    %4572 = vmatprep.subr.mxu0 0.0
    %4573 = vmatpush1.msra.mxu0 0.0
    %4574 = vmatprep.subr.mxu0 0.0
    %4575 = vmatpush1.msra.mxu0 0.0
    %4576 = vmatprep.subr.mxu0 0.0
    %4577 = vmatpush1.msra.mxu0 0.0
    %4578 = vmatprep.subr.mxu0 0.0
    %4579 = vmatpush1.msra.mxu0 0.0
    %4580 = vmatprep.subr.mxu0 0.0
    %4581 = vmatpush1.msra.mxu0 0.0
    %4582 = vmatprep.subr.mxu0 0.0
    %4583 = vmatpush1.msra.mxu0 0.0
    %4584 = vmatprep.subr.mxu0 0.0
    %4585 = vmatpush1.msra.mxu0 0.0
    %4586 = vmatprep.subr.mxu0 0.0
    %4587 = vmatpush1.msra.mxu0 0.0
    %4588 = vmatprep.subr.mxu0 0.0
    %4589 = vmatpush1.msra.mxu0 0.0
    %4590 = vmatprep.subr.mxu0 0.0
    %4591 = vmatpush1.msra.mxu0 0.0
    %4592 = vmatprep.subr.mxu0 0.0
    %4593 = vmatpush1.msra.mxu0 0.0
    %4594 = vmatprep.subr.mxu0 0.0
    %4595 = vmatpush1.msra.mxu0 %v1759
    %4596 = vmatprep.subr.mxu0 0.0
    %4597 = vmatpush2.msra.mxu0 0.0
    %4598 = vmatprep.subr.mxu0 0.0
    %4599 = vmatpush2.msra.mxu0 0.0
    %4600 = vmatprep.subr.mxu0 0.0
    %4601 = vmatpush2.msra.mxu0 0.0
    %4602 = vmatprep.subr.mxu0 0.0
    %4603 = vmatpush2.msra.mxu0 0.0
    %4604 = vmatprep.subr.mxu0 0.0
    %4605 = vmatpush2.msra.mxu0 0.0
    %4606 = vmatprep.subr.mxu0 0.0
    %4607 = vmatpush2.msra.mxu0 0.0
    %4608 = vmatprep.subr.mxu0 0.0
    %4609 = vmatpush2.msra.mxu0 0.0
    %4610 = vmatprep.subr.mxu0 0.0
    %4611 = vmatpush2.msra.mxu0 0.0
    %4612 = vmatprep.subr.mxu0 0.0
    %4613 = vmatpush2.msra.mxu0 0.0
    %4614 = vmatprep.subr.mxu0 0.0
    %4615 = vmatpush2.msra.mxu0 0.0
    %4616 = vmatprep.subr.mxu0 0.0
    %4617 = vmatpush2.msra.mxu0 0.0
    %4618 = vmatprep.subr.mxu0 0.0
    %4619 = vmatpush2.msra.mxu0 0.0
    %4620 = vmatprep.subr.mxu0 0.0
    %4621 = vmatpush2.msra.mxu0 0.0
    %4622 = vmatprep.subr.mxu0 0.0
    %4623 = vmatpush2.msra.mxu0 0.0
    %4624 = vmatprep.subr.mxu0 0.0
    %4625 = vmatpush2.msra.mxu0 0.0
    %4626 = vmatprep.subr.mxu0 0.0
    %4627 = vmatpush2.msra.mxu0 0.0
    %4628 = vmatprep.mubr.f32.mxu0 0.0
    %4629 = vmatmul.mubr.f32.gmra.mxu0 %v4562
    %v4630 = vpop.f32.mrf.mxu0
    %v4631 = vadd.f32 0.0, %v4630
    %v4632 = vpop.f32.mrf.mxu0
    %4633 = vdwg.mxu0
    %v4635 = vsel %vm1034, %v4338, 0
    %4637 = vmatprep.subr.mxu0 0.0
    %4638 = vmatpush1.msra.mxu0 0.0
    %4639 = vmatprep.subr.mxu0 0.0
    %4640 = vmatpush1.msra.mxu0 0.0
    %4641 = vmatprep.subr.mxu0 0.0
    %4642 = vmatpush1.msra.mxu0 0.0
    %4643 = vmatprep.subr.mxu0 0.0
    %4644 = vmatpush1.msra.mxu0 0.0
    %4645 = vmatprep.subr.mxu0 0.0
    %4646 = vmatpush1.msra.mxu0 0.0
    %4647 = vmatprep.subr.mxu0 0.0
    %4648 = vmatpush1.msra.mxu0 0.0
    %4649 = vmatprep.subr.mxu0 0.0
    %4650 = vmatpush1.msra.mxu0 0.0
    %4651 = vmatprep.subr.mxu0 0.0
    %4652 = vmatpush1.msra.mxu0 0.0
    %4653 = vmatprep.subr.mxu0 0.0
    %4654 = vmatpush1.msra.mxu0 0.0
    %4655 = vmatprep.subr.mxu0 0.0
    %4656 = vmatpush1.msra.mxu0 0.0
    %4657 = vmatprep.subr.mxu0 0.0
    %4658 = vmatpush1.msra.mxu0 0.0
    %4659 = vmatprep.subr.mxu0 0.0
    %4660 = vmatpush1.msra.mxu0 0.0
    %4661 = vmatprep.subr.mxu0 0.0
    %4662 = vmatpush1.msra.mxu0 0.0
    %4663 = vmatprep.subr.mxu0 0.0
    %4664 = vmatpush1.msra.mxu0 0.0
    %4665 = vmatprep.subr.mxu0 0.0
    %4666 = vmatpush1.msra.mxu0 0.0
    %4667 = vmatprep.subr.mxu0 0.0
    %4668 = vmatpush1.msra.mxu0 %v1760
    %4669 = vmatprep.subr.mxu0 0.0
    %4670 = vmatpush2.msra.mxu0 0.0
    %4671 = vmatprep.subr.mxu0 0.0
    %4672 = vmatpush2.msra.mxu0 0.0
    %4673 = vmatprep.subr.mxu0 0.0
    %4674 = vmatpush2.msra.mxu0 0.0
    %4675 = vmatprep.subr.mxu0 0.0
    %4676 = vmatpush2.msra.mxu0 0.0
    %4677 = vmatprep.subr.mxu0 0.0
    %4678 = vmatpush2.msra.mxu0 0.0
    %4679 = vmatprep.subr.mxu0 0.0
    %4680 = vmatpush2.msra.mxu0 0.0
    %4681 = vmatprep.subr.mxu0 0.0
    %4682 = vmatpush2.msra.mxu0 0.0
    %4683 = vmatprep.subr.mxu0 0.0
    %4684 = vmatpush2.msra.mxu0 0.0
    %4685 = vmatprep.subr.mxu0 0.0
    %4686 = vmatpush2.msra.mxu0 0.0
    %4687 = vmatprep.subr.mxu0 0.0
    %4688 = vmatpush2.msra.mxu0 0.0
    %4689 = vmatprep.subr.mxu0 0.0
    %4690 = vmatpush2.msra.mxu0 0.0
    %4691 = vmatprep.subr.mxu0 0.0
    %4692 = vmatpush2.msra.mxu0 0.0
    %4693 = vmatprep.subr.mxu0 0.0
    %4694 = vmatpush2.msra.mxu0 0.0
    %4695 = vmatprep.subr.mxu0 0.0
    %4696 = vmatpush2.msra.mxu0 0.0
    %4697 = vmatprep.subr.mxu0 0.0
    %4698 = vmatpush2.msra.mxu0 0.0
    %4699 = vmatprep.subr.mxu0 0.0
    %4700 = vmatpush2.msra.mxu0 0.0
    %4701 = vmatprep.mubr.f32.mxu0 0.0
    %4702 = vmatmul.mubr.f32.gmra.mxu0 %v4635
    %v4703 = vpop.f32.mrf.mxu0
    %v4704 = vadd.f32 0.0, %v4703
    %v4705 = vpop.f32.mrf.mxu0
    %4706 = vdwg.mxu0
    %v4708 = vsel %vm1034, %v4339, 0
    %4710 = vmatprep.subr.mxu0 0.0
    %4711 = vmatpush1.msra.mxu0 0.0
    %4712 = vmatprep.subr.mxu0 0.0
    %4713 = vmatpush1.msra.mxu0 0.0
    %4714 = vmatprep.subr.mxu0 0.0
    %4715 = vmatpush1.msra.mxu0 0.0
    %4716 = vmatprep.subr.mxu0 0.0
    %4717 = vmatpush1.msra.mxu0 0.0
    %4718 = vmatprep.subr.mxu0 0.0
    %4719 = vmatpush1.msra.mxu0 0.0
    %4720 = vmatprep.subr.mxu0 0.0
    %4721 = vmatpush1.msra.mxu0 0.0
    %4722 = vmatprep.subr.mxu0 0.0
    %4723 = vmatpush1.msra.mxu0 0.0
    %4724 = vmatprep.subr.mxu0 0.0
    %4725 = vmatpush1.msra.mxu0 0.0
    %4726 = vmatprep.subr.mxu0 0.0
    %4727 = vmatpush1.msra.mxu0 0.0
    %4728 = vmatprep.subr.mxu0 0.0
    %4729 = vmatpush1.msra.mxu0 0.0
    %4730 = vmatprep.subr.mxu0 0.0
    %4731 = vmatpush1.msra.mxu0 0.0
    %4732 = vmatprep.subr.mxu0 0.0
    %4733 = vmatpush1.msra.mxu0 0.0
    %4734 = vmatprep.subr.mxu0 0.0
    %4735 = vmatpush1.msra.mxu0 0.0
    %4736 = vmatprep.subr.mxu0 0.0
    %4737 = vmatpush1.msra.mxu0 0.0
    %4738 = vmatprep.subr.mxu0 0.0
    %4739 = vmatpush1.msra.mxu0 0.0
    %4740 = vmatprep.subr.mxu0 0.0
    %4741 = vmatpush1.msra.mxu0 %v1761
    %4742 = vmatprep.subr.mxu0 0.0
    %4743 = vmatpush2.msra.mxu0 0.0
    %4744 = vmatprep.subr.mxu0 0.0
    %4745 = vmatpush2.msra.mxu0 0.0
    %4746 = vmatprep.subr.mxu0 0.0
    %4747 = vmatpush2.msra.mxu0 0.0
    %4748 = vmatprep.subr.mxu0 0.0
    %4749 = vmatpush2.msra.mxu0 0.0
    %4750 = vmatprep.subr.mxu0 0.0
    %4751 = vmatpush2.msra.mxu0 0.0
    %4752 = vmatprep.subr.mxu0 0.0
    %4753 = vmatpush2.msra.mxu0 0.0
    %4754 = vmatprep.subr.mxu0 0.0
    %4755 = vmatpush2.msra.mxu0 0.0
    %4756 = vmatprep.subr.mxu0 0.0
    %4757 = vmatpush2.msra.mxu0 0.0
    %4758 = vmatprep.subr.mxu0 0.0
    %4759 = vmatpush2.msra.mxu0 0.0
    %4760 = vmatprep.subr.mxu0 0.0
    %4761 = vmatpush2.msra.mxu0 0.0
    %4762 = vmatprep.subr.mxu0 0.0
    %4763 = vmatpush2.msra.mxu0 0.0
    %4764 = vmatprep.subr.mxu0 0.0
    %4765 = vmatpush2.msra.mxu0 0.0
    %4766 = vmatprep.subr.mxu0 0.0
    %4767 = vmatpush2.msra.mxu0 0.0
    %4768 = vmatprep.subr.mxu0 0.0
    %4769 = vmatpush2.msra.mxu0 0.0
    %4770 = vmatprep.subr.mxu0 0.0
    %4771 = vmatpush2.msra.mxu0 0.0
    %4772 = vmatprep.subr.mxu0 0.0
    %4773 = vmatpush2.msra.mxu0 0.0
    %4774 = vmatprep.mubr.f32.mxu0 0.0
    %4775 = vmatmul.mubr.f32.gmra.mxu0 %v4708
    %v4776 = vpop.f32.mrf.mxu0
    %v4777 = vadd.f32 0.0, %v4776
    %v4778 = vpop.f32.mrf.mxu0
    %4779 = vdwg.mxu0
    %v4781 = vsel %vm1034, %v4340, 0
    %4783 = vmatprep.subr.mxu0 0.0
    %4784 = vmatpush1.msra.mxu0 0.0
    %4785 = vmatprep.subr.mxu0 0.0
    %4786 = vmatpush1.msra.mxu0 0.0
    %4787 = vmatprep.subr.mxu0 0.0
    %4788 = vmatpush1.msra.mxu0 0.0
    %4789 = vmatprep.subr.mxu0 0.0
    %4790 = vmatpush1.msra.mxu0 0.0
    %4791 = vmatprep.subr.mxu0 0.0
    %4792 = vmatpush1.msra.mxu0 0.0
    %4793 = vmatprep.subr.mxu0 0.0
    %4794 = vmatpush1.msra.mxu0 0.0
    %4795 = vmatprep.subr.mxu0 0.0
    %4796 = vmatpush1.msra.mxu0 0.0
    %4797 = vmatprep.subr.mxu0 0.0
    %4798 = vmatpush1.msra.mxu0 0.0
    %4799 = vmatprep.subr.mxu0 0.0
    %4800 = vmatpush1.msra.mxu0 0.0
    %4801 = vmatprep.subr.mxu0 0.0
    %4802 = vmatpush1.msra.mxu0 0.0
    %4803 = vmatprep.subr.mxu0 0.0
    %4804 = vmatpush1.msra.mxu0 0.0
    %4805 = vmatprep.subr.mxu0 0.0
    %4806 = vmatpush1.msra.mxu0 0.0
    %4807 = vmatprep.subr.mxu0 0.0
    %4808 = vmatpush1.msra.mxu0 0.0
    %4809 = vmatprep.subr.mxu0 0.0
    %4810 = vmatpush1.msra.mxu0 0.0
    %4811 = vmatprep.subr.mxu0 0.0
    %4812 = vmatpush1.msra.mxu0 0.0
    %4813 = vmatprep.subr.mxu0 0.0
    %4814 = vmatpush1.msra.mxu0 %v1762
    %4815 = vmatprep.subr.mxu0 0.0
    %4816 = vmatpush2.msra.mxu0 0.0
    %4817 = vmatprep.subr.mxu0 0.0
    %4818 = vmatpush2.msra.mxu0 0.0
    %4819 = vmatprep.subr.mxu0 0.0
    %4820 = vmatpush2.msra.mxu0 0.0
    %4821 = vmatprep.subr.mxu0 0.0
    %4822 = vmatpush2.msra.mxu0 0.0
    %4823 = vmatprep.subr.mxu0 0.0
    %4824 = vmatpush2.msra.mxu0 0.0
    %4825 = vmatprep.subr.mxu0 0.0
    %4826 = vmatpush2.msra.mxu0 0.0
    %4827 = vmatprep.subr.mxu0 0.0
    %4828 = vmatpush2.msra.mxu0 0.0
    %4829 = vmatprep.subr.mxu0 0.0
    %4830 = vmatpush2.msra.mxu0 0.0
    %4831 = vmatprep.subr.mxu0 0.0
    %4832 = vmatpush2.msra.mxu0 0.0
    %4833 = vmatprep.subr.mxu0 0.0
    %4834 = vmatpush2.msra.mxu0 0.0
    %4835 = vmatprep.subr.mxu0 0.0
    %4836 = vmatpush2.msra.mxu0 0.0
    %4837 = vmatprep.subr.mxu0 0.0
    %4838 = vmatpush2.msra.mxu0 0.0
    %4839 = vmatprep.subr.mxu0 0.0
    %4840 = vmatpush2.msra.mxu0 0.0
    %4841 = vmatprep.subr.mxu0 0.0
    %4842 = vmatpush2.msra.mxu0 0.0
    %4843 = vmatprep.subr.mxu0 0.0
    %4844 = vmatpush2.msra.mxu0 0.0
    %4845 = vmatprep.subr.mxu0 0.0
    %4846 = vmatpush2.msra.mxu0 0.0
    %4847 = vmatprep.mubr.f32.mxu0 0.0
    %4848 = vmatmul.mubr.f32.gmra.mxu0 %v4781
    %v4849 = vpop.f32.mrf.mxu0
    %v4850 = vadd.f32 0.0, %v4849
    %v4851 = vpop.f32.mrf.mxu0
    %4852 = vdwg.mxu0
    %v4854 = vsel %vm1034, %v4341, 0
    %4856 = vmatprep.subr.mxu0 0.0
    %4857 = vmatpush1.msra.mxu0 0.0
    %4858 = vmatprep.subr.mxu0 0.0
    %4859 = vmatpush1.msra.mxu0 0.0
    %4860 = vmatprep.subr.mxu0 0.0
    %4861 = vmatpush1.msra.mxu0 0.0
    %4862 = vmatprep.subr.mxu0 0.0
    %4863 = vmatpush1.msra.mxu0 0.0
    %4864 = vmatprep.subr.mxu0 0.0
    %4865 = vmatpush1.msra.mxu0 0.0
    %4866 = vmatprep.subr.mxu0 0.0
    %4867 = vmatpush1.msra.mxu0 0.0
    %4868 = vmatprep.subr.mxu0 0.0
    %4869 = vmatpush1.msra.mxu0 0.0
    %4870 = vmatprep.subr.mxu0 0.0
    %4871 = vmatpush1.msra.mxu0 0.0
    %4872 = vmatprep.subr.mxu0 0.0
    %4873 = vmatpush1.msra.mxu0 0.0
    %4874 = vmatprep.subr.mxu0 0.0
    %4875 = vmatpush1.msra.mxu0 0.0
    %4876 = vmatprep.subr.mxu0 0.0
    %4877 = vmatpush1.msra.mxu0 0.0
    %4878 = vmatprep.subr.mxu0 0.0
    %4879 = vmatpush1.msra.mxu0 0.0
    %4880 = vmatprep.subr.mxu0 0.0
    %4881 = vmatpush1.msra.mxu0 0.0
    %4882 = vmatprep.subr.mxu0 0.0
    %4883 = vmatpush1.msra.mxu0 0.0
    %4884 = vmatprep.subr.mxu0 0.0
    %4885 = vmatpush1.msra.mxu0 0.0
    %4886 = vmatprep.subr.mxu0 0.0
    %4887 = vmatpush1.msra.mxu0 %v1763
    %4888 = vmatprep.subr.mxu0 0.0
    %4889 = vmatpush2.msra.mxu0 0.0
    %4890 = vmatprep.subr.mxu0 0.0
    %4891 = vmatpush2.msra.mxu0 0.0
    %4892 = vmatprep.subr.mxu0 0.0
    %4893 = vmatpush2.msra.mxu0 0.0
    %4894 = vmatprep.subr.mxu0 0.0
    %4895 = vmatpush2.msra.mxu0 0.0
    %4896 = vmatprep.subr.mxu0 0.0
    %4897 = vmatpush2.msra.mxu0 0.0
    %4898 = vmatprep.subr.mxu0 0.0
    %4899 = vmatpush2.msra.mxu0 0.0
    %4900 = vmatprep.subr.mxu0 0.0
    %4901 = vmatpush2.msra.mxu0 0.0
    %4902 = vmatprep.subr.mxu0 0.0
    %4903 = vmatpush2.msra.mxu0 0.0
    %4904 = vmatprep.subr.mxu0 0.0
    %4905 = vmatpush2.msra.mxu0 0.0
    %4906 = vmatprep.subr.mxu0 0.0
    %4907 = vmatpush2.msra.mxu0 0.0
    %4908 = vmatprep.subr.mxu0 0.0
    %4909 = vmatpush2.msra.mxu0 0.0
    %4910 = vmatprep.subr.mxu0 0.0
    %4911 = vmatpush2.msra.mxu0 0.0
    %4912 = vmatprep.subr.mxu0 0.0
    %4913 = vmatpush2.msra.mxu0 0.0
    %4914 = vmatprep.subr.mxu0 0.0
    %4915 = vmatpush2.msra.mxu0 0.0
    %4916 = vmatprep.subr.mxu0 0.0
    %4917 = vmatpush2.msra.mxu0 0.0
    %4918 = vmatprep.subr.mxu0 0.0
    %4919 = vmatpush2.msra.mxu0 0.0
    %4920 = vmatprep.mubr.f32.mxu0 0.0
    %4921 = vmatmul.mubr.f32.gmra.mxu0 %v4854
    %v4922 = vpop.f32.mrf.mxu0
    %v4923 = vadd.f32 0.0, %v4922
    %v4924 = vpop.f32.mrf.mxu0
    %4925 = vdwg.mxu0
    %v4926 = vlaneseq
    %v4927 = vshrl.u32 %v4926, 7
    %v4928 = vsub.s32 0, %v4927
    %v4929 = vrot.slane %v3512, %v4928
    %v4931 = vsel %vm340, %v4412, 0
    %v4934 = vsel %vm340, %v4485, 0
    %v4937 = vsel %vm340, %v4558, 0
    %v4940 = vsel %vm340, %v4631, 0
    %v4943 = vsel %vm340, %v4704, 0
    %v4946 = vsel %vm340, %v4777, 0
    %v4949 = vsel %vm340, %v4850, 0
    %v4952 = vsel %vm340, %v4923, 0
    %4954 = vmatprep.subr.mxu0 0.0
    %4955 = vmatpush1.msra.mxu0 0.0
    %4956 = vmatprep.subr.mxu0 0.0
    %4957 = vmatpush1.msra.mxu0 0.0
    %4958 = vmatprep.subr.mxu0 0.0
    %4959 = vmatpush1.msra.mxu0 0.0
    %4960 = vmatprep.subr.mxu0 0.0
    %4961 = vmatpush1.msra.mxu0 0.0
    %4962 = vmatprep.subr.mxu0 0.0
    %4963 = vmatpush1.msra.mxu0 0.0
    %4964 = vmatprep.subr.mxu0 0.0
    %4965 = vmatpush1.msra.mxu0 0.0
    %4966 = vmatprep.subr.mxu0 0.0
    %4967 = vmatpush1.msra.mxu0 0.0
    %4968 = vmatprep.subr.mxu0 0.0
    %4969 = vmatpush1.msra.mxu0 0.0
    %4970 = vmatprep.subr.mxu0 0.0
    %4971 = vmatpush1.msra.mxu0 0.0
    %4972 = vmatprep.subr.mxu0 0.0
    %4973 = vmatpush1.msra.mxu0 0.0
    %4974 = vmatprep.subr.mxu0 0.0
    %4975 = vmatpush1.msra.mxu0 0.0
    %4976 = vmatprep.subr.mxu0 0.0
    %4977 = vmatpush1.msra.mxu0 0.0
    %4978 = vmatprep.subr.mxu0 0.0
    %4979 = vmatpush1.msra.mxu0 0.0
    %4980 = vmatprep.subr.mxu0 0.0
    %4981 = vmatpush1.msra.mxu0 0.0
    %4982 = vmatprep.subr.mxu0 0.0
    %4983 = vmatpush1.msra.mxu0 %v3511
    %4984 = vmatprep.subr.mxu0 0.0
    %4985 = vmatpush1.msra.mxu0 %v3510
    %4986 = vmatprep.subr.mxu0 0.0
    %4987 = vmatpush2.msra.mxu0 0.0
    %4988 = vmatprep.subr.mxu0 0.0
    %4989 = vmatpush2.msra.mxu0 0.0
    %4990 = vmatprep.subr.mxu0 0.0
    %4991 = vmatpush2.msra.mxu0 0.0
    %4992 = vmatprep.subr.mxu0 0.0
    %4993 = vmatpush2.msra.mxu0 0.0
    %4994 = vmatprep.subr.mxu0 0.0
    %4995 = vmatpush2.msra.mxu0 0.0
    %4996 = vmatprep.subr.mxu0 0.0
    %4997 = vmatpush2.msra.mxu0 0.0
    %4998 = vmatprep.subr.mxu0 0.0
    %4999 = vmatpush2.msra.mxu0 0.0
    %5000 = vmatprep.subr.mxu0 0.0
    %5001 = vmatpush2.msra.mxu0 0.0
    %5002 = vmatprep.subr.mxu0 0.0
    %5003 = vmatpush2.msra.mxu0 0.0
    %5004 = vmatprep.subr.mxu0 0.0
    %5005 = vmatpush2.msra.mxu0 0.0
    %5006 = vmatprep.subr.mxu0 0.0
    %5007 = vmatpush2.msra.mxu0 0.0
    %5008 = vmatprep.subr.mxu0 0.0
    %5009 = vmatpush2.msra.mxu0 0.0
    %5010 = vmatprep.subr.mxu0 0.0
    %5011 = vmatpush2.msra.mxu0 0.0
    %5012 = vmatprep.subr.mxu0 0.0
    %5013 = vmatpush2.msra.mxu0 0.0
    %5014 = vmatprep.subr.mxu0 0.0
    %5015 = vmatpush2.msra.mxu0 0.0
    %5016 = vmatprep.subr.mxu0 0.0
    %5017 = vmatpush2.msra.mxu0 0.0
    %5018 = vmatprep.mubr.f32.mxu0 0.0
    %5019 = vmatmul.mubr.f32.gmra.mxu0 %v4931
    %v5020 = vpop.f32.mrf.mxu0
    %v5021 = vadd.f32 %v4929, %v5020
    %v5022 = vpop.f32.mrf.mxu0
    %5023 = vmatprep.mubr.f32.mxu0 0.0
    %5024 = vmatmul.mubr.f32.gmra.mxu0 %v4934
    %v5025 = vpop.f32.mrf.mxu0
    %v5026 = vadd.f32 %v4929, %v5025
    %v5027 = vpop.f32.mrf.mxu0
    %5028 = vmatprep.mubr.f32.mxu0 0.0
    %5029 = vmatmul.mubr.f32.gmra.mxu0 %v4937
    %v5030 = vpop.f32.mrf.mxu0
    %v5031 = vadd.f32 %v4929, %v5030
    %v5032 = vpop.f32.mrf.mxu0
    %5033 = vmatprep.mubr.f32.mxu0 0.0
    %5034 = vmatmul.mubr.f32.gmra.mxu0 %v4940
    %v5035 = vpop.f32.mrf.mxu0
    %v5036 = vadd.f32 %v4929, %v5035
    %v5037 = vpop.f32.mrf.mxu0
    %5038 = vmatprep.mubr.f32.mxu0 0.0
    %5039 = vmatmul.mubr.f32.gmra.mxu0 %v4943
    %v5040 = vpop.f32.mrf.mxu0
    %v5041 = vadd.f32 %v4929, %v5040
    %v5042 = vpop.f32.mrf.mxu0
    %5043 = vmatprep.mubr.f32.mxu0 0.0
    %5044 = vmatmul.mubr.f32.gmra.mxu0 %v4946
    %v5045 = vpop.f32.mrf.mxu0
    %v5046 = vadd.f32 %v4929, %v5045
    %v5047 = vpop.f32.mrf.mxu0
    %5048 = vmatprep.mubr.f32.mxu0 0.0
    %5049 = vmatmul.mubr.f32.gmra.mxu0 %v4949
    %v5050 = vpop.f32.mrf.mxu0
    %v5051 = vadd.f32 %v4929, %v5050
    %v5052 = vpop.f32.mrf.mxu0
    %5053 = vmatprep.mubr.f32.mxu0 0.0
    %5054 = vmatmul.mubr.f32.gmra.mxu0 %v4952
    %v5055 = vpop.f32.mrf.mxu0
    %v5056 = vadd.f32 %v4929, %v5055
    %v5057 = vpop.f32.mrf.mxu0
    %5058 = vdwg.mxu0
    %v5059 = vmax.f32 %v5021, 0.0
    %v5060 = vmax.f32 %v5026, 0.0
    %v5061 = vmax.f32 %v5031, 0.0
    %v5062 = vmax.f32 %v5036, 0.0
    %v5063 = vmax.f32 %v5041, 0.0
    %v5064 = vmax.f32 %v5046, 0.0
    %v5065 = vmax.f32 %v5051, 0.0
    %v5066 = vmax.f32 %v5056, 0.0
    %v5067 = vld [vmem:[%s2 + $0x68] sm:$0xff]
    %v5068 = vld [vmem:[%s2 + $0x70] sm:$0xff]
    %v5069 = vld [vmem:[%s2 + $0x78] sm:$0x1]
    %v5070 = vlaneseq
    %v5071 = vshrl.u32 %v5070, 7
    %v5072 = vsub.s32 0, %v5071
    %v5073 = vrot.slane %v5069, %v5072
    %v5075 = vsel %vm340, %v5059, 0
    %v5078 = vsel %vm340, %v5060, 0
    %v5081 = vsel %vm340, %v5061, 0
    %v5084 = vsel %vm340, %v5062, 0
    %v5087 = vsel %vm340, %v5063, 0
    %v5090 = vsel %vm340, %v5064, 0
    %v5093 = vsel %vm340, %v5065, 0
    %v5096 = vsel %vm340, %v5066, 0
    %5098 = vmatprep.subr.mxu0 0.0
    %5099 = vmatpush1.msra.mxu0 0.0
    %5100 = vmatprep.subr.mxu0 0.0
    %5101 = vmatpush1.msra.mxu0 0.0
    %5102 = vmatprep.subr.mxu0 0.0
    %5103 = vmatpush1.msra.mxu0 0.0
    %5104 = vmatprep.subr.mxu0 0.0
    %5105 = vmatpush1.msra.mxu0 0.0
    %5106 = vmatprep.subr.mxu0 0.0
    %5107 = vmatpush1.msra.mxu0 0.0
    %5108 = vmatprep.subr.mxu0 0.0
    %5109 = vmatpush1.msra.mxu0 0.0
    %5110 = vmatprep.subr.mxu0 0.0
    %5111 = vmatpush1.msra.mxu0 0.0
    %5112 = vmatprep.subr.mxu0 0.0
    %5113 = vmatpush1.msra.mxu0 0.0
    %5114 = vmatprep.subr.mxu0 0.0
    %5115 = vmatpush1.msra.mxu0 0.0
    %5116 = vmatprep.subr.mxu0 0.0
    %5117 = vmatpush1.msra.mxu0 0.0
    %5118 = vmatprep.subr.mxu0 0.0
    %5119 = vmatpush1.msra.mxu0 0.0
    %5120 = vmatprep.subr.mxu0 0.0
    %5121 = vmatpush1.msra.mxu0 0.0
    %5122 = vmatprep.subr.mxu0 0.0
    %5123 = vmatpush1.msra.mxu0 0.0
    %5124 = vmatprep.subr.mxu0 0.0
    %5125 = vmatpush1.msra.mxu0 0.0
    %5126 = vmatprep.subr.mxu0 0.0
    %5127 = vmatpush1.msra.mxu0 %v5068
    %5128 = vmatprep.subr.mxu0 0.0
    %5129 = vmatpush1.msra.mxu0 %v5067
    %5130 = vmatprep.subr.mxu0 0.0
    %5131 = vmatpush2.msra.mxu0 0.0
    %5132 = vmatprep.subr.mxu0 0.0
    %5133 = vmatpush2.msra.mxu0 0.0
    %5134 = vmatprep.subr.mxu0 0.0
    %5135 = vmatpush2.msra.mxu0 0.0
    %5136 = vmatprep.subr.mxu0 0.0
    %5137 = vmatpush2.msra.mxu0 0.0
    %5138 = vmatprep.subr.mxu0 0.0
    %5139 = vmatpush2.msra.mxu0 0.0
    %5140 = vmatprep.subr.mxu0 0.0
    %5141 = vmatpush2.msra.mxu0 0.0
    %5142 = vmatprep.subr.mxu0 0.0
    %5143 = vmatpush2.msra.mxu0 0.0
    %5144 = vmatprep.subr.mxu0 0.0
    %5145 = vmatpush2.msra.mxu0 0.0
    %5146 = vmatprep.subr.mxu0 0.0
    %5147 = vmatpush2.msra.mxu0 0.0
    %5148 = vmatprep.subr.mxu0 0.0
    %5149 = vmatpush2.msra.mxu0 0.0
    %5150 = vmatprep.subr.mxu0 0.0
    %5151 = vmatpush2.msra.mxu0 0.0
    %5152 = vmatprep.subr.mxu0 0.0
    %5153 = vmatpush2.msra.mxu0 0.0
    %5154 = vmatprep.subr.mxu0 0.0
    %5155 = vmatpush2.msra.mxu0 0.0
    %5156 = vmatprep.subr.mxu0 0.0
    %5157 = vmatpush2.msra.mxu0 0.0
    %5158 = vmatprep.subr.mxu0 0.0
    %5159 = vmatpush2.msra.mxu0 0.0
    %5160 = vmatprep.subr.mxu0 0.0
    %5161 = vmatpush2.msra.mxu0 0.0
    %5162 = vmatprep.mubr.f32.mxu0 0.0
    %5163 = vmatmul.mubr.f32.gmra.mxu0 %v5075
    %v5164 = vpop.f32.mrf.mxu0
    %v5165 = vadd.f32 %v5073, %v5164
    %v5166 = vpop.f32.mrf.mxu0
    %5167 = vmatprep.mubr.f32.mxu0 0.0
    %5168 = vmatmul.mubr.f32.gmra.mxu0 %v5078
    %v5169 = vpop.f32.mrf.mxu0
    %v5170 = vadd.f32 %v5073, %v5169
    %v5171 = vpop.f32.mrf.mxu0
    %5172 = vmatprep.mubr.f32.mxu0 0.0
    %5173 = vmatmul.mubr.f32.gmra.mxu0 %v5081
    %v5174 = vpop.f32.mrf.mxu0
    %v5175 = vadd.f32 %v5073, %v5174
    %v5176 = vpop.f32.mrf.mxu0
    %5177 = vmatprep.mubr.f32.mxu0 0.0
    %5178 = vmatmul.mubr.f32.gmra.mxu0 %v5084
    %v5179 = vpop.f32.mrf.mxu0
    %v5180 = vadd.f32 %v5073, %v5179
    %v5181 = vpop.f32.mrf.mxu0
    %5182 = vmatprep.mubr.f32.mxu0 0.0
    %5183 = vmatmul.mubr.f32.gmra.mxu0 %v5087
    %v5184 = vpop.f32.mrf.mxu0
    %v5185 = vadd.f32 %v5073, %v5184
    %v5186 = vpop.f32.mrf.mxu0
    %5187 = vmatprep.mubr.f32.mxu0 0.0
    %5188 = vmatmul.mubr.f32.gmra.mxu0 %v5090
    %v5189 = vpop.f32.mrf.mxu0
    %v5190 = vadd.f32 %v5073, %v5189
    %v5191 = vpop.f32.mrf.mxu0
    %5192 = vmatprep.mubr.f32.mxu0 0.0
    %5193 = vmatmul.mubr.f32.gmra.mxu0 %v5093
    %v5194 = vpop.f32.mrf.mxu0
    %v5195 = vadd.f32 %v5073, %v5194
    %v5196 = vpop.f32.mrf.mxu0
    %5197 = vmatprep.mubr.f32.mxu0 0.0
    %5198 = vmatmul.mubr.f32.gmra.mxu0 %v5096
    %v5199 = vpop.f32.mrf.mxu0
    %v5200 = vadd.f32 %v5073, %v5199
    %v5201 = vpop.f32.mrf.mxu0
    %5202 = vdwg.mxu0
    %v5203 = vmax.f32 %v5165, 0.0
    %v5204 = vmax.f32 %v5170, 0.0
    %v5205 = vmax.f32 %v5175, 0.0
    %v5206 = vmax.f32 %v5180, 0.0
    %v5207 = vmax.f32 %v5185, 0.0
    %v5208 = vmax.f32 %v5190, 0.0
    %v5209 = vmax.f32 %v5195, 0.0
    %v5210 = vmax.f32 %v5200, 0.0
    %v5211 = vsel %vm340, %v5203, 0.0
    %v5212 = vrot.slane %v5211, 4
    %v5213 = vadd.f32 %v5211, %v5212
    %v5214 = vrot.slane %v5213, 2
    %v5215 = vadd.f32 %v5213, %v5214
    %v5216 = vrot.slane %v5215, 1
    %v5217 = vadd.f32 %v5215, %v5216
    %v5218 = vsel %vm340, %v5204, 0.0
    %v5219 = vrot.slane %v5218, 4
    %v5220 = vadd.f32 %v5218, %v5219
    %v5221 = vrot.slane %v5220, 2
    %v5222 = vadd.f32 %v5220, %v5221
    %v5223 = vrot.slane %v5222, 1
    %v5224 = vadd.f32 %v5222, %v5223
    %v5225 = vsel %vm340, %v5205, 0.0
    %v5226 = vrot.slane %v5225, 4
    %v5227 = vadd.f32 %v5225, %v5226
    %v5228 = vrot.slane %v5227, 2
    %v5229 = vadd.f32 %v5227, %v5228
    %v5230 = vrot.slane %v5229, 1
    %v5231 = vadd.f32 %v5229, %v5230
    %v5232 = vsel %vm340, %v5206, 0.0
    %v5233 = vrot.slane %v5232, 4
    %v5234 = vadd.f32 %v5232, %v5233
    %v5235 = vrot.slane %v5234, 2
    %v5236 = vadd.f32 %v5234, %v5235
    %v5237 = vrot.slane %v5236, 1
    %v5238 = vadd.f32 %v5236, %v5237
    %v5239 = vsel %vm340, %v5207, 0.0
    %v5240 = vrot.slane %v5239, 4
    %v5241 = vadd.f32 %v5239, %v5240
    %v5242 = vrot.slane %v5241, 2
    %v5243 = vadd.f32 %v5241, %v5242
    %v5244 = vrot.slane %v5243, 1
    %v5245 = vadd.f32 %v5243, %v5244
    %v5246 = vsel %vm340, %v5208, 0.0
    %v5247 = vrot.slane %v5246, 4
    %v5248 = vadd.f32 %v5246, %v5247
    %v5249 = vrot.slane %v5248, 2
    %v5250 = vadd.f32 %v5248, %v5249
    %v5251 = vrot.slane %v5250, 1
    %v5252 = vadd.f32 %v5250, %v5251
    %v5253 = vsel %vm340, %v5209, 0.0
    %v5254 = vrot.slane %v5253, 4
    %v5255 = vadd.f32 %v5253, %v5254
    %v5256 = vrot.slane %v5255, 2
    %v5257 = vadd.f32 %v5255, %v5256
    %v5258 = vrot.slane %v5257, 1
    %v5259 = vadd.f32 %v5257, %v5258
    %v5260 = vsel %vm340, %v5210, 0.0
    %v5261 = vrot.slane %v5260, 4
    %v5262 = vadd.f32 %v5260, %v5261
    %v5263 = vrot.slane %v5262, 2
    %v5264 = vadd.f32 %v5262, %v5263
    %v5265 = vrot.slane %v5264, 1
    %v5266 = vadd.f32 %v5264, %v5265
    %v5267 = vrcp.pop 8.0
    %v5268 = vmul.f32 %v5217, %v5267
    %v5269 = vmul.f32 %v5224, %v5267
    %v5270 = vmul.f32 %v5231, %v5267
    %v5271 = vmul.f32 %v5238, %v5267
    %v5272 = vmul.f32 %v5245, %v5267
    %v5273 = vmul.f32 %v5252, %v5267
    %v5274 = vmul.f32 %v5259, %v5267
    %v5275 = vmul.f32 %v5266, %v5267
    %v5276 = vld [vmem:[%s2 + $0x80] sm:$0x1]
    %v5277 = vlaneseq
    %v5278 = vshrl.u32 %v5277, 7
    %v5279 = vsub.s32 0, %v5278
    %v5280 = vrot.slane %v5276, %v5279
    %v5281 = vmul.f32 %v5268, %v5280
    %v5282 = vmul.f32 %v5269, %v5280
    %v5283 = vmul.f32 %v5270, %v5280
    %v5284 = vmul.f32 %v5271, %v5280
    %v5285 = vmul.f32 %v5272, %v5280
    %v5286 = vmul.f32 %v5273, %v5280
    %v5287 = vmul.f32 %v5274, %v5280
    %v5288 = vmul.f32 %v5275, %v5280
    %v5297 = vrot.slane %v5282, 7
    %v5298 = vsel %vm258, %v5297, %v5281
    %v5299 = vrot.slane %v5283, 6
    %v5300 = vsel %vm259, %v5299, %v5298
    %v5301 = vrot.slane %v5284, 5
    %v5302 = vsel %vm261, %v5301, %v5300
    %v5303 = vrot.slane %v5285, 4
    %v5304 = vsel %vm263, %v5303, %v5302
    %v5305 = vrot.slane %v5286, 3
    %v5306 = vsel %vm265, %v5305, %v5304
    %v5307 = vrot.slane %v5287, 2
    %v5308 = vsel %vm267, %v5307, %v5306
    %v5309 = vrot.slane %v5288, 1
    %v5310 = vsel %vm269, %v5309, %v5308
    %v5312 = vsel %vm340, %v5310, 0.0
    %5313 = vadd.xlane.f32.xlu0 %v5312
    %v5314 = vpop.xlane.xlu0 %5313
    %v5315 = vld [vmem:[%s2 + $0x88] sm:$0x1]
    %5317 = vset.pattern.permute.xlu0 0
    %5318 = vperm.xlu0 %5317, %v5315
    %v5319 = vpop.permute.xlu0 %5318
    %v5320 = vlaneseq
    %v5321 = vshrl.u32 %v5320, 7
    %v5322 = vsub.s32 0, %v5321
    %v5323 = vrot.slane %v5319, %v5322
    %v5325 = vadd.f32 %v5314, %v5323
    %5327 = vset.pattern.permute.xlu0 0
    %5328 = vperm.xlu0 %5327, %v5325
    %v5329 = vpop.permute.xlu0 %5328
    %v5330 = vlaneseq
    %v5331 = vshrl.u32 %v5330, 7
    %v5332 = vsub.s32 %v182, %v5331
    %v5333 = vrot.slane %v5329, %v5332
    %vm5335 = vcmask 57344
    %5336 = vst.msk [vmem:[#allocation5] sm:$0x1] %vm5335, %v5333
    // Predicated region
    $region18: #{tpu_custom_call.1} parent=1 // pred_check
      _
    $region19: #{tpu_custom_call.1} parent=1 // pred_check_branch
      %5338 = sbr.rel (0) target = $region21
    $region20: #{tpu_custom_call.1} parent=1 // pred_region
      %s5340 = ssub.s32 16, 16
      %5341 = vsyncadd [#allocation4], %s5340
      %s5343 = sshll.u32 [#allocation5], 4
      %s5344 = int_to_ptr.vmem [resolvable:$true] %s5343
      %5346 = dma.vmem_to_hbm [thread:$0]  %s5344, 16, %s3, [#allocation4]
    $region21: #{tpu_custom_call.1} parent=1 // pred_fallthru
      _
    // Predicated region
    $region22: #{tpu_custom_call.1} parent=1 // pred_check
      _
    $region23: #{tpu_custom_call.1} parent=1 // pred_check_branch
      %5348 = sbr.rel (0) target = $region25
    $region24: #{tpu_custom_call.1} parent=1 // pred_region
      %5349 = dma.done [#allocation4], 16
    $region25: #{tpu_custom_call.1} parent=1 // pred_fallthru
      _
    %5350 = vsyncpa [#allocation3], 1
    %5351 = vsyncpa [#allocation4], 1

</llo_original>
